<compile_context>
chip_gen: v5e
topology: v5e:2x2
jax: 0.10.0
libtpu: 0.0.40
codegen_flags: <defaults>
</compile_context>

<pallas_src>
import math
import functools

import jax
import jax.numpy as jnp
import numpy as np
from jax.experimental import pallas as pl
from jax.experimental.pallas import tpu as pltpu


def _layernorm(y, gamma, beta, eps=1e-5):
    mu = jnp.mean(y, axis=-1, keepdims=True)
    var = jnp.mean((y - mu) ** 2, axis=-1, keepdims=True)   # biased var, like torch LayerNorm
    return (y - mu) * jax.lax.rsqrt(var + eps) * gamma + beta


def mha_context_kernel(n_head, hd,
                       x_ref, c_ref,
                       wq_ref, biq_ref,
                       wkv_ref, bkv_ref,
                       wo_ref, bo_ref,
                       wfc_ref, bfc_ref,
                       g1_ref, b1_ref, g2_ref, b2_ref,
                       out_ref,
                       heads_ref):
    f32 = jnp.float32
    Bblk, Lq, D = x_ref.shape
    _, Lk, _ = c_ref.shape
    mm = wq_ref.dtype                                      # matmul operand dtype (f32 / bf16)

    # Fold this grid step's batch rows into the GEMM M dimension (layout-preserving).
    x = x_ref[...].astype(f32).reshape(Bblk * Lq, D)
    c = c_ref[...].astype(f32).reshape(Bblk * Lk, D)

    # Fused projections (outer w_q/w_k/w_v and MHA in_proj folded host-side; the
    # 1/sqrt(hd) scale is pre-folded into Wq/biq).  K and V share one (D, 2D) GEMM.
    qq = jnp.dot(x.astype(mm), wq_ref[...], preferred_element_type=f32) + biq_ref[...]   # (T, D)
    kv = jnp.dot(c.astype(mm), wkv_ref[...], preferred_element_type=f32) + bkv_ref[...]  # (Tk, 2D)

    qq3 = qq.reshape(Bblk, Lq, D)
    kv3 = kv.reshape(Bblk, Lk, 2 * D)

    # Per-head attention (static loop, H small).  Each head's output is written into
    # the VMEM slab at its lane offset so the head-concat + out_proj is ONE K=D GEMM.
    for h in range(n_head):                                # static
        lo = h * hd
        qh = qq3[:, :, lo:lo + hd]                         # (Bblk, Lq, hd), already scaled
        kh = kv3[:, :, lo:lo + hd]                         # (Bblk, Lk, hd)
        vh = kv3[:, :, D + lo:D + lo + hd]                 # (Bblk, Lk, hd)

        s = jnp.einsum('bqd,bkd->bqk', qh.astype(mm), kh.astype(mm),
                       preferred_element_type=f32)
        s = s - jnp.max(s, axis=-1, keepdims=True)
        p = jnp.exp(s)
        # Exact row reciprocal keeps the 1e-4 check; approx=True (EUP vrcp) is the
        # drop-in once ~1e-3 tolerance is acceptable.
        p = p * pl.reciprocal(jnp.sum(p, axis=-1, keepdims=True), approx=False)

        o = jnp.einsum('bqk,bkd->bqd', p.astype(mm), vh.astype(mm),
                       preferred_element_type=f32)
        heads_ref[:, lo:lo + hd] = o.reshape(Bblk * Lq, hd).astype(heads_ref.dtype)

    # Single full-width out_proj (K = D) from the head slab.
    attn = jnp.dot(heads_ref[...], wo_ref[...], preferred_element_type=f32) + bo_ref[...]

    # residual + LayerNorm1  (fc_drop identity in eval)
    att = _layernorm(attn + x, g1_ref[...], b1_ref[...])
    # fc + residual + LayerNorm2
    att1 = jnp.dot(att.astype(mm), wfc_ref[...], preferred_element_type=f32) + bfc_ref[...]
    out = _layernorm(att1 + att, g2_ref[...], b2_ref[...])

    out_ref[...] = out.reshape(Bblk, Lq, D).astype(out_ref.dtype)


def prepare_kernel_params(params, n_head, matmul_dtype=jnp.float32):
    """Host-side weight fusion / transposition / scale folding (done once).

    matmul_dtype=jnp.bfloat16 halves weight DMA/VMEM and uses the bf16-native MXU
    (f32 accumulation kept in-kernel); relax the tolerance to ~1e-3 when enabling.
    The algebraic fusion itself is always done in f32.
    """
    (wq, wk, wv, wiq, wik, wiv, biq, bik, biv,
     wo, bo, wfc, bfc, g1, b1, g2, b2) = params
    D = wq.shape[0]
    hd = D // n_head
    scale = 1.0 / math.sqrt(hd)

    # (x @ Wq^T) @ Wiq^T == x @ (Wiq @ Wq)^T  -> fuse (f32) and pre-transpose.
    # The 1/sqrt(hd) attention scale is folded into the fused Wq and its bias.
    wq_eff_t = ((wiq @ wq) * scale).T.astype(matmul_dtype)                  # (D, D)
    biq_s = (biq * scale).reshape(1, D)                                     # f32
    wk_eff_t = (wik @ wk).T
    wv_eff_t = (wiv @ wv).T
    wkv_t = jnp.concatenate([wk_eff_t, wv_eff_t], axis=1).astype(matmul_dtype)   # (D, 2D)
    bkv = jnp.concatenate([bik.reshape(1, D), biv.reshape(1, D)], axis=1)        # (1, 2D)

    wo_t = wo.T.astype(matmul_dtype)                                        # full out_proj
    wfc_t = wfc.T.astype(matmul_dtype)

    r = lambda v: v.reshape(1, D)
    return (wq_eff_t, biq_s, wkv_t, bkv,
            wo_t, r(bo), wfc_t, r(bfc),
            r(g1), r(b1), r(g2), r(b2))


def _vmem_bytes_estimate(block_b, Lq, Lk, D, n_head, w_itemsize, single_buffer_weights=True):
    """Rough per-grid-step VMEM working set, accounting for (8,128) tile padding."""
    f32b = 4
    pad = lambda r, c: ((r + 7) // 8 * 8) * ((c + 127) // 128 * 128)
    T, Tk, hd = block_b * Lq, block_b * Lk, D // n_head
    # double-buffered pipelined I/O blocks (x, out, c)
    io = 2 * f32b * (2 * block_b * pad(Lq, D) + block_b * pad(Lk, D))
    # weights / biases / LN params
    wbufs = 1 if single_buffer_weights else 2
    w = (wbufs * w_itemsize * (3 * pad(D, D) + pad(D, 2 * D))
         + wbufs * f32b * (7 * pad(1, D) + pad(1, 2 * D)))
    # main in-kernel temporaries: qq, kv, head slab, per-head s/p/o, att/att1/out
    act = f32b * (2 * pad(T, D) + pad(Tk, 2 * D) + pad(T, D)
                  + block_b * (2 * pad(Lq, Lk) + pad(Lq, hd))
                  + 3 * pad(T, D))
    return io + w + act


def _choose_block_b(B, Lq, Lk, D, n_head, w_itemsize,
                    target_m=256, vmem_budget_bytes=40 * 2**20, min_grid_steps=1):
    """Pick block_b = a divisor of B: the smallest one whose folded GEMM M
    (block_b*Lq) reaches `target_m`, else the largest one that fits the VMEM budget.
    No silent degradation; the grid always divides B exactly."""
    divisors = [d for d in range(1, B + 1) if B % d == 0]
    feasible = [d for d in divisors
                if _vmem_bytes_estimate(d, Lq, Lk, D, n_head, w_itemsize) <= vmem_budget_bytes
                and (B // d) >= max(1, min_grid_steps)]
    if not feasible:
        return 1
    big_enough = [d for d in feasible if d * Lq >= target_m]
    return min(big_enough) if big_enough else max(feasible)


def multihead_with_context(x, c, kparams, n_head, *, block_b=None,
                           min_grid_steps=1, single_buffer_weights=True):
    """min_grid_steps: pass 2 on v7x (2 TensorCores/chip) so the 'parallel' grid
    shards across both cores; keep 1 on v5e/v6e where the grid is a serial loop."""
    B, Lq, D = x.shape
    _, Lk, _ = c.shape
    hd = D // n_head
    w_itemsize = jnp.dtype(kparams[0].dtype).itemsize

    if block_b is None:
        block_b = _choose_block_b(B, Lq, Lk, D, n_head, w_itemsize,
                                  min_grid_steps=min_grid_steps)
    elif B % block_b != 0:
        raise ValueError(f"block_b={block_b} must divide batch size B={B} "
                         "(no silent fallback).")

    grid = (B // block_b,)
    vmem_limit = int(min(64 * 2**20,
                         max(16 * 2**20,
                             2 * _vmem_bytes_estimate(block_b, Lq, Lk, D, n_head,
                                                      w_itemsize, single_buffer_weights))))

    kernel = functools.partial(mha_context_kernel, n_head, hd)
    out_shape = jax.ShapeDtypeStruct((B, Lq, D), x.dtype)
    heads_scratch = pltpu.VMEM((block_b * Lq, D), kparams[0].dtype)

    def build(single_buffer):
        # Grid-invariant weights/biases return the same block every step ->
        # single-buffer them (double buffering them is pure VMEM waste).
        const_kw = {"pipeline_mode": pl.Buffered(1)} if single_buffer else {}

        def const(shape):
            nd = len(shape)
            return pl.BlockSpec(shape, lambda b, _nd=nd: (0,) * _nd, **const_kw)

        in_specs = [
            pl.BlockSpec((block_b, Lq, D), lambda b: (b, 0, 0)),   # x
            pl.BlockSpec((block_b, Lk, D), lambda b: (b, 0, 0)),   # c
            const((D, D)), const((1, D)),                          # fused+scaled Wq^T, biq
            const((D, 2 * D)), const((1, 2 * D)),                  # fused [Wk|Wv]^T, [bik|biv]
            const((D, D)), const((1, D)),                          # Wo^T, bo
            const((D, D)), const((1, D)),                          # Wfc^T, bfc
            const((1, D)), const((1, D)), const((1, D)), const((1, D)),  # ln1/ln2 gamma, beta
        ]
        out_spec = pl.BlockSpec((block_b, Lq, D), lambda b: (b, 0, 0))

        return pl.pallas_call(
            kernel,
            out_shape=out_shape,
            grid=grid,
            in_specs=in_specs,
            out_specs=out_spec,
            scratch_shapes=[heads_scratch],
            compiler_params=pltpu.CompilerParams(
                dimension_semantics=("parallel",),     # batch steps are independent
                vmem_limit_bytes=vmem_limit),
        )

    if single_buffer_weights:
        try:
            return jax.block_until_ready(build(True)(x, c, *kparams))
        except Exception:
            # This jax build rejected pl.Buffered(1) single-buffering; fall back to
            # the default (double-buffered) pipeline — numerically identical.
            pass
    return build(False)(x, c, *kparams)


def init_params(key, D):
    ks = jax.random.split(key, 13)
    def w(k):
        return jax.random.normal(k, (D, D), jnp.float32) * 0.1
    def bv(k):
        return jax.random.normal(k, (D,), jnp.float32) * 0.05
    wq, wk, wv = w(ks[0]), w(ks[1]), w(ks[2])
    wiq, wik, wiv = w(ks[3]), w(ks[4]), w(ks[5])
    biq, bik, biv = bv(ks[6]), bv(ks[7]), bv(ks[8])
    wo, bo = w(ks[9]), bv(ks[10])
    wfc, bfc = w(ks[11]), bv(ks[12])
    g1 = jnp.ones((D,), jnp.float32)
    b1 = jnp.zeros((D,), jnp.float32)
    g2 = jnp.ones((D,), jnp.float32)
    b2 = jnp.zeros((D,), jnp.float32)
    return (wq, wk, wv, wiq, wik, wiv, biq, bik, biv,
            wo, bo, wfc, bfc, g1, b1, g2, b2)


def reference(x, c, params, n_head):
    """Pure-JAX reference mirroring the un-fused PyTorch forward (eval mode)."""
    (wq, wk, wv, wiq, wik, wiv, biq, bik, biv,
     wo, bo, wfc, bfc, g1, b1, g2, b2) = params
    B, Lq, D = x.shape
    hd = D // n_head
    scale = 1.0 / math.sqrt(hd)

    q = x @ wq.T
    k = c @ wk.T
    v = c @ wv.T
    qq = q @ wiq.T + biq
    kk = k @ wik.T + bik
    vv = v @ wiv.T + biv

    def split(t):
        return t.reshape(B, -1, n_head, hd).transpose(0, 2, 1, 3)  # (B, H, L, hd)
    qh, kh, vh = split(qq), split(kk), split(vv)
    s = jnp.einsum('bhqd,bhkd->bhqk', qh, kh) * scale
    p = jax.nn.softmax(s, axis=-1)
    o = jnp.einsum('bhqk,bhkd->bhqd', p, vh)
    attn = o.transpose(0, 2, 1, 3).reshape(B, Lq, D)
    attn = attn @ wo.T + bo

    att = _layernorm(attn + x, g1, b1)
    att1 = att @ wfc.T + bfc
    return _layernorm(att1 + att, g2, b2)


if __name__ == "__main__":
    B, Lq, Lk, D, H = 4, 8, 8, 32, 4   # f_dim = d_q = d_v = 32, head_size = 4
    key = jax.random.PRNGKey(0)
    kx, kc, kp = jax.random.split(key, 3)
    x = jax.random.normal(kx, (B, Lq, D), jnp.float32)
    c = jax.random.normal(kc, (B, Lk, D), jnp.float32)
    params = init_params(kp, D)
    kparams = prepare_kernel_params(params, H)   # f32 matmuls -> the 1e-4 check holds

    out = multihead_with_context(x, c, kparams, H)
    out = jax.block_until_ready(out)

    ref = reference(x, c, params, H)
    np.testing.assert_allclose(np.asarray(out), np.asarray(ref), rtol=1e-4, atol=1e-4)
    print("KERNEL_OK")
</pallas_src>

<mosaic_0001>
module attributes {stable_mosaic.version = 11 : i64} {
  func.func @mha_context_kernel(%arg0: i32, %arg1: memref<4x8x32xf32, #tpu.memory_space<vmem>>, %arg2: memref<4x8x32xf32, #tpu.memory_space<vmem>>, %arg3: memref<32x32xf32, #tpu.memory_space<vmem>>, %arg4: memref<1x32xf32, #tpu.memory_space<vmem>>, %arg5: memref<32x64xf32, #tpu.memory_space<vmem>>, %arg6: memref<1x64xf32, #tpu.memory_space<vmem>>, %arg7: memref<32x32xf32, #tpu.memory_space<vmem>>, %arg8: memref<1x32xf32, #tpu.memory_space<vmem>>, %arg9: memref<32x32xf32, #tpu.memory_space<vmem>>, %arg10: memref<1x32xf32, #tpu.memory_space<vmem>>, %arg11: memref<1x32xf32, #tpu.memory_space<vmem>>, %arg12: memref<1x32xf32, #tpu.memory_space<vmem>>, %arg13: memref<1x32xf32, #tpu.memory_space<vmem>>, %arg14: memref<1x32xf32, #tpu.memory_space<vmem>>, %arg15: memref<4x8x32xf32, #tpu.memory_space<vmem>>, %arg16: memref<32x32xf32, #tpu.memory_space<vmem>>) attributes {dimension_semantics = [#tpu.dimension_semantics<parallel>], iteration_bounds = array<i64: 1>, scalar_prefetch = 0 : i64, scratch_operands = 1 : i64, tpu.core_type = #tpu.core_type<tc>, window_params = [{transform_indices = @transform_0, window_bounds = array<i64: 4, 8, 32>}, {transform_indices = @transform_1, window_bounds = array<i64: 4, 8, 32>}, {pipeline_mode = #tpu.pipeline_mode<synchronous>, transform_indices = @transform_2, window_bounds = array<i64: 32, 32>}, {pipeline_mode = #tpu.pipeline_mode<synchronous>, transform_indices = @transform_3, window_bounds = array<i64: 1, 32>}, {pipeline_mode = #tpu.pipeline_mode<synchronous>, transform_indices = @transform_4, window_bounds = array<i64: 32, 64>}, {pipeline_mode = #tpu.pipeline_mode<synchronous>, transform_indices = @transform_5, window_bounds = array<i64: 1, 64>}, {pipeline_mode = #tpu.pipeline_mode<synchronous>, transform_indices = @transform_6, window_bounds = array<i64: 32, 32>}, {pipeline_mode = #tpu.pipeline_mode<synchronous>, transform_indices = @transform_7, window_bounds = array<i64: 1, 32>}, {pipeline_mode = #tpu.pipeline_mode<synchronous>, transform_indices = @transform_8, window_bounds = array<i64: 32, 32>}, {pipeline_mode = #tpu.pipeline_mode<synchronous>, transform_indices = @transform_9, window_bounds = array<i64: 1, 32>}, {pipeline_mode = #tpu.pipeline_mode<synchronous>, transform_indices = @transform_10, window_bounds = array<i64: 1, 32>}, {pipeline_mode = #tpu.pipeline_mode<synchronous>, transform_indices = @transform_11, window_bounds = array<i64: 1, 32>}, {pipeline_mode = #tpu.pipeline_mode<synchronous>, transform_indices = @transform_12, window_bounds = array<i64: 1, 32>}, {pipeline_mode = #tpu.pipeline_mode<synchronous>, transform_indices = @transform_13, window_bounds = array<i64: 1, 32>}, {transform_indices = @transform_14, window_bounds = array<i64: 4, 8, 32>}]} {
    %c0 = arith.constant 0 : index
    %c0_0 = arith.constant 0 : index
    %c0_1 = arith.constant 0 : index
    %0 = vector.load %arg1[%c0, %c0_0, %c0_1] : memref<4x8x32xf32, #tpu.memory_space<vmem>>, vector<4x8x32xf32>
    %1 = vector.shape_cast %0 : vector<4x8x32xf32> to vector<32x32xf32>
    %c0_2 = arith.constant 0 : index
    %c0_3 = arith.constant 0 : index
    %c0_4 = arith.constant 0 : index
    %2 = vector.load %arg2[%c0_2, %c0_3, %c0_4] : memref<4x8x32xf32, #tpu.memory_space<vmem>>, vector<4x8x32xf32>
    %3 = vector.shape_cast %2 : vector<4x8x32xf32> to vector<32x32xf32>
    %c0_5 = arith.constant 0 : index
    %c0_6 = arith.constant 0 : index
    %4 = vector.load %arg3[%c0_5, %c0_6] : memref<32x32xf32, #tpu.memory_space<vmem>>, vector<32x32xf32>
    %cst = arith.constant dense<0.000000e+00> : vector<32x32xf32>
    %5 = tpu.matmul %1, %4, %cst {dimension_numbers = #tpu.dot_dimension_numbers<[1], [0], [0], [1], [0, 0, 1, 1], [], []>} : vector<32x32xf32>, vector<32x32xf32>, vector<32x32xf32> -> vector<32x32xf32>
    %c0_7 = arith.constant 0 : index
    %c0_8 = arith.constant 0 : index
    %6 = vector.load %arg4[%c0_7, %c0_8] : memref<1x32xf32, #tpu.memory_space<vmem>>, vector<1x32xf32>
    %7 = vector.broadcast %6 : vector<1x32xf32> to vector<32x32xf32>
    %8 = arith.addf %5, %7 : vector<32x32xf32>
    %c0_9 = arith.constant 0 : index
    %c0_10 = arith.constant 0 : index
    %9 = vector.load %arg5[%c0_9, %c0_10] : memref<32x64xf32, #tpu.memory_space<vmem>>, vector<32x64xf32>
    %cst_11 = arith.constant dense<0.000000e+00> : vector<32x64xf32>
    %10 = tpu.matmul %3, %9, %cst_11 {dimension_numbers = #tpu.dot_dimension_numbers<[1], [0], [0], [1], [0, 0, 1, 1], [], []>} : vector<32x32xf32>, vector<32x64xf32>, vector<32x64xf32> -> vector<32x64xf32>
    %c0_12 = arith.constant 0 : index
    %c0_13 = arith.constant 0 : index
    %11 = vector.load %arg6[%c0_12, %c0_13] : memref<1x64xf32, #tpu.memory_space<vmem>>, vector<1x64xf32>
    %12 = vector.broadcast %11 : vector<1x64xf32> to vector<32x64xf32>
    %13 = arith.addf %10, %12 : vector<32x64xf32>
    %14 = vector.shape_cast %8 : vector<32x32xf32> to vector<4x8x32xf32>
    %15 = vector.shape_cast %13 : vector<32x64xf32> to vector<4x8x64xf32>
    %16 = vector.extract_strided_slice %14 {offsets = [0, 0, 0], sizes = [4, 8, 8], strides = [1, 1, 1]} : vector<4x8x32xf32> to vector<4x8x8xf32>
    %17 = vector.extract_strided_slice %15 {offsets = [0, 0, 0], sizes = [4, 8, 8], strides = [1, 1, 1]} : vector<4x8x64xf32> to vector<4x8x8xf32>
    %18 = vector.extract_strided_slice %15 {offsets = [0, 0, 32], sizes = [4, 8, 8], strides = [1, 1, 1]} : vector<4x8x64xf32> to vector<4x8x8xf32>
    "tpu.trace_start"() <{level = 10 : i32, message = "bqd,bkd->bqk"}> : () -> ()
    %cst_14 = arith.constant dense<0.000000e+00> : vector<4x8x8xf32>
    %19 = tpu.matmul %16, %17, %cst_14 {dimension_numbers = #tpu.dot_dimension_numbers<[2], [2], [1], [1], [0, 0, 0, 1, 1, 1], [0], [0]>} : vector<4x8x8xf32>, vector<4x8x8xf32>, vector<4x8x8xf32> -> vector<4x8x8xf32>
    "tpu.trace_stop"() : () -> ()
    %cst_15 = arith.constant dense<0xFF800000> : vector<4x8xf32>
    %20 = vector.multi_reduction <maximumf>, %19, %cst_15 [2] : vector<4x8x8xf32> to vector<4x8xf32>
    %21 = vector.shape_cast %20 : vector<4x8xf32> to vector<4x8x1xf32>
    %22 = vector.broadcast %21 : vector<4x8x1xf32> to vector<4x8x8xf32>
    %23 = arith.subf %19, %22 : vector<4x8x8xf32>
    %24 = math.exp %23 : vector<4x8x8xf32>
    %cst_16 = arith.constant dense<0.000000e+00> : vector<4x8xf32>
    %25 = vector.multi_reduction <add>, %24, %cst_16 [2] : vector<4x8x8xf32> to vector<4x8xf32>
    %26 = vector.shape_cast %25 : vector<4x8xf32> to vector<4x8x1xf32>
    %27 = tpu.reciprocal %26 : vector<4x8x1xf32> -> vector<4x8x1xf32>
    %28 = vector.broadcast %27 : vector<4x8x1xf32> to vector<4x8x8xf32>
    %29 = arith.mulf %24, %28 : vector<4x8x8xf32>
    "tpu.trace_start"() <{level = 10 : i32, message = "bqk,bkd->bqd"}> : () -> ()
    %cst_17 = arith.constant dense<0.000000e+00> : vector<4x8x8xf32>
    %30 = tpu.matmul %29, %18, %cst_17 {dimension_numbers = #tpu.dot_dimension_numbers<[2], [1], [1], [2], [0, 0, 0, 1, 1, 2], [0], [0]>} : vector<4x8x8xf32>, vector<4x8x8xf32>, vector<4x8x8xf32> -> vector<4x8x8xf32>
    "tpu.trace_stop"() : () -> ()
    %31 = vector.shape_cast %30 : vector<4x8x8xf32> to vector<32x8xf32>
    %c0_18 = arith.constant 0 : index
    %c0_19 = arith.constant 0 : index
    %32 = vector.load %arg16[%c0_18, %c0_19] : memref<32x32xf32, #tpu.memory_space<vmem>>, vector<32x8xf32>
    tpu.vector_store %arg16[%c0_18, %c0_19], %31 {strides = array<i32>} : memref<32x32xf32, #tpu.memory_space<vmem>>, vector<32x8xf32>,
    %33 = vector.extract_strided_slice %14 {offsets = [0, 0, 8], sizes = [4, 8, 8], strides = [1, 1, 1]} : vector<4x8x32xf32> to vector<4x8x8xf32>
    %34 = vector.extract_strided_slice %15 {offsets = [0, 0, 8], sizes = [4, 8, 8], strides = [1, 1, 1]} : vector<4x8x64xf32> to vector<4x8x8xf32>
    %35 = vector.extract_strided_slice %15 {offsets = [0, 0, 40], sizes = [4, 8, 8], strides = [1, 1, 1]} : vector<4x8x64xf32> to vector<4x8x8xf32>
    "tpu.trace_start"() <{level = 10 : i32, message = "bqd,bkd->bqk"}> : () -> ()
    %cst_20 = arith.constant dense<0.000000e+00> : vector<4x8x8xf32>
    %36 = tpu.matmul %33, %34, %cst_20 {dimension_numbers = #tpu.dot_dimension_numbers<[2], [2], [1], [1], [0, 0, 0, 1, 1, 1], [0], [0]>} : vector<4x8x8xf32>, vector<4x8x8xf32>, vector<4x8x8xf32> -> vector<4x8x8xf32>
    "tpu.trace_stop"() : () -> ()
    %cst_21 = arith.constant dense<0xFF800000> : vector<4x8xf32>
    %37 = vector.multi_reduction <maximumf>, %36, %cst_21 [2] : vector<4x8x8xf32> to vector<4x8xf32>
    %38 = vector.shape_cast %37 : vector<4x8xf32> to vector<4x8x1xf32>
    %39 = vector.broadcast %38 : vector<4x8x1xf32> to vector<4x8x8xf32>
    %40 = arith.subf %36, %39 : vector<4x8x8xf32>
    %41 = math.exp %40 : vector<4x8x8xf32>
    %cst_22 = arith.constant dense<0.000000e+00> : vector<4x8xf32>
    %42 = vector.multi_reduction <add>, %41, %cst_22 [2] : vector<4x8x8xf32> to vector<4x8xf32>
    %43 = vector.shape_cast %42 : vector<4x8xf32> to vector<4x8x1xf32>
    %44 = tpu.reciprocal %43 : vector<4x8x1xf32> -> vector<4x8x1xf32>
    %45 = vector.broadcast %44 : vector<4x8x1xf32> to vector<4x8x8xf32>
    %46 = arith.mulf %41, %45 : vector<4x8x8xf32>
    "tpu.trace_start"() <{level = 10 : i32, message = "bqk,bkd->bqd"}> : () -> ()
    %cst_23 = arith.constant dense<0.000000e+00> : vector<4x8x8xf32>
    %47 = tpu.matmul %46, %35, %cst_23 {dimension_numbers = #tpu.dot_dimension_numbers<[2], [1], [1], [2], [0, 0, 0, 1, 1, 2], [0], [0]>} : vector<4x8x8xf32>, vector<4x8x8xf32>, vector<4x8x8xf32> -> vector<4x8x8xf32>
    "tpu.trace_stop"() : () -> ()
    %48 = vector.shape_cast %47 : vector<4x8x8xf32> to vector<32x8xf32>
    %c0_24 = arith.constant 0 : index
    %c8 = arith.constant 8 : index
    %49 = vector.load %arg16[%c0_24, %c8] : memref<32x32xf32, #tpu.memory_space<vmem>>, vector<32x8xf32>
    tpu.vector_store %arg16[%c0_24, %c8], %48 {strides = array<i32>} : memref<32x32xf32, #tpu.memory_space<vmem>>, vector<32x8xf32>,
    %50 = vector.extract_strided_slice %14 {offsets = [0, 0, 16], sizes = [4, 8, 8], strides = [1, 1, 1]} : vector<4x8x32xf32> to vector<4x8x8xf32>
    %51 = vector.extract_strided_slice %15 {offsets = [0, 0, 16], sizes = [4, 8, 8], strides = [1, 1, 1]} : vector<4x8x64xf32> to vector<4x8x8xf32>
    %52 = vector.extract_strided_slice %15 {offsets = [0, 0, 48], sizes = [4, 8, 8], strides = [1, 1, 1]} : vector<4x8x64xf32> to vector<4x8x8xf32>
    "tpu.trace_start"() <{level = 10 : i32, message = "bqd,bkd->bqk"}> : () -> ()
    %cst_25 = arith.constant dense<0.000000e+00> : vector<4x8x8xf32>
    %53 = tpu.matmul %50, %51, %cst_25 {dimension_numbers = #tpu.dot_dimension_numbers<[2], [2], [1], [1], [0, 0, 0, 1, 1, 1], [0], [0]>} : vector<4x8x8xf32>, vector<4x8x8xf32>, vector<4x8x8xf32> -> vector<4x8x8xf32>
    "tpu.trace_stop"() : () -> ()
    %cst_26 = arith.constant dense<0xFF800000> : vector<4x8xf32>
    %54 = vector.multi_reduction <maximumf>, %53, %cst_26 [2] : vector<4x8x8xf32> to vector<4x8xf32>
    %55 = vector.shape_cast %54 : vector<4x8xf32> to vector<4x8x1xf32>
    %56 = vector.broadcast %55 : vector<4x8x1xf32> to vector<4x8x8xf32>
    %57 = arith.subf %53, %56 : vector<4x8x8xf32>
    %58 = math.exp %57 : vector<4x8x8xf32>
    %cst_27 = arith.constant dense<0.000000e+00> : vector<4x8xf32>
    %59 = vector.multi_reduction <add>, %58, %cst_27 [2] : vector<4x8x8xf32> to vector<4x8xf32>
    %60 = vector.shape_cast %59 : vector<4x8xf32> to vector<4x8x1xf32>
    %61 = tpu.reciprocal %60 : vector<4x8x1xf32> -> vector<4x8x1xf32>
    %62 = vector.broadcast %61 : vector<4x8x1xf32> to vector<4x8x8xf32>
    %63 = arith.mulf %58, %62 : vector<4x8x8xf32>
    "tpu.trace_start"() <{level = 10 : i32, message = "bqk,bkd->bqd"}> : () -> ()
    %cst_28 = arith.constant dense<0.000000e+00> : vector<4x8x8xf32>
    %64 = tpu.matmul %63, %52, %cst_28 {dimension_numbers = #tpu.dot_dimension_numbers<[2], [1], [1], [2], [0, 0, 0, 1, 1, 2], [0], [0]>} : vector<4x8x8xf32>, vector<4x8x8xf32>, vector<4x8x8xf32> -> vector<4x8x8xf32>
    "tpu.trace_stop"() : () -> ()
    %65 = vector.shape_cast %64 : vector<4x8x8xf32> to vector<32x8xf32>
    %c0_29 = arith.constant 0 : index
    %c16 = arith.constant 16 : index
    %66 = vector.load %arg16[%c0_29, %c16] : memref<32x32xf32, #tpu.memory_space<vmem>>, vector<32x8xf32>
    tpu.vector_store %arg16[%c0_29, %c16], %65 {strides = array<i32>} : memref<32x32xf32, #tpu.memory_space<vmem>>, vector<32x8xf32>,
    %67 = vector.extract_strided_slice %14 {offsets = [0, 0, 24], sizes = [4, 8, 8], strides = [1, 1, 1]} : vector<4x8x32xf32> to vector<4x8x8xf32>
    %68 = vector.extract_strided_slice %15 {offsets = [0, 0, 24], sizes = [4, 8, 8], strides = [1, 1, 1]} : vector<4x8x64xf32> to vector<4x8x8xf32>
    %69 = vector.extract_strided_slice %15 {offsets = [0, 0, 56], sizes = [4, 8, 8], strides = [1, 1, 1]} : vector<4x8x64xf32> to vector<4x8x8xf32>
    "tpu.trace_start"() <{level = 10 : i32, message = "bqd,bkd->bqk"}> : () -> ()
    %cst_30 = arith.constant dense<0.000000e+00> : vector<4x8x8xf32>
    %70 = tpu.matmul %67, %68, %cst_30 {dimension_numbers = #tpu.dot_dimension_numbers<[2], [2], [1], [1], [0, 0, 0, 1, 1, 1], [0], [0]>} : vector<4x8x8xf32>, vector<4x8x8xf32>, vector<4x8x8xf32> -> vector<4x8x8xf32>
    "tpu.trace_stop"() : () -> ()
    %cst_31 = arith.constant dense<0xFF800000> : vector<4x8xf32>
    %71 = vector.multi_reduction <maximumf>, %70, %cst_31 [2] : vector<4x8x8xf32> to vector<4x8xf32>
    %72 = vector.shape_cast %71 : vector<4x8xf32> to vector<4x8x1xf32>
    %73 = vector.broadcast %72 : vector<4x8x1xf32> to vector<4x8x8xf32>
    %74 = arith.subf %70, %73 : vector<4x8x8xf32>
    %75 = math.exp %74 : vector<4x8x8xf32>
    %cst_32 = arith.constant dense<0.000000e+00> : vector<4x8xf32>
    %76 = vector.multi_reduction <add>, %75, %cst_32 [2] : vector<4x8x8xf32> to vector<4x8xf32>
    %77 = vector.shape_cast %76 : vector<4x8xf32> to vector<4x8x1xf32>
    %78 = tpu.reciprocal %77 : vector<4x8x1xf32> -> vector<4x8x1xf32>
    %79 = vector.broadcast %78 : vector<4x8x1xf32> to vector<4x8x8xf32>
    %80 = arith.mulf %75, %79 : vector<4x8x8xf32>
    "tpu.trace_start"() <{level = 10 : i32, message = "bqk,bkd->bqd"}> : () -> ()
    %cst_33 = arith.constant dense<0.000000e+00> : vector<4x8x8xf32>
    %81 = tpu.matmul %80, %69, %cst_33 {dimension_numbers = #tpu.dot_dimension_numbers<[2], [1], [1], [2], [0, 0, 0, 1, 1, 2], [0], [0]>} : vector<4x8x8xf32>, vector<4x8x8xf32>, vector<4x8x8xf32> -> vector<4x8x8xf32>
    "tpu.trace_stop"() : () -> ()
    %82 = vector.shape_cast %81 : vector<4x8x8xf32> to vector<32x8xf32>
    %c0_34 = arith.constant 0 : index
    %c24 = arith.constant 24 : index
    %83 = vector.load %arg16[%c0_34, %c24] : memref<32x32xf32, #tpu.memory_space<vmem>>, vector<32x8xf32>
    tpu.vector_store %arg16[%c0_34, %c24], %82 {strides = array<i32>} : memref<32x32xf32, #tpu.memory_space<vmem>>, vector<32x8xf32>,
    %c0_35 = arith.constant 0 : index
    %c0_36 = arith.constant 0 : index
    %84 = vector.load %arg16[%c0_35, %c0_36] : memref<32x32xf32, #tpu.memory_space<vmem>>, vector<32x32xf32>
    %c0_37 = arith.constant 0 : index
    %c0_38 = arith.constant 0 : index
    %85 = vector.load %arg7[%c0_37, %c0_38] : memref<32x32xf32, #tpu.memory_space<vmem>>, vector<32x32xf32>
    %cst_39 = arith.constant dense<0.000000e+00> : vector<32x32xf32>
    %86 = tpu.matmul %84, %85, %cst_39 {dimension_numbers = #tpu.dot_dimension_numbers<[1], [0], [0], [1], [0, 0, 1, 1], [], []>} : vector<32x32xf32>, vector<32x32xf32>, vector<32x32xf32> -> vector<32x32xf32>
    %c0_40 = arith.constant 0 : index
    %c0_41 = arith.constant 0 : index
    %87 = vector.load %arg8[%c0_40, %c0_41] : memref<1x32xf32, #tpu.memory_space<vmem>>, vector<1x32xf32>
    %88 = vector.broadcast %87 : vector<1x32xf32> to vector<32x32xf32>
    %89 = arith.addf %86, %88 : vector<32x32xf32>
    %90 = arith.addf %89, %1 : vector<32x32xf32>
    %c0_42 = arith.constant 0 : index
    %c0_43 = arith.constant 0 : index
    %91 = vector.load %arg11[%c0_42, %c0_43] : memref<1x32xf32, #tpu.memory_space<vmem>>, vector<1x32xf32>
    %c0_44 = arith.constant 0 : index
    %c0_45 = arith.constant 0 : index
    %92 = vector.load %arg12[%c0_44, %c0_45] : memref<1x32xf32, #tpu.memory_space<vmem>>, vector<1x32xf32>
    %cst_46 = arith.constant dense<0.000000e+00> : vector<32xf32>
    %93 = vector.multi_reduction <add>, %90, %cst_46 [1] : vector<32x32xf32> to vector<32xf32>
    %94 = vector.shape_cast %93 : vector<32xf32> to vector<32x1xf32>
    %cst_47 = arith.constant 3.200000e+01 : f32
    %95 = vector.broadcast %cst_47 : f32 to vector<32x1xf32>
    %96 = arith.divf %94, %95 : vector<32x1xf32>
    %97 = vector.broadcast %96 : vector<32x1xf32> to vector<32x32xf32>
    %98 = arith.subf %90, %97 : vector<32x32xf32>
    %99 = arith.mulf %98, %98 : vector<32x32xf32>
    %cst_48 = arith.constant dense<0.000000e+00> : vector<32xf32>
    %100 = vector.multi_reduction <add>, %99, %cst_48 [1] : vector<32x32xf32> to vector<32xf32>
    %101 = vector.shape_cast %100 : vector<32xf32> to vector<32x1xf32>
    %cst_49 = arith.constant 3.200000e+01 : f32
    %102 = vector.broadcast %cst_49 : f32 to vector<32x1xf32>
    %103 = arith.divf %101, %102 : vector<32x1xf32>
    %104 = vector.broadcast %96 : vector<32x1xf32> to vector<32x32xf32>
    %105 = arith.subf %90, %104 : vector<32x32xf32>
    %cst_50 = arith.constant 9.99999974E-6 : f32
    %106 = vector.broadcast %cst_50 : f32 to vector<32x1xf32>
    %107 = arith.addf %103, %106 : vector<32x1xf32>
    %108 = math.rsqrt %107 : vector<32x1xf32>
    %109 = vector.broadcast %108 : vector<32x1xf32> to vector<32x32xf32>
    %110 = arith.mulf %105, %109 : vector<32x32xf32>
    %111 = vector.broadcast %91 : vector<1x32xf32> to vector<32x32xf32>
    %112 = arith.mulf %110, %111 : vector<32x32xf32>
    %113 = vector.broadcast %92 : vector<1x32xf32> to vector<32x32xf32>
    %114 = arith.addf %112, %113 : vector<32x32xf32>
    %c0_51 = arith.constant 0 : index
    %c0_52 = arith.constant 0 : index
    %115 = vector.load %arg9[%c0_51, %c0_52] : memref<32x32xf32, #tpu.memory_space<vmem>>, vector<32x32xf32>
    %cst_53 = arith.constant dense<0.000000e+00> : vector<32x32xf32>
    %116 = tpu.matmul %114, %115, %cst_53 {dimension_numbers = #tpu.dot_dimension_numbers<[1], [0], [0], [1], [0, 0, 1, 1], [], []>} : vector<32x32xf32>, vector<32x32xf32>, vector<32x32xf32> -> vector<32x32xf32>
    %c0_54 = arith.constant 0 : index
    %c0_55 = arith.constant 0 : index
    %117 = vector.load %arg10[%c0_54, %c0_55] : memref<1x32xf32, #tpu.memory_space<vmem>>, vector<1x32xf32>
    %118 = vector.broadcast %117 : vector<1x32xf32> to vector<32x32xf32>
    %119 = arith.addf %116, %118 : vector<32x32xf32>
    %120 = arith.addf %119, %114 : vector<32x32xf32>
    %c0_56 = arith.constant 0 : index
    %c0_57 = arith.constant 0 : index
    %121 = vector.load %arg13[%c0_56, %c0_57] : memref<1x32xf32, #tpu.memory_space<vmem>>, vector<1x32xf32>
    %c0_58 = arith.constant 0 : index
    %c0_59 = arith.constant 0 : index
    %122 = vector.load %arg14[%c0_58, %c0_59] : memref<1x32xf32, #tpu.memory_space<vmem>>, vector<1x32xf32>
    %cst_60 = arith.constant dense<0.000000e+00> : vector<32xf32>
    %123 = vector.multi_reduction <add>, %120, %cst_60 [1] : vector<32x32xf32> to vector<32xf32>
    %124 = vector.shape_cast %123 : vector<32xf32> to vector<32x1xf32>
    %cst_61 = arith.constant 3.200000e+01 : f32
    %125 = vector.broadcast %cst_61 : f32 to vector<32x1xf32>
    %126 = arith.divf %124, %125 : vector<32x1xf32>
    %127 = vector.broadcast %126 : vector<32x1xf32> to vector<32x32xf32>
    %128 = arith.subf %120, %127 : vector<32x32xf32>
    %129 = arith.mulf %128, %128 : vector<32x32xf32>
    %cst_62 = arith.constant dense<0.000000e+00> : vector<32xf32>
    %130 = vector.multi_reduction <add>, %129, %cst_62 [1] : vector<32x32xf32> to vector<32xf32>
    %131 = vector.shape_cast %130 : vector<32xf32> to vector<32x1xf32>
    %cst_63 = arith.constant 3.200000e+01 : f32
    %132 = vector.broadcast %cst_63 : f32 to vector<32x1xf32>
    %133 = arith.divf %131, %132 : vector<32x1xf32>
    %134 = vector.broadcast %126 : vector<32x1xf32> to vector<32x32xf32>
    %135 = arith.subf %120, %134 : vector<32x32xf32>
    %cst_64 = arith.constant 9.99999974E-6 : f32
    %136 = vector.broadcast %cst_64 : f32 to vector<32x1xf32>
    %137 = arith.addf %133, %136 : vector<32x1xf32>
    %138 = math.rsqrt %137 : vector<32x1xf32>
    %139 = vector.broadcast %138 : vector<32x1xf32> to vector<32x32xf32>
    %140 = arith.mulf %135, %139 : vector<32x32xf32>
    %141 = vector.broadcast %121 : vector<1x32xf32> to vector<32x32xf32>
    %142 = arith.mulf %140, %141 : vector<32x32xf32>
    %143 = vector.broadcast %122 : vector<1x32xf32> to vector<32x32xf32>
    %144 = arith.addf %142, %143 : vector<32x32xf32>
    %145 = vector.shape_cast %144 : vector<32x32xf32> to vector<4x8x32xf32>
    %c0_65 = arith.constant 0 : index
    %c0_66 = arith.constant 0 : index
    %c0_67 = arith.constant 0 : index
    %146 = vector.load %arg15[%c0_65, %c0_66, %c0_67] : memref<4x8x32xf32, #tpu.memory_space<vmem>>, vector<4x8x32xf32>
    tpu.vector_store %arg15[%c0_65, %c0_66, %c0_67], %145 {strides = array<i32>} : memref<4x8x32xf32, #tpu.memory_space<vmem>>, vector<4x8x32xf32>,
    return
  }
  func.func @transform_0(%arg0: i32) -> (i32, i32, i32) {
    %c0_i32 = arith.constant 0 : i32
    %c0_i32_0 = arith.constant 0 : i32
    %c0_i32_1 = arith.constant 0 : i32
    return %arg0, %c0_i32, %c0_i32_0 : i32, i32, i32
  }
  func.func @transform_1(%arg0: i32) -> (i32, i32, i32) {
    %c0_i32 = arith.constant 0 : i32
    %c0_i32_0 = arith.constant 0 : i32
    %c0_i32_1 = arith.constant 0 : i32
    return %arg0, %c0_i32, %c0_i32_0 : i32, i32, i32
  }
  func.func @transform_2(%arg0: i32) -> (i32, i32) {
    %c0_i32 = arith.constant 0 : i32
    %c0_i32_0 = arith.constant 0 : i32
    %c0_i32_1 = arith.constant 0 : i32
    return %c0_i32, %c0_i32_0 : i32, i32
  }
  func.func @transform_3(%arg0: i32) -> (i32, i32) {
    %c0_i32 = arith.constant 0 : i32
    %c0_i32_0 = arith.constant 0 : i32
    %c0_i32_1 = arith.constant 0 : i32
    return %c0_i32, %c0_i32_0 : i32, i32
  }
  func.func @transform_4(%arg0: i32) -> (i32, i32) {
    %c0_i32 = arith.constant 0 : i32
    %c0_i32_0 = arith.constant 0 : i32
    %c0_i32_1 = arith.constant 0 : i32
    return %c0_i32, %c0_i32_0 : i32, i32
  }
  func.func @transform_5(%arg0: i32) -> (i32, i32) {
    %c0_i32 = arith.constant 0 : i32
    %c0_i32_0 = arith.constant 0 : i32
    %c0_i32_1 = arith.constant 0 : i32
    return %c0_i32, %c0_i32_0 : i32, i32
  }
  func.func @transform_6(%arg0: i32) -> (i32, i32) {
    %c0_i32 = arith.constant 0 : i32
    %c0_i32_0 = arith.constant 0 : i32
    %c0_i32_1 = arith.constant 0 : i32
    return %c0_i32, %c0_i32_0 : i32, i32
  }
  func.func @transform_7(%arg0: i32) -> (i32, i32) {
    %c0_i32 = arith.constant 0 : i32
    %c0_i32_0 = arith.constant 0 : i32
    %c0_i32_1 = arith.constant 0 : i32
    return %c0_i32, %c0_i32_0 : i32, i32
  }
  func.func @transform_8(%arg0: i32) -> (i32, i32) {
    %c0_i32 = arith.constant 0 : i32
    %c0_i32_0 = arith.constant 0 : i32
    %c0_i32_1 = arith.constant 0 : i32
    return %c0_i32, %c0_i32_0 : i32, i32
  }
  func.func @transform_9(%arg0: i32) -> (i32, i32) {
    %c0_i32 = arith.constant 0 : i32
    %c0_i32_0 = arith.constant 0 : i32
    %c0_i32_1 = arith.constant 0 : i32
    return %c0_i32, %c0_i32_0 : i32, i32
  }
  func.func @transform_10(%arg0: i32) -> (i32, i32) {
    %c0_i32 = arith.constant 0 : i32
    %c0_i32_0 = arith.constant 0 : i32
    %c0_i32_1 = arith.constant 0 : i32
    return %c0_i32, %c0_i32_0 : i32, i32
  }
  func.func @transform_11(%arg0: i32) -> (i32, i32) {
    %c0_i32 = arith.constant 0 : i32
    %c0_i32_0 = arith.constant 0 : i32
    %c0_i32_1 = arith.constant 0 : i32
    return %c0_i32, %c0_i32_0 : i32, i32
  }
  func.func @transform_12(%arg0: i32) -> (i32, i32) {
    %c0_i32 = arith.constant 0 : i32
    %c0_i32_0 = arith.constant 0 : i32
    %c0_i32_1 = arith.constant 0 : i32
    return %c0_i32, %c0_i32_0 : i32, i32
  }
  func.func @transform_13(%arg0: i32) -> (i32, i32) {
    %c0_i32 = arith.constant 0 : i32
    %c0_i32_0 = arith.constant 0 : i32
    %c0_i32_1 = arith.constant 0 : i32
    return %c0_i32, %c0_i32_0 : i32, i32
  }
  func.func @transform_14(%arg0: i32) -> (i32, i32, i32) {
    %c0_i32 = arith.constant 0 : i32
    %c0_i32_0 = arith.constant 0 : i32
    %c0_i32_1 = arith.constant 0 : i32
    return %arg0, %c0_i32, %c0_i32_0 : i32, i32, i32
  }
}

module attributes {stable_mosaic.version = 11 : i64} {
  func.func @mha_context_kernel(%arg0: i32, %arg1: memref<4x8x32xf32, #tpu.memory_space<vmem>>, %arg2: memref<4x8x32xf32, #tpu.memory_space<vmem>>, %arg3: memref<32x32xf32, #tpu.memory_space<vmem>>, %arg4: memref<1x32xf32, #tpu.memory_space<vmem>>, %arg5: memref<32x64xf32, #tpu.memory_space<vmem>>, %arg6: memref<1x64xf32, #tpu.memory_space<vmem>>, %arg7: memref<32x32xf32, #tpu.memory_space<vmem>>, %arg8: memref<1x32xf32, #tpu.memory_space<vmem>>, %arg9: memref<32x32xf32, #tpu.memory_space<vmem>>, %arg10: memref<1x32xf32, #tpu.memory_space<vmem>>, %arg11: memref<1x32xf32, #tpu.memory_space<vmem>>, %arg12: memref<1x32xf32, #tpu.memory_space<vmem>>, %arg13: memref<1x32xf32, #tpu.memory_space<vmem>>, %arg14: memref<1x32xf32, #tpu.memory_space<vmem>>, %arg15: memref<4x8x32xf32, #tpu.memory_space<vmem>>, %arg16: memref<32x32xf32, #tpu.memory_space<vmem>>) attributes {dimension_semantics = [#tpu.dimension_semantics<parallel>], iteration_bounds = array<i64: 1>, scalar_prefetch = 0 : i64, scratch_operands = 1 : i64, tpu.core_type = #tpu.core_type<tc>, window_params = [{transform_indices = @transform_0, window_bounds = array<i64: 4, 8, 32>}, {transform_indices = @transform_1, window_bounds = array<i64: 4, 8, 32>}, {pipeline_mode = #tpu.pipeline_mode<synchronous>, transform_indices = @transform_2, window_bounds = array<i64: 32, 32>}, {pipeline_mode = #tpu.pipeline_mode<synchronous>, transform_indices = @transform_3, window_bounds = array<i64: 1, 32>}, {pipeline_mode = #tpu.pipeline_mode<synchronous>, transform_indices = @transform_4, window_bounds = array<i64: 32, 64>}, {pipeline_mode = #tpu.pipeline_mode<synchronous>, transform_indices = @transform_5, window_bounds = array<i64: 1, 64>}, {pipeline_mode = #tpu.pipeline_mode<synchronous>, transform_indices = @transform_6, window_bounds = array<i64: 32, 32>}, {pipeline_mode = #tpu.pipeline_mode<synchronous>, transform_indices = @transform_7, window_bounds = array<i64: 1, 32>}, {pipeline_mode = #tpu.pipeline_mode<synchronous>, transform_indices = @transform_8, window_bounds = array<i64: 32, 32>}, {pipeline_mode = #tpu.pipeline_mode<synchronous>, transform_indices = @transform_9, window_bounds = array<i64: 1, 32>}, {pipeline_mode = #tpu.pipeline_mode<synchronous>, transform_indices = @transform_10, window_bounds = array<i64: 1, 32>}, {pipeline_mode = #tpu.pipeline_mode<synchronous>, transform_indices = @transform_11, window_bounds = array<i64: 1, 32>}, {pipeline_mode = #tpu.pipeline_mode<synchronous>, transform_indices = @transform_12, window_bounds = array<i64: 1, 32>}, {pipeline_mode = #tpu.pipeline_mode<synchronous>, transform_indices = @transform_13, window_bounds = array<i64: 1, 32>}, {transform_indices = @transform_14, window_bounds = array<i64: 4, 8, 32>}]} {
    %c0 = arith.constant 0 : index
    %c0_0 = arith.constant 0 : index
    %c0_1 = arith.constant 0 : index
    %0 = vector.load %arg1[%c0, %c0_0, %c0_1] : memref<4x8x32xf32, #tpu.memory_space<vmem>>, vector<4x8x32xf32>
    %1 = vector.shape_cast %0 : vector<4x8x32xf32> to vector<32x32xf32>
    %c0_2 = arith.constant 0 : index
    %c0_3 = arith.constant 0 : index
    %c0_4 = arith.constant 0 : index
    %2 = vector.load %arg2[%c0_2, %c0_3, %c0_4] : memref<4x8x32xf32, #tpu.memory_space<vmem>>, vector<4x8x32xf32>
    %3 = vector.shape_cast %2 : vector<4x8x32xf32> to vector<32x32xf32>
    %c0_5 = arith.constant 0 : index
    %c0_6 = arith.constant 0 : index
    %4 = vector.load %arg3[%c0_5, %c0_6] : memref<32x32xf32, #tpu.memory_space<vmem>>, vector<32x32xf32>
    %cst = arith.constant dense<0.000000e+00> : vector<32x32xf32>
    %5 = tpu.matmul %1, %4, %cst {dimension_numbers = #tpu.dot_dimension_numbers<[1], [0], [0], [1], [0, 0, 1, 1], [], []>} : vector<32x32xf32>, vector<32x32xf32>, vector<32x32xf32> -> vector<32x32xf32>
    %c0_7 = arith.constant 0 : index
    %c0_8 = arith.constant 0 : index
    %6 = vector.load %arg4[%c0_7, %c0_8] : memref<1x32xf32, #tpu.memory_space<vmem>>, vector<1x32xf32>
    %7 = vector.broadcast %6 : vector<1x32xf32> to vector<32x32xf32>
    %8 = arith.addf %5, %7 : vector<32x32xf32>
    %c0_9 = arith.constant 0 : index
    %c0_10 = arith.constant 0 : index
    %9 = vector.load %arg5[%c0_9, %c0_10] : memref<32x64xf32, #tpu.memory_space<vmem>>, vector<32x64xf32>
    %cst_11 = arith.constant dense<0.000000e+00> : vector<32x64xf32>
    %10 = tpu.matmul %3, %9, %cst_11 {dimension_numbers = #tpu.dot_dimension_numbers<[1], [0], [0], [1], [0, 0, 1, 1], [], []>} : vector<32x32xf32>, vector<32x64xf32>, vector<32x64xf32> -> vector<32x64xf32>
    %c0_12 = arith.constant 0 : index
    %c0_13 = arith.constant 0 : index
    %11 = vector.load %arg6[%c0_12, %c0_13] : memref<1x64xf32, #tpu.memory_space<vmem>>, vector<1x64xf32>
    %12 = vector.broadcast %11 : vector<1x64xf32> to vector<32x64xf32>
    %13 = arith.addf %10, %12 : vector<32x64xf32>
    %14 = vector.shape_cast %8 : vector<32x32xf32> to vector<4x8x32xf32>
    %15 = vector.shape_cast %13 : vector<32x64xf32> to vector<4x8x64xf32>
    %16 = vector.extract_strided_slice %14 {offsets = [0, 0, 0], sizes = [4, 8, 8], strides = [1, 1, 1]} : vector<4x8x32xf32> to vector<4x8x8xf32>
    %17 = vector.extract_strided_slice %15 {offsets = [0, 0, 0], sizes = [4, 8, 8], strides = [1, 1, 1]} : vector<4x8x64xf32> to vector<4x8x8xf32>
    %18 = vector.extract_strided_slice %15 {offsets = [0, 0, 32], sizes = [4, 8, 8], strides = [1, 1, 1]} : vector<4x8x64xf32> to vector<4x8x8xf32>
    "tpu.trace_start"() <{level = 10 : i32, message = "bqd,bkd->bqk"}> : () -> ()
    %cst_14 = arith.constant dense<0.000000e+00> : vector<4x8x8xf32>
    %19 = tpu.matmul %16, %17, %cst_14 {dimension_numbers = #tpu.dot_dimension_numbers<[2], [2], [1], [1], [0, 0, 0, 1, 1, 1], [0], [0]>} : vector<4x8x8xf32>, vector<4x8x8xf32>, vector<4x8x8xf32> -> vector<4x8x8xf32>
    "tpu.trace_stop"() : () -> ()
    %cst_15 = arith.constant dense<0xFF800000> : vector<4x8xf32>
    %20 = vector.multi_reduction <maximumf>, %19, %cst_15 [2] : vector<4x8x8xf32> to vector<4x8xf32>
    %21 = vector.shape_cast %20 : vector<4x8xf32> to vector<4x8x1xf32>
    %22 = vector.broadcast %21 : vector<4x8x1xf32> to vector<4x8x8xf32>
    %23 = arith.subf %19, %22 : vector<4x8x8xf32>
    %24 = math.exp %23 : vector<4x8x8xf32>
    %cst_16 = arith.constant dense<0.000000e+00> : vector<4x8xf32>
    %25 = vector.multi_reduction <add>, %24, %cst_16 [2] : vector<4x8x8xf32> to vector<4x8xf32>
    %26 = vector.shape_cast %25 : vector<4x8xf32> to vector<4x8x1xf32>
    %27 = tpu.reciprocal %26 : vector<4x8x1xf32> -> vector<4x8x1xf32>
    %28 = vector.broadcast %27 : vector<4x8x1xf32> to vector<4x8x8xf32>
    %29 = arith.mulf %24, %28 : vector<4x8x8xf32>
    "tpu.trace_start"() <{level = 10 : i32, message = "bqk,bkd->bqd"}> : () -> ()
    %cst_17 = arith.constant dense<0.000000e+00> : vector<4x8x8xf32>
    %30 = tpu.matmul %29, %18, %cst_17 {dimension_numbers = #tpu.dot_dimension_numbers<[2], [1], [1], [2], [0, 0, 0, 1, 1, 2], [0], [0]>} : vector<4x8x8xf32>, vector<4x8x8xf32>, vector<4x8x8xf32> -> vector<4x8x8xf32>
    "tpu.trace_stop"() : () -> ()
    %31 = vector.shape_cast %30 : vector<4x8x8xf32> to vector<32x8xf32>
    %c0_18 = arith.constant 0 : index
    %c0_19 = arith.constant 0 : index
    %32 = vector.load %arg16[%c0_18, %c0_19] : memref<32x32xf32, #tpu.memory_space<vmem>>, vector<32x8xf32>
    tpu.vector_store %arg16[%c0_18, %c0_19], %31 {strides = array<i32>} : memref<32x32xf32, #tpu.memory_space<vmem>>, vector<32x8xf32>,
    %33 = vector.extract_strided_slice %14 {offsets = [0, 0, 8], sizes = [4, 8, 8], strides = [1, 1, 1]} : vector<4x8x32xf32> to vector<4x8x8xf32>
    %34 = vector.extract_strided_slice %15 {offsets = [0, 0, 8], sizes = [4, 8, 8], strides = [1, 1, 1]} : vector<4x8x64xf32> to vector<4x8x8xf32>
    %35 = vector.extract_strided_slice %15 {offsets = [0, 0, 40], sizes = [4, 8, 8], strides = [1, 1, 1]} : vector<4x8x64xf32> to vector<4x8x8xf32>
    "tpu.trace_start"() <{level = 10 : i32, message = "bqd,bkd->bqk"}> : () -> ()
    %cst_20 = arith.constant dense<0.000000e+00> : vector<4x8x8xf32>
    %36 = tpu.matmul %33, %34, %cst_20 {dimension_numbers = #tpu.dot_dimension_numbers<[2], [2], [1], [1], [0, 0, 0, 1, 1, 1], [0], [0]>} : vector<4x8x8xf32>, vector<4x8x8xf32>, vector<4x8x8xf32> -> vector<4x8x8xf32>
    "tpu.trace_stop"() : () -> ()
    %cst_21 = arith.constant dense<0xFF800000> : vector<4x8xf32>
    %37 = vector.multi_reduction <maximumf>, %36, %cst_21 [2] : vector<4x8x8xf32> to vector<4x8xf32>
    %38 = vector.shape_cast %37 : vector<4x8xf32> to vector<4x8x1xf32>
    %39 = vector.broadcast %38 : vector<4x8x1xf32> to vector<4x8x8xf32>
    %40 = arith.subf %36, %39 : vector<4x8x8xf32>
    %41 = math.exp %40 : vector<4x8x8xf32>
    %cst_22 = arith.constant dense<0.000000e+00> : vector<4x8xf32>
    %42 = vector.multi_reduction <add>, %41, %cst_22 [2] : vector<4x8x8xf32> to vector<4x8xf32>
    %43 = vector.shape_cast %42 : vector<4x8xf32> to vector<4x8x1xf32>
    %44 = tpu.reciprocal %43 : vector<4x8x1xf32> -> vector<4x8x1xf32>
    %45 = vector.broadcast %44 : vector<4x8x1xf32> to vector<4x8x8xf32>
    %46 = arith.mulf %41, %45 : vector<4x8x8xf32>
    "tpu.trace_start"() <{level = 10 : i32, message = "bqk,bkd->bqd"}> : () -> ()
    %cst_23 = arith.constant dense<0.000000e+00> : vector<4x8x8xf32>
    %47 = tpu.matmul %46, %35, %cst_23 {dimension_numbers = #tpu.dot_dimension_numbers<[2], [1], [1], [2], [0, 0, 0, 1, 1, 2], [0], [0]>} : vector<4x8x8xf32>, vector<4x8x8xf32>, vector<4x8x8xf32> -> vector<4x8x8xf32>
    "tpu.trace_stop"() : () -> ()
    %48 = vector.shape_cast %47 : vector<4x8x8xf32> to vector<32x8xf32>
    %c0_24 = arith.constant 0 : index
    %c8 = arith.constant 8 : index
    %49 = vector.load %arg16[%c0_24, %c8] : memref<32x32xf32, #tpu.memory_space<vmem>>, vector<32x8xf32>
    tpu.vector_store %arg16[%c0_24, %c8], %48 {strides = array<i32>} : memref<32x32xf32, #tpu.memory_space<vmem>>, vector<32x8xf32>,
    %50 = vector.extract_strided_slice %14 {offsets = [0, 0, 16], sizes = [4, 8, 8], strides = [1, 1, 1]} : vector<4x8x32xf32> to vector<4x8x8xf32>
    %51 = vector.extract_strided_slice %15 {offsets = [0, 0, 16], sizes = [4, 8, 8], strides = [1, 1, 1]} : vector<4x8x64xf32> to vector<4x8x8xf32>
    %52 = vector.extract_strided_slice %15 {offsets = [0, 0, 48], sizes = [4, 8, 8], strides = [1, 1, 1]} : vector<4x8x64xf32> to vector<4x8x8xf32>
    "tpu.trace_start"() <{level = 10 : i32, message = "bqd,bkd->bqk"}> : () -> ()
    %cst_25 = arith.constant dense<0.000000e+00> : vector<4x8x8xf32>
    %53 = tpu.matmul %50, %51, %cst_25 {dimension_numbers = #tpu.dot_dimension_numbers<[2], [2], [1], [1], [0, 0, 0, 1, 1, 1], [0], [0]>} : vector<4x8x8xf32>, vector<4x8x8xf32>, vector<4x8x8xf32> -> vector<4x8x8xf32>
    "tpu.trace_stop"() : () -> ()
    %cst_26 = arith.constant dense<0xFF800000> : vector<4x8xf32>
    %54 = vector.multi_reduction <maximumf>, %53, %cst_26 [2] : vector<4x8x8xf32> to vector<4x8xf32>
    %55 = vector.shape_cast %54 : vector<4x8xf32> to vector<4x8x1xf32>
    %56 = vector.broadcast %55 : vector<4x8x1xf32> to vector<4x8x8xf32>
    %57 = arith.subf %53, %56 : vector<4x8x8xf32>
    %58 = math.exp %57 : vector<4x8x8xf32>
    %cst_27 = arith.constant dense<0.000000e+00> : vector<4x8xf32>
    %59 = vector.multi_reduction <add>, %58, %cst_27 [2] : vector<4x8x8xf32> to vector<4x8xf32>
    %60 = vector.shape_cast %59 : vector<4x8xf32> to vector<4x8x1xf32>
    %61 = tpu.reciprocal %60 : vector<4x8x1xf32> -> vector<4x8x1xf32>
    %62 = vector.broadcast %61 : vector<4x8x1xf32> to vector<4x8x8xf32>
    %63 = arith.mulf %58, %62 : vector<4x8x8xf32>
    "tpu.trace_start"() <{level = 10 : i32, message = "bqk,bkd->bqd"}> : () -> ()
    %cst_28 = arith.constant dense<0.000000e+00> : vector<4x8x8xf32>
    %64 = tpu.matmul %63, %52, %cst_28 {dimension_numbers = #tpu.dot_dimension_numbers<[2], [1], [1], [2], [0, 0, 0, 1, 1, 2], [0], [0]>} : vector<4x8x8xf32>, vector<4x8x8xf32>, vector<4x8x8xf32> -> vector<4x8x8xf32>
    "tpu.trace_stop"() : () -> ()
    %65 = vector.shape_cast %64 : vector<4x8x8xf32> to vector<32x8xf32>
    %c0_29 = arith.constant 0 : index
    %c16 = arith.constant 16 : index
    %66 = vector.load %arg16[%c0_29, %c16] : memref<32x32xf32, #tpu.memory_space<vmem>>, vector<32x8xf32>
    tpu.vector_store %arg16[%c0_29, %c16], %65 {strides = array<i32>} : memref<32x32xf32, #tpu.memory_space<vmem>>, vector<32x8xf32>,
    %67 = vector.extract_strided_slice %14 {offsets = [0, 0, 24], sizes = [4, 8, 8], strides = [1, 1, 1]} : vector<4x8x32xf32> to vector<4x8x8xf32>
    %68 = vector.extract_strided_slice %15 {offsets = [0, 0, 24], sizes = [4, 8, 8], strides = [1, 1, 1]} : vector<4x8x64xf32> to vector<4x8x8xf32>
    %69 = vector.extract_strided_slice %15 {offsets = [0, 0, 56], sizes = [4, 8, 8], strides = [1, 1, 1]} : vector<4x8x64xf32> to vector<4x8x8xf32>
    "tpu.trace_start"() <{level = 10 : i32, message = "bqd,bkd->bqk"}> : () -> ()
    %cst_30 = arith.constant dense<0.000000e+00> : vector<4x8x8xf32>
    %70 = tpu.matmul %67, %68, %cst_30 {dimension_numbers = #tpu.dot_dimension_numbers<[2], [2], [1], [1], [0, 0, 0, 1, 1, 1], [0], [0]>} : vector<4x8x8xf32>, vector<4x8x8xf32>, vector<4x8x8xf32> -> vector<4x8x8xf32>
    "tpu.trace_stop"() : () -> ()
    %cst_31 = arith.constant dense<0xFF800000> : vector<4x8xf32>
    %71 = vector.multi_reduction <maximumf>, %70, %cst_31 [2] : vector<4x8x8xf32> to vector<4x8xf32>
    %72 = vector.shape_cast %71 : vector<4x8xf32> to vector<4x8x1xf32>
    %73 = vector.broadcast %72 : vector<4x8x1xf32> to vector<4x8x8xf32>
    %74 = arith.subf %70, %73 : vector<4x8x8xf32>
    %75 = math.exp %74 : vector<4x8x8xf32>
    %cst_32 = arith.constant dense<0.000000e+00> : vector<4x8xf32>
    %76 = vector.multi_reduction <add>, %75, %cst_32 [2] : vector<4x8x8xf32> to vector<4x8xf32>
    %77 = vector.shape_cast %76 : vector<4x8xf32> to vector<4x8x1xf32>
    %78 = tpu.reciprocal %77 : vector<4x8x1xf32> -> vector<4x8x1xf32>
    %79 = vector.broadcast %78 : vector<4x8x1xf32> to vector<4x8x8xf32>
    %80 = arith.mulf %75, %79 : vector<4x8x8xf32>
    "tpu.trace_start"() <{level = 10 : i32, message = "bqk,bkd->bqd"}> : () -> ()
    %cst_33 = arith.constant dense<0.000000e+00> : vector<4x8x8xf32>
    %81 = tpu.matmul %80, %69, %cst_33 {dimension_numbers = #tpu.dot_dimension_numbers<[2], [1], [1], [2], [0, 0, 0, 1, 1, 2], [0], [0]>} : vector<4x8x8xf32>, vector<4x8x8xf32>, vector<4x8x8xf32> -> vector<4x8x8xf32>
    "tpu.trace_stop"() : () -> ()
    %82 = vector.shape_cast %81 : vector<4x8x8xf32> to vector<32x8xf32>
    %c0_34 = arith.constant 0 : index
    %c24 = arith.constant 24 : index
    %83 = vector.load %arg16[%c0_34, %c24] : memref<32x32xf32, #tpu.memory_space<vmem>>, vector<32x8xf32>
    tpu.vector_store %arg16[%c0_34, %c24], %82 {strides = array<i32>} : memref<32x32xf32, #tpu.memory_space<vmem>>, vector<32x8xf32>,
    %c0_35 = arith.constant 0 : index
    %c0_36 = arith.constant 0 : index
    %84 = vector.load %arg16[%c0_35, %c0_36] : memref<32x32xf32, #tpu.memory_space<vmem>>, vector<32x32xf32>
    %c0_37 = arith.constant 0 : index
    %c0_38 = arith.constant 0 : index
    %85 = vector.load %arg7[%c0_37, %c0_38] : memref<32x32xf32, #tpu.memory_space<vmem>>, vector<32x32xf32>
    %cst_39 = arith.constant dense<0.000000e+00> : vector<32x32xf32>
    %86 = tpu.matmul %84, %85, %cst_39 {dimension_numbers = #tpu.dot_dimension_numbers<[1], [0], [0], [1], [0, 0, 1, 1], [], []>} : vector<32x32xf32>, vector<32x32xf32>, vector<32x32xf32> -> vector<32x32xf32>
    %c0_40 = arith.constant 0 : index
    %c0_41 = arith.constant 0 : index
    %87 = vector.load %arg8[%c0_40, %c0_41] : memref<1x32xf32, #tpu.memory_space<vmem>>, vector<1x32xf32>
    %88 = vector.broadcast %87 : vector<1x32xf32> to vector<32x32xf32>
    %89 = arith.addf %86, %88 : vector<32x32xf32>
    %90 = arith.addf %89, %1 : vector<32x32xf32>
    %c0_42 = arith.constant 0 : index
    %c0_43 = arith.constant 0 : index
    %91 = vector.load %arg11[%c0_42, %c0_43] : memref<1x32xf32, #tpu.memory_space<vmem>>, vector<1x32xf32>
    %c0_44 = arith.constant 0 : index
    %c0_45 = arith.constant 0 : index
    %92 = vector.load %arg12[%c0_44, %c0_45] : memref<1x32xf32, #tpu.memory_space<vmem>>, vector<1x32xf32>
    %cst_46 = arith.constant dense<0.000000e+00> : vector<32xf32>
    %93 = vector.multi_reduction <add>, %90, %cst_46 [1] : vector<32x32xf32> to vector<32xf32>
    %94 = vector.shape_cast %93 : vector<32xf32> to vector<32x1xf32>
    %cst_47 = arith.constant 3.200000e+01 : f32
    %95 = vector.broadcast %cst_47 : f32 to vector<32x1xf32>
    %96 = arith.divf %94, %95 : vector<32x1xf32>
    %97 = vector.broadcast %96 : vector<32x1xf32> to vector<32x32xf32>
    %98 = arith.subf %90, %97 : vector<32x32xf32>
    %99 = arith.mulf %98, %98 : vector<32x32xf32>
    %cst_48 = arith.constant dense<0.000000e+00> : vector<32xf32>
    %100 = vector.multi_reduction <add>, %99, %cst_48 [1] : vector<32x32xf32> to vector<32xf32>
    %101 = vector.shape_cast %100 : vector<32xf32> to vector<32x1xf32>
    %cst_49 = arith.constant 3.200000e+01 : f32
    %102 = vector.broadcast %cst_49 : f32 to vector<32x1xf32>
    %103 = arith.divf %101, %102 : vector<32x1xf32>
    %104 = vector.broadcast %96 : vector<32x1xf32> to vector<32x32xf32>
    %105 = arith.subf %90, %104 : vector<32x32xf32>
    %cst_50 = arith.constant 9.99999974E-6 : f32
    %106 = vector.broadcast %cst_50 : f32 to vector<32x1xf32>
    %107 = arith.addf %103, %106 : vector<32x1xf32>
    %108 = math.rsqrt %107 : vector<32x1xf32>
    %109 = vector.broadcast %108 : vector<32x1xf32> to vector<32x32xf32>
    %110 = arith.mulf %105, %109 : vector<32x32xf32>
    %111 = vector.broadcast %91 : vector<1x32xf32> to vector<32x32xf32>
    %112 = arith.mulf %110, %111 : vector<32x32xf32>
    %113 = vector.broadcast %92 : vector<1x32xf32> to vector<32x32xf32>
    %114 = arith.addf %112, %113 : vector<32x32xf32>
    %c0_51 = arith.constant 0 : index
    %c0_52 = arith.constant 0 : index
    %115 = vector.load %arg9[%c0_51, %c0_52] : memref<32x32xf32, #tpu.memory_space<vmem>>, vector<32x32xf32>
    %cst_53 = arith.constant dense<0.000000e+00> : vector<32x32xf32>
    %116 = tpu.matmul %114, %115, %cst_53 {dimension_numbers = #tpu.dot_dimension_numbers<[1], [0], [0], [1], [0, 0, 1, 1], [], []>} : vector<32x32xf32>, vector<32x32xf32>, vector<32x32xf32> -> vector<32x32xf32>
    %c0_54 = arith.constant 0 : index
    %c0_55 = arith.constant 0 : index
    %117 = vector.load %arg10[%c0_54, %c0_55] : memref<1x32xf32, #tpu.memory_space<vmem>>, vector<1x32xf32>
    %118 = vector.broadcast %117 : vector<1x32xf32> to vector<32x32xf32>
    %119 = arith.addf %116, %118 : vector<32x32xf32>
    %120 = arith.addf %119, %114 : vector<32x32xf32>
    %c0_56 = arith.constant 0 : index
    %c0_57 = arith.constant 0 : index
    %121 = vector.load %arg13[%c0_56, %c0_57] : memref<1x32xf32, #tpu.memory_space<vmem>>, vector<1x32xf32>
    %c0_58 = arith.constant 0 : index
    %c0_59 = arith.constant 0 : index
    %122 = vector.load %arg14[%c0_58, %c0_59] : memref<1x32xf32, #tpu.memory_space<vmem>>, vector<1x32xf32>
    %cst_60 = arith.constant dense<0.000000e+00> : vector<32xf32>
    %123 = vector.multi_reduction <add>, %120, %cst_60 [1] : vector<32x32xf32> to vector<32xf32>
    %124 = vector.shape_cast %123 : vector<32xf32> to vector<32x1xf32>
    %cst_61 = arith.constant 3.200000e+01 : f32
    %125 = vector.broadcast %cst_61 : f32 to vector<32x1xf32>
    %126 = arith.divf %124, %125 : vector<32x1xf32>
    %127 = vector.broadcast %126 : vector<32x1xf32> to vector<32x32xf32>
    %128 = arith.subf %120, %127 : vector<32x32xf32>
    %129 = arith.mulf %128, %128 : vector<32x32xf32>
    %cst_62 = arith.constant dense<0.000000e+00> : vector<32xf32>
    %130 = vector.multi_reduction <add>, %129, %cst_62 [1] : vector<32x32xf32> to vector<32xf32>
    %131 = vector.shape_cast %130 : vector<32xf32> to vector<32x1xf32>
    %cst_63 = arith.constant 3.200000e+01 : f32
    %132 = vector.broadcast %cst_63 : f32 to vector<32x1xf32>
    %133 = arith.divf %131, %132 : vector<32x1xf32>
    %134 = vector.broadcast %126 : vector<32x1xf32> to vector<32x32xf32>
    %135 = arith.subf %120, %134 : vector<32x32xf32>
    %cst_64 = arith.constant 9.99999974E-6 : f32
    %136 = vector.broadcast %cst_64 : f32 to vector<32x1xf32>
    %137 = arith.addf %133, %136 : vector<32x1xf32>
    %138 = math.rsqrt %137 : vector<32x1xf32>
    %139 = vector.broadcast %138 : vector<32x1xf32> to vector<32x32xf32>
    %140 = arith.mulf %135, %139 : vector<32x32xf32>
    %141 = vector.broadcast %121 : vector<1x32xf32> to vector<32x32xf32>
    %142 = arith.mulf %140, %141 : vector<32x32xf32>
    %143 = vector.broadcast %122 : vector<1x32xf32> to vector<32x32xf32>
    %144 = arith.addf %142, %143 : vector<32x32xf32>
    %145 = vector.shape_cast %144 : vector<32x32xf32> to vector<4x8x32xf32>
    %c0_65 = arith.constant 0 : index
    %c0_66 = arith.constant 0 : index
    %c0_67 = arith.constant 0 : index
    %146 = vector.load %arg15[%c0_65, %c0_66, %c0_67] : memref<4x8x32xf32, #tpu.memory_space<vmem>>, vector<4x8x32xf32>
    tpu.vector_store %arg15[%c0_65, %c0_66, %c0_67], %145 {strides = array<i32>} : memref<4x8x32xf32, #tpu.memory_space<vmem>>, vector<4x8x32xf32>,
    return
  }
  func.func @transform_0(%arg0: i32) -> (i32, i32, i32) {
    %c0_i32 = arith.constant 0 : i32
    %c0_i32_0 = arith.constant 0 : i32
    %c0_i32_1 = arith.constant 0 : i32
    return %arg0, %c0_i32, %c0_i32_0 : i32, i32, i32
  }
  func.func @transform_1(%arg0: i32) -> (i32, i32, i32) {
    %c0_i32 = arith.constant 0 : i32
    %c0_i32_0 = arith.constant 0 : i32
    %c0_i32_1 = arith.constant 0 : i32
    return %arg0, %c0_i32, %c0_i32_0 : i32, i32, i32
  }
  func.func @transform_2(%arg0: i32) -> (i32, i32) {
    %c0_i32 = arith.constant 0 : i32
    %c0_i32_0 = arith.constant 0 : i32
    %c0_i32_1 = arith.constant 0 : i32
    return %c0_i32, %c0_i32_0 : i32, i32
  }
  func.func @transform_3(%arg0: i32) -> (i32, i32) {
    %c0_i32 = arith.constant 0 : i32
    %c0_i32_0 = arith.constant 0 : i32
    %c0_i32_1 = arith.constant 0 : i32
    return %c0_i32, %c0_i32_0 : i32, i32
  }
  func.func @transform_4(%arg0: i32) -> (i32, i32) {
    %c0_i32 = arith.constant 0 : i32
    %c0_i32_0 = arith.constant 0 : i32
    %c0_i32_1 = arith.constant 0 : i32
    return %c0_i32, %c0_i32_0 : i32, i32
  }
  func.func @transform_5(%arg0: i32) -> (i32, i32) {
    %c0_i32 = arith.constant 0 : i32
    %c0_i32_0 = arith.constant 0 : i32
    %c0_i32_1 = arith.constant 0 : i32
    return %c0_i32, %c0_i32_0 : i32, i32
  }
  func.func @transform_6(%arg0: i32) -> (i32, i32) {
    %c0_i32 = arith.constant 0 : i32
    %c0_i32_0 = arith.constant 0 : i32
    %c0_i32_1 = arith.constant 0 : i32
    return %c0_i32, %c0_i32_0 : i32, i32
  }
  func.func @transform_7(%arg0: i32) -> (i32, i32) {
    %c0_i32 = arith.constant 0 : i32
    %c0_i32_0 = arith.constant 0 : i32
    %c0_i32_1 = arith.constant 0 : i32
    return %c0_i32, %c0_i32_0 : i32, i32
  }
  func.func @transform_8(%arg0: i32) -> (i32, i32) {
    %c0_i32 = arith.constant 0 : i32
    %c0_i32_0 = arith.constant 0 : i32
    %c0_i32_1 = arith.constant 0 : i32
    return %c0_i32, %c0_i32_0 : i32, i32
  }
  func.func @transform_9(%arg0: i32) -> (i32, i32) {
    %c0_i32 = arith.constant 0 : i32
    %c0_i32_0 = arith.constant 0 : i32
    %c0_i32_1 = arith.constant 0 : i32
    return %c0_i32, %c0_i32_0 : i32, i32
  }
  func.func @transform_10(%arg0: i32) -> (i32, i32) {
    %c0_i32 = arith.constant 0 : i32
    %c0_i32_0 = arith.constant 0 : i32
    %c0_i32_1 = arith.constant 0 : i32
    return %c0_i32, %c0_i32_0 : i32, i32
  }
  func.func @transform_11(%arg0: i32) -> (i32, i32) {
    %c0_i32 = arith.constant 0 : i32
    %c0_i32_0 = arith.constant 0 : i32
    %c0_i32_1 = arith.constant 0 : i32
    return %c0_i32, %c0_i32_0 : i32, i32
  }
  func.func @transform_12(%arg0: i32) -> (i32, i32) {
    %c0_i32 = arith.constant 0 : i32
    %c0_i32_0 = arith.constant 0 : i32
    %c0_i32_1 = arith.constant 0 : i32
    return %c0_i32, %c0_i32_0 : i32, i32
  }
  func.func @transform_13(%arg0: i32) -> (i32, i32) {
    %c0_i32 = arith.constant 0 : i32
    %c0_i32_0 = arith.constant 0 : i32
    %c0_i32_1 = arith.constant 0 : i32
    return %c0_i32, %c0_i32_0 : i32, i32
  }
  func.func @transform_14(%arg0: i32) -> (i32, i32, i32) {
    %c0_i32 = arith.constant 0 : i32
    %c0_i32_0 = arith.constant 0 : i32
    %c0_i32_1 = arith.constant 0 : i32
    return %arg0, %c0_i32, %c0_i32_0 : i32, i32, i32
  }
}

</mosaic_0001>

<llo_original>
// kernel: tpu_custom_call.1
$region0: #{tpu_custom_call.1}
  #allocation0 [shape = 'u32[]', space=smem, size = 0x4, offset = 0x4, fixed_abs, tag = 'smem constant byte address 0x4 - core index']
  #allocation1 [shape = 'u32[72,128]{1,0:T(1,128)}', space=vmem, size = 0x9000, scoped, tag = 'internal scratch']
  #allocation2 [shape = 'f32[32,32]{1,0:T(8,128)}', space=vmem, size = 0x4000, scoped, tag = 'scratch operand']
  %s0 = inlined_call_operand.hbm [shape: f32[4,8,32], index: 0, kind: input, shape index: {}]
  %s1 = inlined_call_operand.hbm [shape: f32[4,8,32], index: 1, kind: input, shape index: {}]
  %s2 = inlined_call_operand.hbm [shape: f32[32,32], index: 2, kind: input, shape index: {}]
  %s3 = inlined_call_operand.vmem [shape: f32[1,32], index: 3, kind: input, shape index: {}]
  %s4 = inlined_call_operand.hbm [shape: f32[32,64], index: 4, kind: input, shape index: {}]
  %s5 = inlined_call_operand.vmem [shape: f32[1,64], index: 5, kind: input, shape index: {}]
  %s6 = inlined_call_operand.hbm [shape: f32[32,32], index: 6, kind: input, shape index: {}]
  %s7 = inlined_call_operand.vmem [shape: f32[1,32], index: 7, kind: input, shape index: {}]
  %s8 = inlined_call_operand.hbm [shape: f32[32,32], index: 8, kind: input, shape index: {}]
  %s9 = inlined_call_operand.vmem [shape: f32[1,32], index: 9, kind: input, shape index: {}]
  %s10 = inlined_call_operand.vmem [shape: f32[1,32], index: 10, kind: input, shape index: {}]
  %s11 = inlined_call_operand.vmem [shape: f32[1,32], index: 11, kind: input, shape index: {}]
  %s12 = inlined_call_operand.vmem [shape: f32[1,32], index: 12, kind: input, shape index: {}]
  %s13 = inlined_call_operand.vmem [shape: f32[1,32], index: 13, kind: input, shape index: {}]
  %s14 = inlined_call_operand.hbm [shape: f32[4,8,32], index: 14, kind: output, shape index: {}]
  %s15 = sld [smem:[#allocation0]]
  $region90: #{tpu_custom_call.1} parent=0
    _
  %s17 = ssub.s32 1, %s15
  %s18 = scalar_select 0, %s17, %s15
  $region1: #{tpu_custom_call.1} parent=0
    #allocation3 [shape = 'u8[16384]{0}', space=vmem, size = 0x4000, scoped, tag = 'input window, operand 0, single buffered']
    #allocation4 [shape = 's32[1]{0}', space=sflag, size = 0x4, scoped, tag = 'scoped memory for tpu_custom_call.1']
    #allocation5 [shape = 's32[1]{0}', space=sflag, size = 0x4, scoped, tag = 'scoped memory for tpu_custom_call.1']
    #allocation6 [shape = 'u8[16384]{0}', space=vmem, size = 0x4000, scoped, tag = 'input window, operand 1, single buffered']
    #allocation7 [shape = 's32[1]{0}', space=sflag, size = 0x4, scoped, tag = 'scoped memory for tpu_custom_call.1']
    #allocation8 [shape = 'u8[16384]{0}', space=vmem, size = 0x4000, scoped, tag = 'input window, operand 2, single buffered']
    #allocation9 [shape = 'u8[16384]{0}', space=vmem, size = 0x4000, scoped, tag = 'input window, operand 4, single buffered']
    #allocation10 [shape = 's32[1]{0}', space=sflag, size = 0x4, scoped, tag = 'scoped memory for tpu_custom_call.1']
    #allocation11 [shape = 'u8[16384]{0}', space=vmem, size = 0x4000, scoped, tag = 'input window, operand 6, single buffered']
    #allocation12 [shape = 'u8[16384]{0}', space=vmem, size = 0x4000, scoped, tag = 'input window, operand 8, single buffered']
    #allocation13 [shape = 's32[1]{0}', space=sflag, size = 0x4, scoped, tag = 'scoped memory for tpu_custom_call.1']
    #allocation14 [shape = 'u8[16384]{0}', space=vmem, size = 0x4000, scoped, tag = 'output window, operand 0, single buffered']
    %19 = vsyncpa [#allocation4], 0
    %20 = vsyncpa [#allocation7], 0
    %21 = vsyncpa [#allocation10], 0
    %22 = vsyncpa [#allocation13], 0
    %23 = vsyncpa [#allocation5], 0
    // Predicated region
    $region2: #{tpu_custom_call.1} parent=1 // pred_check
      _
    $region3: #{tpu_custom_call.1} parent=1 // pred_check_branch
      %25 = sbr.rel (0) target = $region5
    $region4: #{tpu_custom_call.1} parent=1 // pred_region
      %27 = vsyncadd [#allocation4], 0
      %s28 = sshll.u32 %s0, 4
      %s29 = int_to_ptr.hbm [resolvable:$true] %s28
      %s30 = sshll.u32 [#allocation3], 4
      %s31 = int_to_ptr.vmem [resolvable:$true] %s30
      %36 = dma.hbm_to_vmem [thread:$0]  %s29, 512, %s31, [#allocation4], 128, 128, 8
    $region5: #{tpu_custom_call.1} parent=1 // pred_fallthru
      _
    // Predicated region
    $region6: #{tpu_custom_call.1} parent=1 // pred_check
      _
    $region7: #{tpu_custom_call.1} parent=1 // pred_check_branch
      %38 = sbr.rel (0) target = $region9
    $region8: #{tpu_custom_call.1} parent=1 // pred_region
      %40 = vsyncadd [#allocation7], 0
      %s41 = sshll.u32 %s1, 4
      %s42 = int_to_ptr.hbm [resolvable:$true] %s41
      %s43 = sshll.u32 [#allocation6], 4
      %s44 = int_to_ptr.vmem [resolvable:$true] %s43
      %49 = dma.hbm_to_vmem [thread:$0]  %s42, 512, %s44, [#allocation7], 128, 128, 8
    $region9: #{tpu_custom_call.1} parent=1 // pred_fallthru
      _
    // Predicated region
    $region10: #{tpu_custom_call.1} parent=1 // pred_check
      _
    $region11: #{tpu_custom_call.1} parent=1 // pred_check_branch
      %51 = sbr.rel (0) target = $region13
    $region12: #{tpu_custom_call.1} parent=1 // pred_region
      %53 = vsyncadd [#allocation7], 0
      %s54 = sshll.u32 %s2, 4
      %s55 = int_to_ptr.hbm [resolvable:$true] %s54
      %s56 = sshll.u32 [#allocation8], 4
      %s57 = int_to_ptr.vmem [resolvable:$true] %s56
      %62 = dma.hbm_to_vmem [thread:$0]  %s55, 512, %s57, [#allocation7], 128, 128, 8
    $region13: #{tpu_custom_call.1} parent=1 // pred_fallthru
      _
    // Predicated region
    $region14: #{tpu_custom_call.1} parent=1 // pred_check
      _
    $region15: #{tpu_custom_call.1} parent=1 // pred_check_branch
      %64 = sbr.rel (0) target = $region17
    $region16: #{tpu_custom_call.1} parent=1 // pred_region
      _
    $region17: #{tpu_custom_call.1} parent=1 // pred_fallthru
      _
    // Predicated region
    $region18: #{tpu_custom_call.1} parent=1 // pred_check
      _
    $region19: #{tpu_custom_call.1} parent=1 // pred_check_branch
      %66 = sbr.rel (0) target = $region21
    $region20: #{tpu_custom_call.1} parent=1 // pred_region
      %68 = vsyncadd [#allocation10], 0
      %s69 = sshll.u32 %s4, 4
      %s70 = int_to_ptr.hbm [resolvable:$true] %s69
      %s71 = sshll.u32 [#allocation9], 4
      %s72 = int_to_ptr.vmem [resolvable:$true] %s71
      %77 = dma.hbm_to_vmem [thread:$0]  %s70, 512, %s72, [#allocation10], 128, 128, 8
    $region21: #{tpu_custom_call.1} parent=1 // pred_fallthru
      _
    // Predicated region
    $region22: #{tpu_custom_call.1} parent=1 // pred_check
      _
    $region23: #{tpu_custom_call.1} parent=1 // pred_check_branch
      %79 = sbr.rel (0) target = $region25
    $region24: #{tpu_custom_call.1} parent=1 // pred_region
      _
    $region25: #{tpu_custom_call.1} parent=1 // pred_fallthru
      _
    // Predicated region
    $region26: #{tpu_custom_call.1} parent=1 // pred_check
      _
    $region27: #{tpu_custom_call.1} parent=1 // pred_check_branch
      %81 = sbr.rel (0) target = $region29
    $region28: #{tpu_custom_call.1} parent=1 // pred_region
      %83 = vsyncadd [#allocation10], 0
      %s84 = sshll.u32 %s6, 4
      %s85 = int_to_ptr.hbm [resolvable:$true] %s84
      %s86 = sshll.u32 [#allocation11], 4
      %s87 = int_to_ptr.vmem [resolvable:$true] %s86
      %92 = dma.hbm_to_vmem [thread:$0]  %s85, 512, %s87, [#allocation10], 128, 128, 8
    $region29: #{tpu_custom_call.1} parent=1 // pred_fallthru
      _
    // Predicated region
    $region30: #{tpu_custom_call.1} parent=1 // pred_check
      _
    $region31: #{tpu_custom_call.1} parent=1 // pred_check_branch
      %94 = sbr.rel (0) target = $region33
    $region32: #{tpu_custom_call.1} parent=1 // pred_region
      _
    $region33: #{tpu_custom_call.1} parent=1 // pred_fallthru
      _
    // Predicated region
    $region34: #{tpu_custom_call.1} parent=1 // pred_check
      _
    $region35: #{tpu_custom_call.1} parent=1 // pred_check_branch
      %96 = sbr.rel (0) target = $region37
    $region36: #{tpu_custom_call.1} parent=1 // pred_region
      %98 = vsyncadd [#allocation13], 0
      %s99 = sshll.u32 %s8, 4
      %s100 = int_to_ptr.hbm [resolvable:$true] %s99
      %s101 = sshll.u32 [#allocation12], 4
      %s102 = int_to_ptr.vmem [resolvable:$true] %s101
      %107 = dma.hbm_to_vmem [thread:$0]  %s100, 512, %s102, [#allocation13], 128, 128, 8
    $region37: #{tpu_custom_call.1} parent=1 // pred_fallthru
      _
    // Predicated region
    $region38: #{tpu_custom_call.1} parent=1 // pred_check
      _
    $region39: #{tpu_custom_call.1} parent=1 // pred_check_branch
      %109 = sbr.rel (0) target = $region41
    $region40: #{tpu_custom_call.1} parent=1 // pred_region
      _
    $region41: #{tpu_custom_call.1} parent=1 // pred_fallthru
      _
    // Predicated region
    $region42: #{tpu_custom_call.1} parent=1 // pred_check
      _
    $region43: #{tpu_custom_call.1} parent=1 // pred_check_branch
      %111 = sbr.rel (0) target = $region45
    $region44: #{tpu_custom_call.1} parent=1 // pred_region
      _
    $region45: #{tpu_custom_call.1} parent=1 // pred_fallthru
      _
    // Predicated region
    $region46: #{tpu_custom_call.1} parent=1 // pred_check
      _
    $region47: #{tpu_custom_call.1} parent=1 // pred_check_branch
      %113 = sbr.rel (0) target = $region49
    $region48: #{tpu_custom_call.1} parent=1 // pred_region
      _
    $region49: #{tpu_custom_call.1} parent=1 // pred_fallthru
      _
    // Predicated region
    $region50: #{tpu_custom_call.1} parent=1 // pred_check
      _
    $region51: #{tpu_custom_call.1} parent=1 // pred_check_branch
      %115 = sbr.rel (0) target = $region53
    $region52: #{tpu_custom_call.1} parent=1 // pred_region
      _
    $region53: #{tpu_custom_call.1} parent=1 // pred_fallthru
      _
    // Predicated region
    $region54: #{tpu_custom_call.1} parent=1 // pred_check
      _
    $region55: #{tpu_custom_call.1} parent=1 // pred_check_branch
      %117 = sbr.rel (0) target = $region57
    $region56: #{tpu_custom_call.1} parent=1 // pred_region
      _
    $region57: #{tpu_custom_call.1} parent=1 // pred_fallthru
      _
    // Predicated region
    $region58: #{tpu_custom_call.1} parent=1 // pred_check
      _
    $region59: #{tpu_custom_call.1} parent=1 // pred_check_branch
      %119 = sbr.rel (0) target = $region61
    $region60: #{tpu_custom_call.1} parent=1 // pred_region
      %121 = dma.done [#allocation4], 512
    $region61: #{tpu_custom_call.1} parent=1 // pred_fallthru
      _
    // Predicated region
    $region62: #{tpu_custom_call.1} parent=1 // pred_check
      _
    $region63: #{tpu_custom_call.1} parent=1 // pred_check_branch
      %123 = sbr.rel (0) target = $region65
    $region64: #{tpu_custom_call.1} parent=1 // pred_region
      %125 = dma.done [#allocation7], 512
    $region65: #{tpu_custom_call.1} parent=1 // pred_fallthru
      _
    // Predicated region
    $region66: #{tpu_custom_call.1} parent=1 // pred_check
      _
    $region67: #{tpu_custom_call.1} parent=1 // pred_check_branch
      %127 = sbr.rel (0) target = $region69
    $region68: #{tpu_custom_call.1} parent=1 // pred_region
      %129 = dma.done [#allocation7], 512
    $region69: #{tpu_custom_call.1} parent=1 // pred_fallthru
      _
    // Predicated region
    $region70: #{tpu_custom_call.1} parent=1 // pred_check
      _
    $region71: #{tpu_custom_call.1} parent=1 // pred_check_branch
      %131 = sbr.rel (0) target = $region73
    $region72: #{tpu_custom_call.1} parent=1 // pred_region
      %133 = dma.done [#allocation10], 512
    $region73: #{tpu_custom_call.1} parent=1 // pred_fallthru
      _
    // Predicated region
    $region74: #{tpu_custom_call.1} parent=1 // pred_check
      _
    $region75: #{tpu_custom_call.1} parent=1 // pred_check_branch
      %135 = sbr.rel (0) target = $region77
    $region76: #{tpu_custom_call.1} parent=1 // pred_region
      %137 = dma.done [#allocation10], 512
    $region77: #{tpu_custom_call.1} parent=1 // pred_fallthru
      _
    // Predicated region
    $region78: #{tpu_custom_call.1} parent=1 // pred_check
      _
    $region79: #{tpu_custom_call.1} parent=1 // pred_check_branch
      %139 = sbr.rel (0) target = $region81
    $region80: #{tpu_custom_call.1} parent=1 // pred_region
      %141 = dma.done [#allocation13], 512
    $region81: #{tpu_custom_call.1} parent=1 // pred_fallthru
      _
    %v142 = vld [vmem:[#allocation3] sm:$0xff]
    %v143 = vld [vmem:[#allocation3 + $0x8] sm:$0xff]
    %v144 = vld [vmem:[#allocation3 + $0x10] sm:$0xff]
    %v145 = vld [vmem:[#allocation3 + $0x18] sm:$0xff]
    %v146 = vld [vmem:[#allocation6] sm:$0xff]
    %v147 = vld [vmem:[#allocation6 + $0x8] sm:$0xff]
    %v148 = vld [vmem:[#allocation6 + $0x10] sm:$0xff]
    %v149 = vld [vmem:[#allocation6 + $0x18] sm:$0xff]
    %v150 = vld [vmem:[#allocation8] sm:$0xff]
    %v151 = vld [vmem:[#allocation8 + $0x8] sm:$0xff]
    %v152 = vld [vmem:[#allocation8 + $0x10] sm:$0xff]
    %v153 = vld [vmem:[#allocation8 + $0x18] sm:$0xff]
    %v154 = vld [vmem:[%s3] sm:$0x1]
    %v156 = vperm.slane %v154, 0
    %vm158 = vcmask 261120
    %v160 = vsel %vm158, %v142, 0
    %v163 = vsel %vm158, %v143, 0
    %v166 = vsel %vm158, %v144, 0
    %v169 = vsel %vm158, %v145, 0
    %171 = vmatpush.msra.mxu0 0.0
    %172 = vmatpush.msra.mxu0 0.0
    %173 = vmatpush.msra.mxu0 0.0
    %174 = vmatpush.msra.mxu0 0.0
    %175 = vmatpush.msra.mxu0 0.0
    %176 = vmatpush.msra.mxu0 0.0
    %177 = vmatpush.msra.mxu0 0.0
    %178 = vmatpush.msra.mxu0 0.0
    %179 = vmatpush.msra.mxu0 0.0
    %180 = vmatpush.msra.mxu0 0.0
    %181 = vmatpush.msra.mxu0 0.0
    %182 = vmatpush.msra.mxu0 0.0
    %183 = vmatpush.msra.mxu0 %v153
    %184 = vmatpush.msra.mxu0 %v152
    %185 = vmatpush.msra.mxu0 %v151
    %186 = vmatpush.msra.mxu0 %v150
    %187 = vmatmul.f32.gmra.mxu0 %v160
    %v188 = vpop.f32.mrf.mxu0
    %v189 = vadd.f32 %v156, %v188
    %190 = vmatmul.f32.gmra.mxu0 %v163
    %v191 = vpop.f32.mrf.mxu0
    %v192 = vadd.f32 %v156, %v191
    %193 = vmatmul.f32.gmra.mxu0 %v166
    %v194 = vpop.f32.mrf.mxu0
    %v195 = vadd.f32 %v156, %v194
    %196 = vmatmul.f32.gmra.mxu0 %v169
    %v197 = vpop.f32.mrf.mxu0
    %v198 = vadd.f32 %v156, %v197
    %199 = vdwg.mxu0
    %v200 = vld [vmem:[#allocation9] sm:$0xff]
    %v201 = vld [vmem:[#allocation9 + $0x8] sm:$0xff]
    %v202 = vld [vmem:[#allocation9 + $0x10] sm:$0xff]
    %v203 = vld [vmem:[#allocation9 + $0x18] sm:$0xff]
    %v204 = vld [vmem:[%s5] sm:$0x1]
    %v206 = vperm.slane %v204, 0
    %v209 = vsel %vm158, %v146, 0
    %v212 = vsel %vm158, %v147, 0
    %v215 = vsel %vm158, %v148, 0
    %v218 = vsel %vm158, %v149, 0
    %220 = vmatpush.msra.mxu0 0.0
    %221 = vmatpush.msra.mxu0 0.0
    %222 = vmatpush.msra.mxu0 0.0
    %223 = vmatpush.msra.mxu0 0.0
    %224 = vmatpush.msra.mxu0 0.0
    %225 = vmatpush.msra.mxu0 0.0
    %226 = vmatpush.msra.mxu0 0.0
    %227 = vmatpush.msra.mxu0 0.0
    %228 = vmatpush.msra.mxu0 0.0
    %229 = vmatpush.msra.mxu0 0.0
    %230 = vmatpush.msra.mxu0 0.0
    %231 = vmatpush.msra.mxu0 0.0
    %232 = vmatpush.msra.mxu0 %v203
    %233 = vmatpush.msra.mxu0 %v202
    %234 = vmatpush.msra.mxu0 %v201
    %235 = vmatpush.msra.mxu0 %v200
    %236 = vmatmul.f32.gmra.mxu0 %v209
    %v237 = vpop.f32.mrf.mxu0
    %v238 = vadd.f32 %v206, %v237
    %239 = vmatmul.f32.gmra.mxu0 %v212
    %v240 = vpop.f32.mrf.mxu0
    %v241 = vadd.f32 %v206, %v240
    %242 = vmatmul.f32.gmra.mxu0 %v215
    %v243 = vpop.f32.mrf.mxu0
    %v244 = vadd.f32 %v206, %v243
    %245 = vmatmul.f32.gmra.mxu0 %v218
    %v246 = vpop.f32.mrf.mxu0
    %v247 = vadd.f32 %v206, %v246
    %248 = vdwg.mxu0
    %vm249 = vcmask 64512
    %v251 = vsel %vm249, %v189, 0
    %v254 = vsel %vm249, %v238, 0
    %256 = vmatpush.xpose.msra.mxu0 0.0
    %257 = vmatpush.xpose.msra.mxu0 0.0
    %258 = vmatpush.xpose.msra.mxu0 0.0
    %259 = vmatpush.xpose.msra.mxu0 0.0
    %260 = vmatpush.xpose.msra.mxu0 0.0
    %261 = vmatpush.xpose.msra.mxu0 0.0
    %262 = vmatpush.xpose.msra.mxu0 0.0
    %263 = vmatpush.xpose.msra.mxu0 0.0
    %264 = vmatpush.xpose.msra.mxu0 0.0
    %265 = vmatpush.xpose.msra.mxu0 0.0
    %266 = vmatpush.xpose.msra.mxu0 0.0
    %267 = vmatpush.xpose.msra.mxu0 0.0
    %268 = vmatpush.xpose.msra.mxu0 0.0
    %269 = vmatpush.xpose.msra.mxu0 0.0
    %270 = vmatpush.xpose.msra.mxu0 0.0
    %271 = vmatpush.xpose.msra.mxu0 %v254
    %272 = vmatmul.f32.gmra.mxu0 %v251
    %v273 = vpop.f32.mrf.mxu0
    %v274 = vadd.f32 0.0, %v273
    %275 = vdwg.mxu0
    %v277 = vsel %vm249, %v192, 0
    %v280 = vsel %vm249, %v241, 0
    %282 = vmatpush.xpose.msra.mxu0 0.0
    %283 = vmatpush.xpose.msra.mxu0 0.0
    %284 = vmatpush.xpose.msra.mxu0 0.0
    %285 = vmatpush.xpose.msra.mxu0 0.0
    %286 = vmatpush.xpose.msra.mxu0 0.0
    %287 = vmatpush.xpose.msra.mxu0 0.0
    %288 = vmatpush.xpose.msra.mxu0 0.0
    %289 = vmatpush.xpose.msra.mxu0 0.0
    %290 = vmatpush.xpose.msra.mxu0 0.0
    %291 = vmatpush.xpose.msra.mxu0 0.0
    %292 = vmatpush.xpose.msra.mxu0 0.0
    %293 = vmatpush.xpose.msra.mxu0 0.0
    %294 = vmatpush.xpose.msra.mxu0 0.0
    %295 = vmatpush.xpose.msra.mxu0 0.0
    %296 = vmatpush.xpose.msra.mxu0 0.0
    %297 = vmatpush.xpose.msra.mxu0 %v280
    %298 = vmatmul.f32.gmra.mxu0 %v277
    %v299 = vpop.f32.mrf.mxu0
    %v300 = vadd.f32 0.0, %v299
    %301 = vdwg.mxu0
    %v303 = vsel %vm249, %v195, 0
    %v306 = vsel %vm249, %v244, 0
    %308 = vmatpush.xpose.msra.mxu0 0.0
    %309 = vmatpush.xpose.msra.mxu0 0.0
    %310 = vmatpush.xpose.msra.mxu0 0.0
    %311 = vmatpush.xpose.msra.mxu0 0.0
    %312 = vmatpush.xpose.msra.mxu0 0.0
    %313 = vmatpush.xpose.msra.mxu0 0.0
    %314 = vmatpush.xpose.msra.mxu0 0.0
    %315 = vmatpush.xpose.msra.mxu0 0.0
    %316 = vmatpush.xpose.msra.mxu0 0.0
    %317 = vmatpush.xpose.msra.mxu0 0.0
    %318 = vmatpush.xpose.msra.mxu0 0.0
    %319 = vmatpush.xpose.msra.mxu0 0.0
    %320 = vmatpush.xpose.msra.mxu0 0.0
    %321 = vmatpush.xpose.msra.mxu0 0.0
    %322 = vmatpush.xpose.msra.mxu0 0.0
    %323 = vmatpush.xpose.msra.mxu0 %v306
    %324 = vmatmul.f32.gmra.mxu0 %v303
    %v325 = vpop.f32.mrf.mxu0
    %v326 = vadd.f32 0.0, %v325
    %327 = vdwg.mxu0
    %v329 = vsel %vm249, %v198, 0
    %v332 = vsel %vm249, %v247, 0
    %334 = vmatpush.xpose.msra.mxu0 0.0
    %335 = vmatpush.xpose.msra.mxu0 0.0
    %336 = vmatpush.xpose.msra.mxu0 0.0
    %337 = vmatpush.xpose.msra.mxu0 0.0
    %338 = vmatpush.xpose.msra.mxu0 0.0
    %339 = vmatpush.xpose.msra.mxu0 0.0
    %340 = vmatpush.xpose.msra.mxu0 0.0
    %341 = vmatpush.xpose.msra.mxu0 0.0
    %342 = vmatpush.xpose.msra.mxu0 0.0
    %343 = vmatpush.xpose.msra.mxu0 0.0
    %344 = vmatpush.xpose.msra.mxu0 0.0
    %345 = vmatpush.xpose.msra.mxu0 0.0
    %346 = vmatpush.xpose.msra.mxu0 0.0
    %347 = vmatpush.xpose.msra.mxu0 0.0
    %348 = vmatpush.xpose.msra.mxu0 0.0
    %349 = vmatpush.xpose.msra.mxu0 %v332
    %350 = vmatmul.f32.gmra.mxu0 %v329
    %v351 = vpop.f32.mrf.mxu0
    %v352 = vadd.f32 0.0, %v351
    %353 = vdwg.mxu0
    %v354 = vsel %vm249, %v274, -inf
    %355 = vmax.xlane.f32.xlu0 %v354
    %v356 = vpop.xlane.xlu0 %355
    %v357 = vsel %vm249, %v300, -inf
    %358 = vmax.xlane.f32.xlu0 %v357
    %v359 = vpop.xlane.xlu0 %358
    %v360 = vsel %vm249, %v326, -inf
    %361 = vmax.xlane.f32.xlu0 %v360
    %v362 = vpop.xlane.xlu0 %361
    %v363 = vsel %vm249, %v352, -inf
    %364 = vmax.xlane.f32.xlu0 %v363
    %v365 = vpop.xlane.xlu0 %364
    %v366 = vsub.f32 %v274, %v356
    %v367 = vsub.f32 %v300, %v359
    %v368 = vsub.f32 %v326, %v362
    %v369 = vsub.f32 %v352, %v365
    %v370 = vmul.f32 %v366, 1.442695
    %v371 = vpow.pop %v370
    %v372 = vmul.f32 %v367, 1.442695
    %v373 = vpow.pop %v372
    %v374 = vmul.f32 %v368, 1.442695
    %v375 = vpow.pop %v374
    %v376 = vmul.f32 %v369, 1.442695
    %v377 = vpow.pop %v376
    %v378 = vsel %vm249, %v371, 0.0
    %379 = vadd.xlane.f32.xlu0 %v378
    %v380 = vpop.xlane.xlu0 %379
    %v381 = vsel %vm249, %v373, 0.0
    %382 = vadd.xlane.f32.xlu0 %v381
    %v383 = vpop.xlane.xlu0 %382
    %v384 = vsel %vm249, %v375, 0.0
    %385 = vadd.xlane.f32.xlu0 %v384
    %v386 = vpop.xlane.xlu0 %385
    %v387 = vsel %vm249, %v377, 0.0
    %388 = vadd.xlane.f32.xlu0 %v387
    %v389 = vpop.xlane.xlu0 %388
    %v390 = vrcp.pop %v380
    %v391 = vmul.f32 %v380, %v390
    %v392 = vsub.f32 1.0, %v391
    %v393 = vmul.f32 %v390, %v392
    %v394 = vadd.f32 %v390, %v393
    %vm395 = vweird.f32 %v380
    %vm396 = vweird.f32 %v390
    %vm397 = vmor %vm395, %vm396
    %v398 = vsel %vm397, %v390, %v394
    %v399 = vand.u32 2147483647, %v380
    %vm400 = vcmp.eq.f32.partialorder %v399, 8.507059e+37
    %v401 = vand.u32 %v380, 2147483648
    %v402 = vor.u32 1.1754944e-38, %v401
    %v403 = vsel %vm400, %v402, %v398
    %v404 = vrcp.pop %v383
    %v405 = vmul.f32 %v383, %v404
    %v406 = vsub.f32 1.0, %v405
    %v407 = vmul.f32 %v404, %v406
    %v408 = vadd.f32 %v404, %v407
    %vm409 = vweird.f32 %v383
    %vm410 = vweird.f32 %v404
    %vm411 = vmor %vm409, %vm410
    %v412 = vsel %vm411, %v404, %v408
    %v413 = vand.u32 2147483647, %v383
    %vm414 = vcmp.eq.f32.partialorder %v413, 8.507059e+37
    %v415 = vand.u32 %v383, 2147483648
    %v416 = vor.u32 1.1754944e-38, %v415
    %v417 = vsel %vm414, %v416, %v412
    %v418 = vrcp.pop %v386
    %v419 = vmul.f32 %v386, %v418
    %v420 = vsub.f32 1.0, %v419
    %v421 = vmul.f32 %v418, %v420
    %v422 = vadd.f32 %v418, %v421
    %vm423 = vweird.f32 %v386
    %vm424 = vweird.f32 %v418
    %vm425 = vmor %vm423, %vm424
    %v426 = vsel %vm425, %v418, %v422
    %v427 = vand.u32 2147483647, %v386
    %vm428 = vcmp.eq.f32.partialorder %v427, 8.507059e+37
    %v429 = vand.u32 %v386, 2147483648
    %v430 = vor.u32 1.1754944e-38, %v429
    %v431 = vsel %vm428, %v430, %v426
    %v432 = vrcp.pop %v389
    %v433 = vmul.f32 %v389, %v432
    %v434 = vsub.f32 1.0, %v433
    %v435 = vmul.f32 %v432, %v434
    %v436 = vadd.f32 %v432, %v435
    %vm437 = vweird.f32 %v389
    %vm438 = vweird.f32 %v432
    %vm439 = vmor %vm437, %vm438
    %v440 = vsel %vm439, %v432, %v436
    %v441 = vand.u32 2147483647, %v389
    %vm442 = vcmp.eq.f32.partialorder %v441, 8.507059e+37
    %v443 = vand.u32 %v389, 2147483648
    %v444 = vor.u32 1.1754944e-38, %v443
    %v445 = vsel %vm442, %v444, %v440
    %v446 = vmul.f32 %v371, %v403
    %v447 = vmul.f32 %v373, %v417
    %v448 = vmul.f32 %v375, %v431
    %v449 = vmul.f32 %v377, %v445
    %450 = vrot.lane.b32.xlu0 %v238, 96
    %v451 = vpop.permute.xlu0 %450
    %v454 = vsel %vm249, %v446, 0
    %456 = vmatpush.msra.mxu0 0.0
    %457 = vmatpush.msra.mxu0 0.0
    %458 = vmatpush.msra.mxu0 0.0
    %459 = vmatpush.msra.mxu0 0.0
    %460 = vmatpush.msra.mxu0 0.0
    %461 = vmatpush.msra.mxu0 0.0
    %462 = vmatpush.msra.mxu0 0.0
    %463 = vmatpush.msra.mxu0 0.0
    %464 = vmatpush.msra.mxu0 0.0
    %465 = vmatpush.msra.mxu0 0.0
    %466 = vmatpush.msra.mxu0 0.0
    %467 = vmatpush.msra.mxu0 0.0
    %468 = vmatpush.msra.mxu0 0.0
    %469 = vmatpush.msra.mxu0 0.0
    %470 = vmatpush.msra.mxu0 0.0
    %471 = vmatpush.msra.mxu0 %v451
    %472 = vmatmul.f32.gmra.mxu0 %v454
    %v473 = vpop.f32.mrf.mxu0
    %v474 = vadd.f32 0.0, %v473
    %475 = vdwg.mxu0
    %476 = vrot.lane.b32.xlu0 %v241, 96
    %v477 = vpop.permute.xlu0 %476
    %v480 = vsel %vm249, %v447, 0
    %482 = vmatpush.msra.mxu0 0.0
    %483 = vmatpush.msra.mxu0 0.0
    %484 = vmatpush.msra.mxu0 0.0
    %485 = vmatpush.msra.mxu0 0.0
    %486 = vmatpush.msra.mxu0 0.0
    %487 = vmatpush.msra.mxu0 0.0
    %488 = vmatpush.msra.mxu0 0.0
    %489 = vmatpush.msra.mxu0 0.0
    %490 = vmatpush.msra.mxu0 0.0
    %491 = vmatpush.msra.mxu0 0.0
    %492 = vmatpush.msra.mxu0 0.0
    %493 = vmatpush.msra.mxu0 0.0
    %494 = vmatpush.msra.mxu0 0.0
    %495 = vmatpush.msra.mxu0 0.0
    %496 = vmatpush.msra.mxu0 0.0
    %497 = vmatpush.msra.mxu0 %v477
    %498 = vmatmul.f32.gmra.mxu0 %v480
    %v499 = vpop.f32.mrf.mxu0
    %v500 = vadd.f32 0.0, %v499
    %501 = vdwg.mxu0
    %502 = vrot.lane.b32.xlu0 %v244, 96
    %v503 = vpop.permute.xlu0 %502
    %v506 = vsel %vm249, %v448, 0
    %508 = vmatpush.msra.mxu0 0.0
    %509 = vmatpush.msra.mxu0 0.0
    %510 = vmatpush.msra.mxu0 0.0
    %511 = vmatpush.msra.mxu0 0.0
    %512 = vmatpush.msra.mxu0 0.0
    %513 = vmatpush.msra.mxu0 0.0
    %514 = vmatpush.msra.mxu0 0.0
    %515 = vmatpush.msra.mxu0 0.0
    %516 = vmatpush.msra.mxu0 0.0
    %517 = vmatpush.msra.mxu0 0.0
    %518 = vmatpush.msra.mxu0 0.0
    %519 = vmatpush.msra.mxu0 0.0
    %520 = vmatpush.msra.mxu0 0.0
    %521 = vmatpush.msra.mxu0 0.0
    %522 = vmatpush.msra.mxu0 0.0
    %523 = vmatpush.msra.mxu0 %v503
    %524 = vmatmul.f32.gmra.mxu0 %v506
    %v525 = vpop.f32.mrf.mxu0
    %v526 = vadd.f32 0.0, %v525
    %527 = vdwg.mxu0
    %528 = vrot.lane.b32.xlu0 %v247, 96
    %v529 = vpop.permute.xlu0 %528
    %v532 = vsel %vm249, %v449, 0
    %534 = vmatpush.msra.mxu0 0.0
    %535 = vmatpush.msra.mxu0 0.0
    %536 = vmatpush.msra.mxu0 0.0
    %537 = vmatpush.msra.mxu0 0.0
    %538 = vmatpush.msra.mxu0 0.0
    %539 = vmatpush.msra.mxu0 0.0
    %540 = vmatpush.msra.mxu0 0.0
    %541 = vmatpush.msra.mxu0 0.0
    %542 = vmatpush.msra.mxu0 0.0
    %543 = vmatpush.msra.mxu0 0.0
    %544 = vmatpush.msra.mxu0 0.0
    %545 = vmatpush.msra.mxu0 0.0
    %546 = vmatpush.msra.mxu0 0.0
    %547 = vmatpush.msra.mxu0 0.0
    %548 = vmatpush.msra.mxu0 0.0
    %549 = vmatpush.msra.mxu0 %v529
    %550 = vmatmul.f32.gmra.mxu0 %v532
    %v551 = vpop.f32.mrf.mxu0
    %v552 = vadd.f32 0.0, %v551
    %553 = vdwg.mxu0
    %554 = vst.msk [vmem:[#allocation2] sm:$0xff] %vm249, %v474
    %555 = vst.msk [vmem:[#allocation2 + $0x8] sm:$0xff] %vm249, %v500
    %556 = vst.msk [vmem:[#allocation2 + $0x10] sm:$0xff] %vm249, %v526
    %557 = vst.msk [vmem:[#allocation2 + $0x18] sm:$0xff] %vm249, %v552
    %558 = vrot.lane.b32.xlu0 %v189, 120
    %v559 = vpop.permute.xlu0 %558
    %560 = vrot.lane.b32.xlu0 %v238, 120
    %v561 = vpop.permute.xlu0 %560
    %v562 = vsel %vm249, %v559, 0
    %v564 = vsel %vm249, %v561, 0
    %566 = vmatpush.xpose.msra.mxu0 0.0
    %567 = vmatpush.xpose.msra.mxu0 0.0
    %568 = vmatpush.xpose.msra.mxu0 0.0
    %569 = vmatpush.xpose.msra.mxu0 0.0
    %570 = vmatpush.xpose.msra.mxu0 0.0
    %571 = vmatpush.xpose.msra.mxu0 0.0
    %572 = vmatpush.xpose.msra.mxu0 0.0
    %573 = vmatpush.xpose.msra.mxu0 0.0
    %574 = vmatpush.xpose.msra.mxu0 0.0
    %575 = vmatpush.xpose.msra.mxu0 0.0
    %576 = vmatpush.xpose.msra.mxu0 0.0
    %577 = vmatpush.xpose.msra.mxu0 0.0
    %578 = vmatpush.xpose.msra.mxu0 0.0
    %579 = vmatpush.xpose.msra.mxu0 0.0
    %580 = vmatpush.xpose.msra.mxu0 0.0
    %581 = vmatpush.xpose.msra.mxu0 %v564
    %582 = vmatmul.f32.gmra.mxu0 %v562
    %v583 = vpop.f32.mrf.mxu0
    %v584 = vadd.f32 0.0, %v583
    %585 = vdwg.mxu0
    %586 = vrot.lane.b32.xlu0 %v192, 120
    %v587 = vpop.permute.xlu0 %586
    %588 = vrot.lane.b32.xlu0 %v241, 120
    %v589 = vpop.permute.xlu0 %588
    %v590 = vsel %vm249, %v587, 0
    %v592 = vsel %vm249, %v589, 0
    %594 = vmatpush.xpose.msra.mxu0 0.0
    %595 = vmatpush.xpose.msra.mxu0 0.0
    %596 = vmatpush.xpose.msra.mxu0 0.0
    %597 = vmatpush.xpose.msra.mxu0 0.0
    %598 = vmatpush.xpose.msra.mxu0 0.0
    %599 = vmatpush.xpose.msra.mxu0 0.0
    %600 = vmatpush.xpose.msra.mxu0 0.0
    %601 = vmatpush.xpose.msra.mxu0 0.0
    %602 = vmatpush.xpose.msra.mxu0 0.0
    %603 = vmatpush.xpose.msra.mxu0 0.0
    %604 = vmatpush.xpose.msra.mxu0 0.0
    %605 = vmatpush.xpose.msra.mxu0 0.0
    %606 = vmatpush.xpose.msra.mxu0 0.0
    %607 = vmatpush.xpose.msra.mxu0 0.0
    %608 = vmatpush.xpose.msra.mxu0 0.0
    %609 = vmatpush.xpose.msra.mxu0 %v592
    %610 = vmatmul.f32.gmra.mxu0 %v590
    %v611 = vpop.f32.mrf.mxu0
    %v612 = vadd.f32 0.0, %v611
    %613 = vdwg.mxu0
    %614 = vrot.lane.b32.xlu0 %v195, 120
    %v615 = vpop.permute.xlu0 %614
    %616 = vrot.lane.b32.xlu0 %v244, 120
    %v617 = vpop.permute.xlu0 %616
    %v618 = vsel %vm249, %v615, 0
    %v620 = vsel %vm249, %v617, 0
    %622 = vmatpush.xpose.msra.mxu0 0.0
    %623 = vmatpush.xpose.msra.mxu0 0.0
    %624 = vmatpush.xpose.msra.mxu0 0.0
    %625 = vmatpush.xpose.msra.mxu0 0.0
    %626 = vmatpush.xpose.msra.mxu0 0.0
    %627 = vmatpush.xpose.msra.mxu0 0.0
    %628 = vmatpush.xpose.msra.mxu0 0.0
    %629 = vmatpush.xpose.msra.mxu0 0.0
    %630 = vmatpush.xpose.msra.mxu0 0.0
    %631 = vmatpush.xpose.msra.mxu0 0.0
    %632 = vmatpush.xpose.msra.mxu0 0.0
    %633 = vmatpush.xpose.msra.mxu0 0.0
    %634 = vmatpush.xpose.msra.mxu0 0.0
    %635 = vmatpush.xpose.msra.mxu0 0.0
    %636 = vmatpush.xpose.msra.mxu0 0.0
    %637 = vmatpush.xpose.msra.mxu0 %v620
    %638 = vmatmul.f32.gmra.mxu0 %v618
    %v639 = vpop.f32.mrf.mxu0
    %v640 = vadd.f32 0.0, %v639
    %641 = vdwg.mxu0
    %642 = vrot.lane.b32.xlu0 %v198, 120
    %v643 = vpop.permute.xlu0 %642
    %644 = vrot.lane.b32.xlu0 %v247, 120
    %v645 = vpop.permute.xlu0 %644
    %v646 = vsel %vm249, %v643, 0
    %v648 = vsel %vm249, %v645, 0
    %650 = vmatpush.xpose.msra.mxu0 0.0
    %651 = vmatpush.xpose.msra.mxu0 0.0
    %652 = vmatpush.xpose.msra.mxu0 0.0
    %653 = vmatpush.xpose.msra.mxu0 0.0
    %654 = vmatpush.xpose.msra.mxu0 0.0
    %655 = vmatpush.xpose.msra.mxu0 0.0
    %656 = vmatpush.xpose.msra.mxu0 0.0
    %657 = vmatpush.xpose.msra.mxu0 0.0
    %658 = vmatpush.xpose.msra.mxu0 0.0
    %659 = vmatpush.xpose.msra.mxu0 0.0
    %660 = vmatpush.xpose.msra.mxu0 0.0
    %661 = vmatpush.xpose.msra.mxu0 0.0
    %662 = vmatpush.xpose.msra.mxu0 0.0
    %663 = vmatpush.xpose.msra.mxu0 0.0
    %664 = vmatpush.xpose.msra.mxu0 0.0
    %665 = vmatpush.xpose.msra.mxu0 %v648
    %666 = vmatmul.f32.gmra.mxu0 %v646
    %v667 = vpop.f32.mrf.mxu0
    %v668 = vadd.f32 0.0, %v667
    %669 = vdwg.mxu0
    %v670 = vsel %vm249, %v584, -inf
    %671 = vmax.xlane.f32.xlu0 %v670
    %v672 = vpop.xlane.xlu0 %671
    %v673 = vsel %vm249, %v612, -inf
    %674 = vmax.xlane.f32.xlu0 %v673
    %v675 = vpop.xlane.xlu0 %674
    %v676 = vsel %vm249, %v640, -inf
    %677 = vmax.xlane.f32.xlu0 %v676
    %v678 = vpop.xlane.xlu0 %677
    %v679 = vsel %vm249, %v668, -inf
    %680 = vmax.xlane.f32.xlu0 %v679
    %v681 = vpop.xlane.xlu0 %680
    %v682 = vsub.f32 %v584, %v672
    %v683 = vsub.f32 %v612, %v675
    %v684 = vsub.f32 %v640, %v678
    %v685 = vsub.f32 %v668, %v681
    %v686 = vmul.f32 %v682, 1.442695
    %v687 = vpow.pop %v686
    %v688 = vmul.f32 %v683, 1.442695
    %v689 = vpow.pop %v688
    %v690 = vmul.f32 %v684, 1.442695
    %v691 = vpow.pop %v690
    %v692 = vmul.f32 %v685, 1.442695
    %v693 = vpow.pop %v692
    %v694 = vsel %vm249, %v687, 0.0
    %695 = vadd.xlane.f32.xlu0 %v694
    %v696 = vpop.xlane.xlu0 %695
    %v697 = vsel %vm249, %v689, 0.0
    %698 = vadd.xlane.f32.xlu0 %v697
    %v699 = vpop.xlane.xlu0 %698
    %v700 = vsel %vm249, %v691, 0.0
    %701 = vadd.xlane.f32.xlu0 %v700
    %v702 = vpop.xlane.xlu0 %701
    %v703 = vsel %vm249, %v693, 0.0
    %704 = vadd.xlane.f32.xlu0 %v703
    %v705 = vpop.xlane.xlu0 %704
    %v706 = vrcp.pop %v696
    %v707 = vmul.f32 %v696, %v706
    %v708 = vsub.f32 1.0, %v707
    %v709 = vmul.f32 %v706, %v708
    %v710 = vadd.f32 %v706, %v709
    %vm711 = vweird.f32 %v696
    %vm712 = vweird.f32 %v706
    %vm713 = vmor %vm711, %vm712
    %v714 = vsel %vm713, %v706, %v710
    %v715 = vand.u32 2147483647, %v696
    %vm716 = vcmp.eq.f32.partialorder %v715, 8.507059e+37
    %v717 = vand.u32 %v696, 2147483648
    %v718 = vor.u32 1.1754944e-38, %v717
    %v719 = vsel %vm716, %v718, %v714
    %v720 = vrcp.pop %v699
    %v721 = vmul.f32 %v699, %v720
    %v722 = vsub.f32 1.0, %v721
    %v723 = vmul.f32 %v720, %v722
    %v724 = vadd.f32 %v720, %v723
    %vm725 = vweird.f32 %v699
    %vm726 = vweird.f32 %v720
    %vm727 = vmor %vm725, %vm726
    %v728 = vsel %vm727, %v720, %v724
    %v729 = vand.u32 2147483647, %v699
    %vm730 = vcmp.eq.f32.partialorder %v729, 8.507059e+37
    %v731 = vand.u32 %v699, 2147483648
    %v732 = vor.u32 1.1754944e-38, %v731
    %v733 = vsel %vm730, %v732, %v728
    %v734 = vrcp.pop %v702
    %v735 = vmul.f32 %v702, %v734
    %v736 = vsub.f32 1.0, %v735
    %v737 = vmul.f32 %v734, %v736
    %v738 = vadd.f32 %v734, %v737
    %vm739 = vweird.f32 %v702
    %vm740 = vweird.f32 %v734
    %vm741 = vmor %vm739, %vm740
    %v742 = vsel %vm741, %v734, %v738
    %v743 = vand.u32 2147483647, %v702
    %vm744 = vcmp.eq.f32.partialorder %v743, 8.507059e+37
    %v745 = vand.u32 %v702, 2147483648
    %v746 = vor.u32 1.1754944e-38, %v745
    %v747 = vsel %vm744, %v746, %v742
    %v748 = vrcp.pop %v705
    %v749 = vmul.f32 %v705, %v748
    %v750 = vsub.f32 1.0, %v749
    %v751 = vmul.f32 %v748, %v750
    %v752 = vadd.f32 %v748, %v751
    %vm753 = vweird.f32 %v705
    %vm754 = vweird.f32 %v748
    %vm755 = vmor %vm753, %vm754
    %v756 = vsel %vm755, %v748, %v752
    %v757 = vand.u32 2147483647, %v705
    %vm758 = vcmp.eq.f32.partialorder %v757, 8.507059e+37
    %v759 = vand.u32 %v705, 2147483648
    %v760 = vor.u32 1.1754944e-38, %v759
    %v761 = vsel %vm758, %v760, %v756
    %v762 = vmul.f32 %v687, %v719
    %v763 = vmul.f32 %v689, %v733
    %v764 = vmul.f32 %v691, %v747
    %v765 = vmul.f32 %v693, %v761
    %766 = vrot.lane.b32.xlu0 %v238, 88
    %v767 = vpop.permute.xlu0 %766
    %v770 = vsel %vm249, %v762, 0
    %772 = vmatpush.msra.mxu0 0.0
    %773 = vmatpush.msra.mxu0 0.0
    %774 = vmatpush.msra.mxu0 0.0
    %775 = vmatpush.msra.mxu0 0.0
    %776 = vmatpush.msra.mxu0 0.0
    %777 = vmatpush.msra.mxu0 0.0
    %778 = vmatpush.msra.mxu0 0.0
    %779 = vmatpush.msra.mxu0 0.0
    %780 = vmatpush.msra.mxu0 0.0
    %781 = vmatpush.msra.mxu0 0.0
    %782 = vmatpush.msra.mxu0 0.0
    %783 = vmatpush.msra.mxu0 0.0
    %784 = vmatpush.msra.mxu0 0.0
    %785 = vmatpush.msra.mxu0 0.0
    %786 = vmatpush.msra.mxu0 0.0
    %787 = vmatpush.msra.mxu0 %v767
    %788 = vmatmul.f32.gmra.mxu0 %v770
    %v789 = vpop.f32.mrf.mxu0
    %v790 = vadd.f32 0.0, %v789
    %791 = vdwg.mxu0
    %792 = vrot.lane.b32.xlu0 %v241, 88
    %v793 = vpop.permute.xlu0 %792
    %v796 = vsel %vm249, %v763, 0
    %798 = vmatpush.msra.mxu0 0.0
    %799 = vmatpush.msra.mxu0 0.0
    %800 = vmatpush.msra.mxu0 0.0
    %801 = vmatpush.msra.mxu0 0.0
    %802 = vmatpush.msra.mxu0 0.0
    %803 = vmatpush.msra.mxu0 0.0
    %804 = vmatpush.msra.mxu0 0.0
    %805 = vmatpush.msra.mxu0 0.0
    %806 = vmatpush.msra.mxu0 0.0
    %807 = vmatpush.msra.mxu0 0.0
    %808 = vmatpush.msra.mxu0 0.0
    %809 = vmatpush.msra.mxu0 0.0
    %810 = vmatpush.msra.mxu0 0.0
    %811 = vmatpush.msra.mxu0 0.0
    %812 = vmatpush.msra.mxu0 0.0
    %813 = vmatpush.msra.mxu0 %v793
    %814 = vmatmul.f32.gmra.mxu0 %v796
    %v815 = vpop.f32.mrf.mxu0
    %v816 = vadd.f32 0.0, %v815
    %817 = vdwg.mxu0
    %818 = vrot.lane.b32.xlu0 %v244, 88
    %v819 = vpop.permute.xlu0 %818
    %v822 = vsel %vm249, %v764, 0
    %824 = vmatpush.msra.mxu0 0.0
    %825 = vmatpush.msra.mxu0 0.0
    %826 = vmatpush.msra.mxu0 0.0
    %827 = vmatpush.msra.mxu0 0.0
    %828 = vmatpush.msra.mxu0 0.0
    %829 = vmatpush.msra.mxu0 0.0
    %830 = vmatpush.msra.mxu0 0.0
    %831 = vmatpush.msra.mxu0 0.0
    %832 = vmatpush.msra.mxu0 0.0
    %833 = vmatpush.msra.mxu0 0.0
    %834 = vmatpush.msra.mxu0 0.0
    %835 = vmatpush.msra.mxu0 0.0
    %836 = vmatpush.msra.mxu0 0.0
    %837 = vmatpush.msra.mxu0 0.0
    %838 = vmatpush.msra.mxu0 0.0
    %839 = vmatpush.msra.mxu0 %v819
    %840 = vmatmul.f32.gmra.mxu0 %v822
    %v841 = vpop.f32.mrf.mxu0
    %v842 = vadd.f32 0.0, %v841
    %843 = vdwg.mxu0
    %844 = vrot.lane.b32.xlu0 %v247, 88
    %v845 = vpop.permute.xlu0 %844
    %v848 = vsel %vm249, %v765, 0
    %850 = vmatpush.msra.mxu0 0.0
    %851 = vmatpush.msra.mxu0 0.0
    %852 = vmatpush.msra.mxu0 0.0
    %853 = vmatpush.msra.mxu0 0.0
    %854 = vmatpush.msra.mxu0 0.0
    %855 = vmatpush.msra.mxu0 0.0
    %856 = vmatpush.msra.mxu0 0.0
    %857 = vmatpush.msra.mxu0 0.0
    %858 = vmatpush.msra.mxu0 0.0
    %859 = vmatpush.msra.mxu0 0.0
    %860 = vmatpush.msra.mxu0 0.0
    %861 = vmatpush.msra.mxu0 0.0
    %862 = vmatpush.msra.mxu0 0.0
    %863 = vmatpush.msra.mxu0 0.0
    %864 = vmatpush.msra.mxu0 0.0
    %865 = vmatpush.msra.mxu0 %v845
    %866 = vmatmul.f32.gmra.mxu0 %v848
    %v867 = vpop.f32.mrf.mxu0
    %v868 = vadd.f32 0.0, %v867
    %869 = vdwg.mxu0
    %874 = vrot.lane.b32.xlu0 %v790, 8
    %v875 = vpop.permute.xlu0 %874
    %876 = vrot.lane.b32.xlu0 %v816, 8
    %v877 = vpop.permute.xlu0 %876
    %878 = vrot.lane.b32.xlu0 %v842, 8
    %v879 = vpop.permute.xlu0 %878
    %880 = vrot.lane.b32.xlu0 %v868, 8
    %v881 = vpop.permute.xlu0 %880
    %vm886 = vcmask 130112
    %887 = vst.msk [vmem:[#allocation2] sm:$0xff] %vm886, %v875
    %888 = vst.msk [vmem:[#allocation2 + $0x8] sm:$0xff] %vm886, %v877
    %889 = vst.msk [vmem:[#allocation2 + $0x10] sm:$0xff] %vm886, %v879
    %890 = vst.msk [vmem:[#allocation2 + $0x18] sm:$0xff] %vm886, %v881
    %891 = vrot.lane.b32.xlu0 %v189, 112
    %v892 = vpop.permute.xlu0 %891
    %893 = vrot.lane.b32.xlu0 %v238, 112
    %v894 = vpop.permute.xlu0 %893
    %v895 = vsel %vm249, %v892, 0
    %v897 = vsel %vm249, %v894, 0
    %899 = vmatpush.xpose.msra.mxu0 0.0
    %900 = vmatpush.xpose.msra.mxu0 0.0
    %901 = vmatpush.xpose.msra.mxu0 0.0
    %902 = vmatpush.xpose.msra.mxu0 0.0
    %903 = vmatpush.xpose.msra.mxu0 0.0
    %904 = vmatpush.xpose.msra.mxu0 0.0
    %905 = vmatpush.xpose.msra.mxu0 0.0
    %906 = vmatpush.xpose.msra.mxu0 0.0
    %907 = vmatpush.xpose.msra.mxu0 0.0
    %908 = vmatpush.xpose.msra.mxu0 0.0
    %909 = vmatpush.xpose.msra.mxu0 0.0
    %910 = vmatpush.xpose.msra.mxu0 0.0
    %911 = vmatpush.xpose.msra.mxu0 0.0
    %912 = vmatpush.xpose.msra.mxu0 0.0
    %913 = vmatpush.xpose.msra.mxu0 0.0
    %914 = vmatpush.xpose.msra.mxu0 %v897
    %915 = vmatmul.f32.gmra.mxu0 %v895
    %v916 = vpop.f32.mrf.mxu0
    %v917 = vadd.f32 0.0, %v916
    %918 = vdwg.mxu0
    %919 = vrot.lane.b32.xlu0 %v192, 112
    %v920 = vpop.permute.xlu0 %919
    %921 = vrot.lane.b32.xlu0 %v241, 112
    %v922 = vpop.permute.xlu0 %921
    %v923 = vsel %vm249, %v920, 0
    %v925 = vsel %vm249, %v922, 0
    %927 = vmatpush.xpose.msra.mxu0 0.0
    %928 = vmatpush.xpose.msra.mxu0 0.0
    %929 = vmatpush.xpose.msra.mxu0 0.0
    %930 = vmatpush.xpose.msra.mxu0 0.0
    %931 = vmatpush.xpose.msra.mxu0 0.0
    %932 = vmatpush.xpose.msra.mxu0 0.0
    %933 = vmatpush.xpose.msra.mxu0 0.0
    %934 = vmatpush.xpose.msra.mxu0 0.0
    %935 = vmatpush.xpose.msra.mxu0 0.0
    %936 = vmatpush.xpose.msra.mxu0 0.0
    %937 = vmatpush.xpose.msra.mxu0 0.0
    %938 = vmatpush.xpose.msra.mxu0 0.0
    %939 = vmatpush.xpose.msra.mxu0 0.0
    %940 = vmatpush.xpose.msra.mxu0 0.0
    %941 = vmatpush.xpose.msra.mxu0 0.0
    %942 = vmatpush.xpose.msra.mxu0 %v925
    %943 = vmatmul.f32.gmra.mxu0 %v923
    %v944 = vpop.f32.mrf.mxu0
    %v945 = vadd.f32 0.0, %v944
    %946 = vdwg.mxu0
    %947 = vrot.lane.b32.xlu0 %v195, 112
    %v948 = vpop.permute.xlu0 %947
    %949 = vrot.lane.b32.xlu0 %v244, 112
    %v950 = vpop.permute.xlu0 %949
    %v951 = vsel %vm249, %v948, 0
    %v953 = vsel %vm249, %v950, 0
    %955 = vmatpush.xpose.msra.mxu0 0.0
    %956 = vmatpush.xpose.msra.mxu0 0.0
    %957 = vmatpush.xpose.msra.mxu0 0.0
    %958 = vmatpush.xpose.msra.mxu0 0.0
    %959 = vmatpush.xpose.msra.mxu0 0.0
    %960 = vmatpush.xpose.msra.mxu0 0.0
    %961 = vmatpush.xpose.msra.mxu0 0.0
    %962 = vmatpush.xpose.msra.mxu0 0.0
    %963 = vmatpush.xpose.msra.mxu0 0.0
    %964 = vmatpush.xpose.msra.mxu0 0.0
    %965 = vmatpush.xpose.msra.mxu0 0.0
    %966 = vmatpush.xpose.msra.mxu0 0.0
    %967 = vmatpush.xpose.msra.mxu0 0.0
    %968 = vmatpush.xpose.msra.mxu0 0.0
    %969 = vmatpush.xpose.msra.mxu0 0.0
    %970 = vmatpush.xpose.msra.mxu0 %v953
    %971 = vmatmul.f32.gmra.mxu0 %v951
    %v972 = vpop.f32.mrf.mxu0
    %v973 = vadd.f32 0.0, %v972
    %974 = vdwg.mxu0
    %975 = vrot.lane.b32.xlu0 %v198, 112
    %v976 = vpop.permute.xlu0 %975
    %977 = vrot.lane.b32.xlu0 %v247, 112
    %v978 = vpop.permute.xlu0 %977
    %v979 = vsel %vm249, %v976, 0
    %v981 = vsel %vm249, %v978, 0
    %983 = vmatpush.xpose.msra.mxu0 0.0
    %984 = vmatpush.xpose.msra.mxu0 0.0
    %985 = vmatpush.xpose.msra.mxu0 0.0
    %986 = vmatpush.xpose.msra.mxu0 0.0
    %987 = vmatpush.xpose.msra.mxu0 0.0
    %988 = vmatpush.xpose.msra.mxu0 0.0
    %989 = vmatpush.xpose.msra.mxu0 0.0
    %990 = vmatpush.xpose.msra.mxu0 0.0
    %991 = vmatpush.xpose.msra.mxu0 0.0
    %992 = vmatpush.xpose.msra.mxu0 0.0
    %993 = vmatpush.xpose.msra.mxu0 0.0
    %994 = vmatpush.xpose.msra.mxu0 0.0
    %995 = vmatpush.xpose.msra.mxu0 0.0
    %996 = vmatpush.xpose.msra.mxu0 0.0
    %997 = vmatpush.xpose.msra.mxu0 0.0
    %998 = vmatpush.xpose.msra.mxu0 %v981
    %999 = vmatmul.f32.gmra.mxu0 %v979
    %v1000 = vpop.f32.mrf.mxu0
    %v1001 = vadd.f32 0.0, %v1000
    %1002 = vdwg.mxu0
    %v1003 = vsel %vm249, %v917, -inf
    %1004 = vmax.xlane.f32.xlu0 %v1003
    %v1005 = vpop.xlane.xlu0 %1004
    %v1006 = vsel %vm249, %v945, -inf
    %1007 = vmax.xlane.f32.xlu0 %v1006
    %v1008 = vpop.xlane.xlu0 %1007
    %v1009 = vsel %vm249, %v973, -inf
    %1010 = vmax.xlane.f32.xlu0 %v1009
    %v1011 = vpop.xlane.xlu0 %1010
    %v1012 = vsel %vm249, %v1001, -inf
    %1013 = vmax.xlane.f32.xlu0 %v1012
    %v1014 = vpop.xlane.xlu0 %1013
    %v1015 = vsub.f32 %v917, %v1005
    %v1016 = vsub.f32 %v945, %v1008
    %v1017 = vsub.f32 %v973, %v1011
    %v1018 = vsub.f32 %v1001, %v1014
    %v1019 = vmul.f32 %v1015, 1.442695
    %v1020 = vpow.pop %v1019
    %v1021 = vmul.f32 %v1016, 1.442695
    %v1022 = vpow.pop %v1021
    %v1023 = vmul.f32 %v1017, 1.442695
    %v1024 = vpow.pop %v1023
    %v1025 = vmul.f32 %v1018, 1.442695
    %v1026 = vpow.pop %v1025
    %v1027 = vsel %vm249, %v1020, 0.0
    %1028 = vadd.xlane.f32.xlu0 %v1027
    %v1029 = vpop.xlane.xlu0 %1028
    %v1030 = vsel %vm249, %v1022, 0.0
    %1031 = vadd.xlane.f32.xlu0 %v1030
    %v1032 = vpop.xlane.xlu0 %1031
    %v1033 = vsel %vm249, %v1024, 0.0
    %1034 = vadd.xlane.f32.xlu0 %v1033
    %v1035 = vpop.xlane.xlu0 %1034
    %v1036 = vsel %vm249, %v1026, 0.0
    %1037 = vadd.xlane.f32.xlu0 %v1036
    %v1038 = vpop.xlane.xlu0 %1037
    %v1039 = vrcp.pop %v1029
    %v1040 = vmul.f32 %v1029, %v1039
    %v1041 = vsub.f32 1.0, %v1040
    %v1042 = vmul.f32 %v1039, %v1041
    %v1043 = vadd.f32 %v1039, %v1042
    %vm1044 = vweird.f32 %v1029
    %vm1045 = vweird.f32 %v1039
    %vm1046 = vmor %vm1044, %vm1045
    %v1047 = vsel %vm1046, %v1039, %v1043
    %v1048 = vand.u32 2147483647, %v1029
    %vm1049 = vcmp.eq.f32.partialorder %v1048, 8.507059e+37
    %v1050 = vand.u32 %v1029, 2147483648
    %v1051 = vor.u32 1.1754944e-38, %v1050
    %v1052 = vsel %vm1049, %v1051, %v1047
    %v1053 = vrcp.pop %v1032
    %v1054 = vmul.f32 %v1032, %v1053
    %v1055 = vsub.f32 1.0, %v1054
    %v1056 = vmul.f32 %v1053, %v1055
    %v1057 = vadd.f32 %v1053, %v1056
    %vm1058 = vweird.f32 %v1032
    %vm1059 = vweird.f32 %v1053
    %vm1060 = vmor %vm1058, %vm1059
    %v1061 = vsel %vm1060, %v1053, %v1057
    %v1062 = vand.u32 2147483647, %v1032
    %vm1063 = vcmp.eq.f32.partialorder %v1062, 8.507059e+37
    %v1064 = vand.u32 %v1032, 2147483648
    %v1065 = vor.u32 1.1754944e-38, %v1064
    %v1066 = vsel %vm1063, %v1065, %v1061
    %v1067 = vrcp.pop %v1035
    %v1068 = vmul.f32 %v1035, %v1067
    %v1069 = vsub.f32 1.0, %v1068
    %v1070 = vmul.f32 %v1067, %v1069
    %v1071 = vadd.f32 %v1067, %v1070
    %vm1072 = vweird.f32 %v1035
    %vm1073 = vweird.f32 %v1067
    %vm1074 = vmor %vm1072, %vm1073
    %v1075 = vsel %vm1074, %v1067, %v1071
    %v1076 = vand.u32 2147483647, %v1035
    %vm1077 = vcmp.eq.f32.partialorder %v1076, 8.507059e+37
    %v1078 = vand.u32 %v1035, 2147483648
    %v1079 = vor.u32 1.1754944e-38, %v1078
    %v1080 = vsel %vm1077, %v1079, %v1075
    %v1081 = vrcp.pop %v1038
    %v1082 = vmul.f32 %v1038, %v1081
    %v1083 = vsub.f32 1.0, %v1082
    %v1084 = vmul.f32 %v1081, %v1083
    %v1085 = vadd.f32 %v1081, %v1084
    %vm1086 = vweird.f32 %v1038
    %vm1087 = vweird.f32 %v1081
    %vm1088 = vmor %vm1086, %vm1087
    %v1089 = vsel %vm1088, %v1081, %v1085
    %v1090 = vand.u32 2147483647, %v1038
    %vm1091 = vcmp.eq.f32.partialorder %v1090, 8.507059e+37
    %v1092 = vand.u32 %v1038, 2147483648
    %v1093 = vor.u32 1.1754944e-38, %v1092
    %v1094 = vsel %vm1091, %v1093, %v1089
    %v1095 = vmul.f32 %v1020, %v1052
    %v1096 = vmul.f32 %v1022, %v1066
    %v1097 = vmul.f32 %v1024, %v1080
    %v1098 = vmul.f32 %v1026, %v1094
    %1099 = vrot.lane.b32.xlu0 %v238, 80
    %v1100 = vpop.permute.xlu0 %1099
    %v1103 = vsel %vm249, %v1095, 0
    %1105 = vmatpush.msra.mxu0 0.0
    %1106 = vmatpush.msra.mxu0 0.0
    %1107 = vmatpush.msra.mxu0 0.0
    %1108 = vmatpush.msra.mxu0 0.0
    %1109 = vmatpush.msra.mxu0 0.0
    %1110 = vmatpush.msra.mxu0 0.0
    %1111 = vmatpush.msra.mxu0 0.0
    %1112 = vmatpush.msra.mxu0 0.0
    %1113 = vmatpush.msra.mxu0 0.0
    %1114 = vmatpush.msra.mxu0 0.0
    %1115 = vmatpush.msra.mxu0 0.0
    %1116 = vmatpush.msra.mxu0 0.0
    %1117 = vmatpush.msra.mxu0 0.0
    %1118 = vmatpush.msra.mxu0 0.0
    %1119 = vmatpush.msra.mxu0 0.0
    %1120 = vmatpush.msra.mxu0 %v1100
    %1121 = vmatmul.f32.gmra.mxu0 %v1103
    %v1122 = vpop.f32.mrf.mxu0
    %v1123 = vadd.f32 0.0, %v1122
    %1124 = vdwg.mxu0
    %1125 = vrot.lane.b32.xlu0 %v241, 80
    %v1126 = vpop.permute.xlu0 %1125
    %v1129 = vsel %vm249, %v1096, 0
    %1131 = vmatpush.msra.mxu0 0.0
    %1132 = vmatpush.msra.mxu0 0.0
    %1133 = vmatpush.msra.mxu0 0.0
    %1134 = vmatpush.msra.mxu0 0.0
    %1135 = vmatpush.msra.mxu0 0.0
    %1136 = vmatpush.msra.mxu0 0.0
    %1137 = vmatpush.msra.mxu0 0.0
    %1138 = vmatpush.msra.mxu0 0.0
    %1139 = vmatpush.msra.mxu0 0.0
    %1140 = vmatpush.msra.mxu0 0.0
    %1141 = vmatpush.msra.mxu0 0.0
    %1142 = vmatpush.msra.mxu0 0.0
    %1143 = vmatpush.msra.mxu0 0.0
    %1144 = vmatpush.msra.mxu0 0.0
    %1145 = vmatpush.msra.mxu0 0.0
    %1146 = vmatpush.msra.mxu0 %v1126
    %1147 = vmatmul.f32.gmra.mxu0 %v1129
    %v1148 = vpop.f32.mrf.mxu0
    %v1149 = vadd.f32 0.0, %v1148
    %1150 = vdwg.mxu0
    %1151 = vrot.lane.b32.xlu0 %v244, 80
    %v1152 = vpop.permute.xlu0 %1151
    %v1155 = vsel %vm249, %v1097, 0
    %1157 = vmatpush.msra.mxu0 0.0
    %1158 = vmatpush.msra.mxu0 0.0
    %1159 = vmatpush.msra.mxu0 0.0
    %1160 = vmatpush.msra.mxu0 0.0
    %1161 = vmatpush.msra.mxu0 0.0
    %1162 = vmatpush.msra.mxu0 0.0
    %1163 = vmatpush.msra.mxu0 0.0
    %1164 = vmatpush.msra.mxu0 0.0
    %1165 = vmatpush.msra.mxu0 0.0
    %1166 = vmatpush.msra.mxu0 0.0
    %1167 = vmatpush.msra.mxu0 0.0
    %1168 = vmatpush.msra.mxu0 0.0
    %1169 = vmatpush.msra.mxu0 0.0
    %1170 = vmatpush.msra.mxu0 0.0
    %1171 = vmatpush.msra.mxu0 0.0
    %1172 = vmatpush.msra.mxu0 %v1152
    %1173 = vmatmul.f32.gmra.mxu0 %v1155
    %v1174 = vpop.f32.mrf.mxu0
    %v1175 = vadd.f32 0.0, %v1174
    %1176 = vdwg.mxu0
    %1177 = vrot.lane.b32.xlu0 %v247, 80
    %v1178 = vpop.permute.xlu0 %1177
    %v1181 = vsel %vm249, %v1098, 0
    %1183 = vmatpush.msra.mxu0 0.0
    %1184 = vmatpush.msra.mxu0 0.0
    %1185 = vmatpush.msra.mxu0 0.0
    %1186 = vmatpush.msra.mxu0 0.0
    %1187 = vmatpush.msra.mxu0 0.0
    %1188 = vmatpush.msra.mxu0 0.0
    %1189 = vmatpush.msra.mxu0 0.0
    %1190 = vmatpush.msra.mxu0 0.0
    %1191 = vmatpush.msra.mxu0 0.0
    %1192 = vmatpush.msra.mxu0 0.0
    %1193 = vmatpush.msra.mxu0 0.0
    %1194 = vmatpush.msra.mxu0 0.0
    %1195 = vmatpush.msra.mxu0 0.0
    %1196 = vmatpush.msra.mxu0 0.0
    %1197 = vmatpush.msra.mxu0 0.0
    %1198 = vmatpush.msra.mxu0 %v1178
    %1199 = vmatmul.f32.gmra.mxu0 %v1181
    %v1200 = vpop.f32.mrf.mxu0
    %v1201 = vadd.f32 0.0, %v1200
    %1202 = vdwg.mxu0
    %1207 = vrot.lane.b32.xlu0 %v1123, 16
    %v1208 = vpop.permute.xlu0 %1207
    %1209 = vrot.lane.b32.xlu0 %v1149, 16
    %v1210 = vpop.permute.xlu0 %1209
    %1211 = vrot.lane.b32.xlu0 %v1175, 16
    %v1212 = vpop.permute.xlu0 %1211
    %1213 = vrot.lane.b32.xlu0 %v1201, 16
    %v1214 = vpop.permute.xlu0 %1213
    %vm1219 = vcmask 195712
    %1220 = vst.msk [vmem:[#allocation2] sm:$0xff] %vm1219, %v1208
    %1221 = vst.msk [vmem:[#allocation2 + $0x8] sm:$0xff] %vm1219, %v1210
    %1222 = vst.msk [vmem:[#allocation2 + $0x10] sm:$0xff] %vm1219, %v1212
    %1223 = vst.msk [vmem:[#allocation2 + $0x18] sm:$0xff] %vm1219, %v1214
    %1224 = vrot.lane.b32.xlu0 %v189, 104
    %v1225 = vpop.permute.xlu0 %1224
    %1226 = vrot.lane.b32.xlu0 %v238, 104
    %v1227 = vpop.permute.xlu0 %1226
    %v1228 = vsel %vm249, %v1225, 0
    %v1230 = vsel %vm249, %v1227, 0
    %1232 = vmatpush.xpose.msra.mxu0 0.0
    %1233 = vmatpush.xpose.msra.mxu0 0.0
    %1234 = vmatpush.xpose.msra.mxu0 0.0
    %1235 = vmatpush.xpose.msra.mxu0 0.0
    %1236 = vmatpush.xpose.msra.mxu0 0.0
    %1237 = vmatpush.xpose.msra.mxu0 0.0
    %1238 = vmatpush.xpose.msra.mxu0 0.0
    %1239 = vmatpush.xpose.msra.mxu0 0.0
    %1240 = vmatpush.xpose.msra.mxu0 0.0
    %1241 = vmatpush.xpose.msra.mxu0 0.0
    %1242 = vmatpush.xpose.msra.mxu0 0.0
    %1243 = vmatpush.xpose.msra.mxu0 0.0
    %1244 = vmatpush.xpose.msra.mxu0 0.0
    %1245 = vmatpush.xpose.msra.mxu0 0.0
    %1246 = vmatpush.xpose.msra.mxu0 0.0
    %1247 = vmatpush.xpose.msra.mxu0 %v1230
    %1248 = vmatmul.f32.gmra.mxu0 %v1228
    %v1249 = vpop.f32.mrf.mxu0
    %v1250 = vadd.f32 0.0, %v1249
    %1251 = vdwg.mxu0
    %1252 = vrot.lane.b32.xlu0 %v192, 104
    %v1253 = vpop.permute.xlu0 %1252
    %1254 = vrot.lane.b32.xlu0 %v241, 104
    %v1255 = vpop.permute.xlu0 %1254
    %v1256 = vsel %vm249, %v1253, 0
    %v1258 = vsel %vm249, %v1255, 0
    %1260 = vmatpush.xpose.msra.mxu0 0.0
    %1261 = vmatpush.xpose.msra.mxu0 0.0
    %1262 = vmatpush.xpose.msra.mxu0 0.0
    %1263 = vmatpush.xpose.msra.mxu0 0.0
    %1264 = vmatpush.xpose.msra.mxu0 0.0
    %1265 = vmatpush.xpose.msra.mxu0 0.0
    %1266 = vmatpush.xpose.msra.mxu0 0.0
    %1267 = vmatpush.xpose.msra.mxu0 0.0
    %1268 = vmatpush.xpose.msra.mxu0 0.0
    %1269 = vmatpush.xpose.msra.mxu0 0.0
    %1270 = vmatpush.xpose.msra.mxu0 0.0
    %1271 = vmatpush.xpose.msra.mxu0 0.0
    %1272 = vmatpush.xpose.msra.mxu0 0.0
    %1273 = vmatpush.xpose.msra.mxu0 0.0
    %1274 = vmatpush.xpose.msra.mxu0 0.0
    %1275 = vmatpush.xpose.msra.mxu0 %v1258
    %1276 = vmatmul.f32.gmra.mxu0 %v1256
    %v1277 = vpop.f32.mrf.mxu0
    %v1278 = vadd.f32 0.0, %v1277
    %1279 = vdwg.mxu0
    %1280 = vrot.lane.b32.xlu0 %v195, 104
    %v1281 = vpop.permute.xlu0 %1280
    %1282 = vrot.lane.b32.xlu0 %v244, 104
    %v1283 = vpop.permute.xlu0 %1282
    %v1284 = vsel %vm249, %v1281, 0
    %v1286 = vsel %vm249, %v1283, 0
    %1288 = vmatpush.xpose.msra.mxu0 0.0
    %1289 = vmatpush.xpose.msra.mxu0 0.0
    %1290 = vmatpush.xpose.msra.mxu0 0.0
    %1291 = vmatpush.xpose.msra.mxu0 0.0
    %1292 = vmatpush.xpose.msra.mxu0 0.0
    %1293 = vmatpush.xpose.msra.mxu0 0.0
    %1294 = vmatpush.xpose.msra.mxu0 0.0
    %1295 = vmatpush.xpose.msra.mxu0 0.0
    %1296 = vmatpush.xpose.msra.mxu0 0.0
    %1297 = vmatpush.xpose.msra.mxu0 0.0
    %1298 = vmatpush.xpose.msra.mxu0 0.0
    %1299 = vmatpush.xpose.msra.mxu0 0.0
    %1300 = vmatpush.xpose.msra.mxu0 0.0
    %1301 = vmatpush.xpose.msra.mxu0 0.0
    %1302 = vmatpush.xpose.msra.mxu0 0.0
    %1303 = vmatpush.xpose.msra.mxu0 %v1286
    %1304 = vmatmul.f32.gmra.mxu0 %v1284
    %v1305 = vpop.f32.mrf.mxu0
    %v1306 = vadd.f32 0.0, %v1305
    %1307 = vdwg.mxu0
    %1308 = vrot.lane.b32.xlu0 %v198, 104
    %v1309 = vpop.permute.xlu0 %1308
    %1310 = vrot.lane.b32.xlu0 %v247, 104
    %v1311 = vpop.permute.xlu0 %1310
    %v1312 = vsel %vm249, %v1309, 0
    %v1314 = vsel %vm249, %v1311, 0
    %1316 = vmatpush.xpose.msra.mxu0 0.0
    %1317 = vmatpush.xpose.msra.mxu0 0.0
    %1318 = vmatpush.xpose.msra.mxu0 0.0
    %1319 = vmatpush.xpose.msra.mxu0 0.0
    %1320 = vmatpush.xpose.msra.mxu0 0.0
    %1321 = vmatpush.xpose.msra.mxu0 0.0
    %1322 = vmatpush.xpose.msra.mxu0 0.0
    %1323 = vmatpush.xpose.msra.mxu0 0.0
    %1324 = vmatpush.xpose.msra.mxu0 0.0
    %1325 = vmatpush.xpose.msra.mxu0 0.0
    %1326 = vmatpush.xpose.msra.mxu0 0.0
    %1327 = vmatpush.xpose.msra.mxu0 0.0
    %1328 = vmatpush.xpose.msra.mxu0 0.0
    %1329 = vmatpush.xpose.msra.mxu0 0.0
    %1330 = vmatpush.xpose.msra.mxu0 0.0
    %1331 = vmatpush.xpose.msra.mxu0 %v1314
    %1332 = vmatmul.f32.gmra.mxu0 %v1312
    %v1333 = vpop.f32.mrf.mxu0
    %v1334 = vadd.f32 0.0, %v1333
    %1335 = vdwg.mxu0
    %v1336 = vsel %vm249, %v1250, -inf
    %1337 = vmax.xlane.f32.xlu0 %v1336
    %v1338 = vpop.xlane.xlu0 %1337
    %v1339 = vsel %vm249, %v1278, -inf
    %1340 = vmax.xlane.f32.xlu0 %v1339
    %v1341 = vpop.xlane.xlu0 %1340
    %v1342 = vsel %vm249, %v1306, -inf
    %1343 = vmax.xlane.f32.xlu0 %v1342
    %v1344 = vpop.xlane.xlu0 %1343
    %v1345 = vsel %vm249, %v1334, -inf
    %1346 = vmax.xlane.f32.xlu0 %v1345
    %v1347 = vpop.xlane.xlu0 %1346
    %v1348 = vsub.f32 %v1250, %v1338
    %v1349 = vsub.f32 %v1278, %v1341
    %v1350 = vsub.f32 %v1306, %v1344
    %v1351 = vsub.f32 %v1334, %v1347
    %v1352 = vmul.f32 %v1348, 1.442695
    %v1353 = vpow.pop %v1352
    %v1354 = vmul.f32 %v1349, 1.442695
    %v1355 = vpow.pop %v1354
    %v1356 = vmul.f32 %v1350, 1.442695
    %v1357 = vpow.pop %v1356
    %v1358 = vmul.f32 %v1351, 1.442695
    %v1359 = vpow.pop %v1358
    %v1360 = vsel %vm249, %v1353, 0.0
    %1361 = vadd.xlane.f32.xlu0 %v1360
    %v1362 = vpop.xlane.xlu0 %1361
    %v1363 = vsel %vm249, %v1355, 0.0
    %1364 = vadd.xlane.f32.xlu0 %v1363
    %v1365 = vpop.xlane.xlu0 %1364
    %v1366 = vsel %vm249, %v1357, 0.0
    %1367 = vadd.xlane.f32.xlu0 %v1366
    %v1368 = vpop.xlane.xlu0 %1367
    %v1369 = vsel %vm249, %v1359, 0.0
    %1370 = vadd.xlane.f32.xlu0 %v1369
    %v1371 = vpop.xlane.xlu0 %1370
    %v1372 = vrcp.pop %v1362
    %v1373 = vmul.f32 %v1362, %v1372
    %v1374 = vsub.f32 1.0, %v1373
    %v1375 = vmul.f32 %v1372, %v1374
    %v1376 = vadd.f32 %v1372, %v1375
    %vm1377 = vweird.f32 %v1362
    %vm1378 = vweird.f32 %v1372
    %vm1379 = vmor %vm1377, %vm1378
    %v1380 = vsel %vm1379, %v1372, %v1376
    %v1381 = vand.u32 2147483647, %v1362
    %vm1382 = vcmp.eq.f32.partialorder %v1381, 8.507059e+37
    %v1383 = vand.u32 %v1362, 2147483648
    %v1384 = vor.u32 1.1754944e-38, %v1383
    %v1385 = vsel %vm1382, %v1384, %v1380
    %v1386 = vrcp.pop %v1365
    %v1387 = vmul.f32 %v1365, %v1386
    %v1388 = vsub.f32 1.0, %v1387
    %v1389 = vmul.f32 %v1386, %v1388
    %v1390 = vadd.f32 %v1386, %v1389
    %vm1391 = vweird.f32 %v1365
    %vm1392 = vweird.f32 %v1386
    %vm1393 = vmor %vm1391, %vm1392
    %v1394 = vsel %vm1393, %v1386, %v1390
    %v1395 = vand.u32 2147483647, %v1365
    %vm1396 = vcmp.eq.f32.partialorder %v1395, 8.507059e+37
    %v1397 = vand.u32 %v1365, 2147483648
    %v1398 = vor.u32 1.1754944e-38, %v1397
    %v1399 = vsel %vm1396, %v1398, %v1394
    %v1400 = vrcp.pop %v1368
    %v1401 = vmul.f32 %v1368, %v1400
    %v1402 = vsub.f32 1.0, %v1401
    %v1403 = vmul.f32 %v1400, %v1402
    %v1404 = vadd.f32 %v1400, %v1403
    %vm1405 = vweird.f32 %v1368
    %vm1406 = vweird.f32 %v1400
    %vm1407 = vmor %vm1405, %vm1406
    %v1408 = vsel %vm1407, %v1400, %v1404
    %v1409 = vand.u32 2147483647, %v1368
    %vm1410 = vcmp.eq.f32.partialorder %v1409, 8.507059e+37
    %v1411 = vand.u32 %v1368, 2147483648
    %v1412 = vor.u32 1.1754944e-38, %v1411
    %v1413 = vsel %vm1410, %v1412, %v1408
    %v1414 = vrcp.pop %v1371
    %v1415 = vmul.f32 %v1371, %v1414
    %v1416 = vsub.f32 1.0, %v1415
    %v1417 = vmul.f32 %v1414, %v1416
    %v1418 = vadd.f32 %v1414, %v1417
    %vm1419 = vweird.f32 %v1371
    %vm1420 = vweird.f32 %v1414
    %vm1421 = vmor %vm1419, %vm1420
    %v1422 = vsel %vm1421, %v1414, %v1418
    %v1423 = vand.u32 2147483647, %v1371
    %vm1424 = vcmp.eq.f32.partialorder %v1423, 8.507059e+37
    %v1425 = vand.u32 %v1371, 2147483648
    %v1426 = vor.u32 1.1754944e-38, %v1425
    %v1427 = vsel %vm1424, %v1426, %v1422
    %v1428 = vmul.f32 %v1353, %v1385
    %v1429 = vmul.f32 %v1355, %v1399
    %v1430 = vmul.f32 %v1357, %v1413
    %v1431 = vmul.f32 %v1359, %v1427
    %1432 = vrot.lane.b32.xlu0 %v238, 72
    %v1433 = vpop.permute.xlu0 %1432
    %v1436 = vsel %vm249, %v1428, 0
    %1438 = vmatpush.msra.mxu0 0.0
    %1439 = vmatpush.msra.mxu0 0.0
    %1440 = vmatpush.msra.mxu0 0.0
    %1441 = vmatpush.msra.mxu0 0.0
    %1442 = vmatpush.msra.mxu0 0.0
    %1443 = vmatpush.msra.mxu0 0.0
    %1444 = vmatpush.msra.mxu0 0.0
    %1445 = vmatpush.msra.mxu0 0.0
    %1446 = vmatpush.msra.mxu0 0.0
    %1447 = vmatpush.msra.mxu0 0.0
    %1448 = vmatpush.msra.mxu0 0.0
    %1449 = vmatpush.msra.mxu0 0.0
    %1450 = vmatpush.msra.mxu0 0.0
    %1451 = vmatpush.msra.mxu0 0.0
    %1452 = vmatpush.msra.mxu0 0.0
    %1453 = vmatpush.msra.mxu0 %v1433
    %1454 = vmatmul.f32.gmra.mxu0 %v1436
    %v1455 = vpop.f32.mrf.mxu0
    %v1456 = vadd.f32 0.0, %v1455
    %1457 = vdwg.mxu0
    %1458 = vrot.lane.b32.xlu0 %v241, 72
    %v1459 = vpop.permute.xlu0 %1458
    %v1462 = vsel %vm249, %v1429, 0
    %1464 = vmatpush.msra.mxu0 0.0
    %1465 = vmatpush.msra.mxu0 0.0
    %1466 = vmatpush.msra.mxu0 0.0
    %1467 = vmatpush.msra.mxu0 0.0
    %1468 = vmatpush.msra.mxu0 0.0
    %1469 = vmatpush.msra.mxu0 0.0
    %1470 = vmatpush.msra.mxu0 0.0
    %1471 = vmatpush.msra.mxu0 0.0
    %1472 = vmatpush.msra.mxu0 0.0
    %1473 = vmatpush.msra.mxu0 0.0
    %1474 = vmatpush.msra.mxu0 0.0
    %1475 = vmatpush.msra.mxu0 0.0
    %1476 = vmatpush.msra.mxu0 0.0
    %1477 = vmatpush.msra.mxu0 0.0
    %1478 = vmatpush.msra.mxu0 0.0
    %1479 = vmatpush.msra.mxu0 %v1459
    %1480 = vmatmul.f32.gmra.mxu0 %v1462
    %v1481 = vpop.f32.mrf.mxu0
    %v1482 = vadd.f32 0.0, %v1481
    %1483 = vdwg.mxu0
    %1484 = vrot.lane.b32.xlu0 %v244, 72
    %v1485 = vpop.permute.xlu0 %1484
    %v1488 = vsel %vm249, %v1430, 0
    %1490 = vmatpush.msra.mxu0 0.0
    %1491 = vmatpush.msra.mxu0 0.0
    %1492 = vmatpush.msra.mxu0 0.0
    %1493 = vmatpush.msra.mxu0 0.0
    %1494 = vmatpush.msra.mxu0 0.0
    %1495 = vmatpush.msra.mxu0 0.0
    %1496 = vmatpush.msra.mxu0 0.0
    %1497 = vmatpush.msra.mxu0 0.0
    %1498 = vmatpush.msra.mxu0 0.0
    %1499 = vmatpush.msra.mxu0 0.0
    %1500 = vmatpush.msra.mxu0 0.0
    %1501 = vmatpush.msra.mxu0 0.0
    %1502 = vmatpush.msra.mxu0 0.0
    %1503 = vmatpush.msra.mxu0 0.0
    %1504 = vmatpush.msra.mxu0 0.0
    %1505 = vmatpush.msra.mxu0 %v1485
    %1506 = vmatmul.f32.gmra.mxu0 %v1488
    %v1507 = vpop.f32.mrf.mxu0
    %v1508 = vadd.f32 0.0, %v1507
    %1509 = vdwg.mxu0
    %1510 = vrot.lane.b32.xlu0 %v247, 72
    %v1511 = vpop.permute.xlu0 %1510
    %v1514 = vsel %vm249, %v1431, 0
    %1516 = vmatpush.msra.mxu0 0.0
    %1517 = vmatpush.msra.mxu0 0.0
    %1518 = vmatpush.msra.mxu0 0.0
    %1519 = vmatpush.msra.mxu0 0.0
    %1520 = vmatpush.msra.mxu0 0.0
    %1521 = vmatpush.msra.mxu0 0.0
    %1522 = vmatpush.msra.mxu0 0.0
    %1523 = vmatpush.msra.mxu0 0.0
    %1524 = vmatpush.msra.mxu0 0.0
    %1525 = vmatpush.msra.mxu0 0.0
    %1526 = vmatpush.msra.mxu0 0.0
    %1527 = vmatpush.msra.mxu0 0.0
    %1528 = vmatpush.msra.mxu0 0.0
    %1529 = vmatpush.msra.mxu0 0.0
    %1530 = vmatpush.msra.mxu0 0.0
    %1531 = vmatpush.msra.mxu0 %v1511
    %1532 = vmatmul.f32.gmra.mxu0 %v1514
    %v1533 = vpop.f32.mrf.mxu0
    %v1534 = vadd.f32 0.0, %v1533
    %1535 = vdwg.mxu0
    %1540 = vrot.lane.b32.xlu0 %v1456, 24
    %v1541 = vpop.permute.xlu0 %1540
    %1542 = vrot.lane.b32.xlu0 %v1482, 24
    %v1543 = vpop.permute.xlu0 %1542
    %1544 = vrot.lane.b32.xlu0 %v1508, 24
    %v1545 = vpop.permute.xlu0 %1544
    %1546 = vrot.lane.b32.xlu0 %v1534, 24
    %v1547 = vpop.permute.xlu0 %1546
    %vm1552 = vcmask 261312
    %1553 = vst.msk [vmem:[#allocation2] sm:$0xff] %vm1552, %v1541
    %1554 = vst.msk [vmem:[#allocation2 + $0x8] sm:$0xff] %vm1552, %v1543
    %1555 = vst.msk [vmem:[#allocation2 + $0x10] sm:$0xff] %vm1552, %v1545
    %1556 = vst.msk [vmem:[#allocation2 + $0x18] sm:$0xff] %vm1552, %v1547
    %v1557 = vld [vmem:[#allocation2] sm:$0xff]
    %v1558 = vld [vmem:[#allocation2 + $0x8] sm:$0xff]
    %v1559 = vld [vmem:[#allocation2 + $0x10] sm:$0xff]
    %v1560 = vld [vmem:[#allocation2 + $0x18] sm:$0xff]
    %v1561 = vld [vmem:[#allocation11] sm:$0xff]
    %v1562 = vld [vmem:[#allocation11 + $0x8] sm:$0xff]
    %v1563 = vld [vmem:[#allocation11 + $0x10] sm:$0xff]
    %v1564 = vld [vmem:[#allocation11 + $0x18] sm:$0xff]
    %v1565 = vld [vmem:[%s7] sm:$0x1]
    %v1567 = vperm.slane %v1565, 0
    %v1570 = vsel %vm158, %v1557, 0
    %v1573 = vsel %vm158, %v1558, 0
    %v1576 = vsel %vm158, %v1559, 0
    %v1579 = vsel %vm158, %v1560, 0
    %1581 = vmatpush.msra.mxu0 0.0
    %1582 = vmatpush.msra.mxu0 0.0
    %1583 = vmatpush.msra.mxu0 0.0
    %1584 = vmatpush.msra.mxu0 0.0
    %1585 = vmatpush.msra.mxu0 0.0
    %1586 = vmatpush.msra.mxu0 0.0
    %1587 = vmatpush.msra.mxu0 0.0
    %1588 = vmatpush.msra.mxu0 0.0
    %1589 = vmatpush.msra.mxu0 0.0
    %1590 = vmatpush.msra.mxu0 0.0
    %1591 = vmatpush.msra.mxu0 0.0
    %1592 = vmatpush.msra.mxu0 0.0
    %1593 = vmatpush.msra.mxu0 %v1564
    %1594 = vmatpush.msra.mxu0 %v1563
    %1595 = vmatpush.msra.mxu0 %v1562
    %1596 = vmatpush.msra.mxu0 %v1561
    %1597 = vmatmul.f32.gmra.mxu0 %v1570
    %v1598 = vpop.f32.mrf.mxu0
    %v1599 = vadd.f32 %v1567, %v1598
    %1600 = vmatmul.f32.gmra.mxu0 %v1573
    %v1601 = vpop.f32.mrf.mxu0
    %v1602 = vadd.f32 %v1567, %v1601
    %1603 = vmatmul.f32.gmra.mxu0 %v1576
    %v1604 = vpop.f32.mrf.mxu0
    %v1605 = vadd.f32 %v1567, %v1604
    %1606 = vmatmul.f32.gmra.mxu0 %v1579
    %v1607 = vpop.f32.mrf.mxu0
    %v1608 = vadd.f32 %v1567, %v1607
    %1609 = vdwg.mxu0
    %v1610 = vadd.f32 %v1599, %v142
    %v1611 = vadd.f32 %v1602, %v143
    %v1612 = vadd.f32 %v1605, %v144
    %v1613 = vadd.f32 %v1608, %v145
    %v1614 = vld [vmem:[%s10] sm:$0x1]
    %v1615 = vld [vmem:[%s11] sm:$0x1]
    %v1616 = vsel %vm158, %v1610, 0.0
    %1617 = vadd.xlane.f32.xlu0 %v1616
    %v1618 = vpop.xlane.xlu0 %1617
    %v1619 = vsel %vm158, %v1611, 0.0
    %1620 = vadd.xlane.f32.xlu0 %v1619
    %v1621 = vpop.xlane.xlu0 %1620
    %v1622 = vsel %vm158, %v1612, 0.0
    %1623 = vadd.xlane.f32.xlu0 %v1622
    %v1624 = vpop.xlane.xlu0 %1623
    %v1625 = vsel %vm158, %v1613, 0.0
    %1626 = vadd.xlane.f32.xlu0 %v1625
    %v1627 = vpop.xlane.xlu0 %1626
    %v1628 = vrcp.pop 32.0
    %v1629 = vmul.f32 32.0, %v1628
    %v1630 = vsub.f32 1.0, %v1629
    %v1631 = vmul.f32 %v1628, %v1630
    %v1632 = vadd.f32 %v1628, %v1631
    %vm1633 = vweird.f32 %v1628
    %v1634 = vsel %vm1633, %v1628, %v1632
    %v1635 = vmul.f32 %v1618, %v1634
    %v1636 = vmul.f32 %v1621, %v1634
    %v1637 = vmul.f32 %v1624, %v1634
    %v1638 = vmul.f32 %v1627, %v1634
    %v1639 = vsub.f32 %v1610, %v1635
    %v1640 = vsub.f32 %v1611, %v1636
    %v1641 = vsub.f32 %v1612, %v1637
    %v1642 = vsub.f32 %v1613, %v1638
    %v1643 = vmul.f32 %v1639, %v1639
    %v1644 = vmul.f32 %v1640, %v1640
    %v1645 = vmul.f32 %v1641, %v1641
    %v1646 = vmul.f32 %v1642, %v1642
    %v1647 = vsel %vm158, %v1643, 0.0
    %1648 = vadd.xlane.f32.xlu0 %v1647
    %v1649 = vpop.xlane.xlu0 %1648
    %v1650 = vsel %vm158, %v1644, 0.0
    %1651 = vadd.xlane.f32.xlu0 %v1650
    %v1652 = vpop.xlane.xlu0 %1651
    %v1653 = vsel %vm158, %v1645, 0.0
    %1654 = vadd.xlane.f32.xlu0 %v1653
    %v1655 = vpop.xlane.xlu0 %1654
    %v1656 = vsel %vm158, %v1646, 0.0
    %1657 = vadd.xlane.f32.xlu0 %v1656
    %v1658 = vpop.xlane.xlu0 %1657
    %v1659 = vmul.f32 %v1649, %v1634
    %v1660 = vmul.f32 %v1652, %v1634
    %v1661 = vmul.f32 %v1655, %v1634
    %v1662 = vmul.f32 %v1658, %v1634
    %v1663 = vadd.f32 %v1659, 1e-05
    %v1664 = vadd.f32 %v1660, 1e-05
    %v1665 = vadd.f32 %v1661, 1e-05
    %v1666 = vadd.f32 %v1662, 1e-05
    %v1667 = vrsqrt.pop %v1663
    %v1668 = vmul.f32 %v1667, %v1663
    %v1669 = vmul.f32 %v1668, %v1667
    %v1670 = vmul.f32 0.5, %v1669
    %v1671 = vsub.f32 1.5, %v1670
    %v1672 = vmul.f32 %v1667, %v1671
    %vm1673 = vweird.f32 %v1663
    %vm1674 = vweird.f32 %v1667
    %vm1675 = vmor %vm1673, %vm1674
    %v1676 = vsel %vm1675, %v1667, %v1672
    %v1677 = vrsqrt.pop %v1664
    %v1678 = vmul.f32 %v1677, %v1664
    %v1679 = vmul.f32 %v1678, %v1677
    %v1680 = vmul.f32 0.5, %v1679
    %v1681 = vsub.f32 1.5, %v1680
    %v1682 = vmul.f32 %v1677, %v1681
    %vm1683 = vweird.f32 %v1664
    %vm1684 = vweird.f32 %v1677
    %vm1685 = vmor %vm1683, %vm1684
    %v1686 = vsel %vm1685, %v1677, %v1682
    %v1687 = vrsqrt.pop %v1665
    %v1688 = vmul.f32 %v1687, %v1665
    %v1689 = vmul.f32 %v1688, %v1687
    %v1690 = vmul.f32 0.5, %v1689
    %v1691 = vsub.f32 1.5, %v1690
    %v1692 = vmul.f32 %v1687, %v1691
    %vm1693 = vweird.f32 %v1665
    %vm1694 = vweird.f32 %v1687
    %vm1695 = vmor %vm1693, %vm1694
    %v1696 = vsel %vm1695, %v1687, %v1692
    %v1697 = vrsqrt.pop %v1666
    %v1698 = vmul.f32 %v1697, %v1666
    %v1699 = vmul.f32 %v1698, %v1697
    %v1700 = vmul.f32 0.5, %v1699
    %v1701 = vsub.f32 1.5, %v1700
    %v1702 = vmul.f32 %v1697, %v1701
    %vm1703 = vweird.f32 %v1666
    %vm1704 = vweird.f32 %v1697
    %vm1705 = vmor %vm1703, %vm1704
    %v1706 = vsel %vm1705, %v1697, %v1702
    %v1707 = vmul.f32 %v1639, %v1676
    %v1708 = vmul.f32 %v1640, %v1686
    %v1709 = vmul.f32 %v1641, %v1696
    %v1710 = vmul.f32 %v1642, %v1706
    %v1712 = vperm.slane %v1614, 0
    %v1714 = vmul.f32 %v1707, %v1712
    %v1715 = vmul.f32 %v1708, %v1712
    %v1716 = vmul.f32 %v1709, %v1712
    %v1717 = vmul.f32 %v1710, %v1712
    %v1719 = vperm.slane %v1615, 0
    %v1721 = vadd.f32 %v1714, %v1719
    %v1722 = vadd.f32 %v1715, %v1719
    %v1723 = vadd.f32 %v1716, %v1719
    %v1724 = vadd.f32 %v1717, %v1719
    %v1725 = vld [vmem:[#allocation12] sm:$0xff]
    %v1726 = vld [vmem:[#allocation12 + $0x8] sm:$0xff]
    %v1727 = vld [vmem:[#allocation12 + $0x10] sm:$0xff]
    %v1728 = vld [vmem:[#allocation12 + $0x18] sm:$0xff]
    %v1729 = vld [vmem:[%s9] sm:$0x1]
    %v1731 = vperm.slane %v1729, 0
    %v1734 = vsel %vm158, %v1721, 0
    %v1737 = vsel %vm158, %v1722, 0
    %v1740 = vsel %vm158, %v1723, 0
    %v1743 = vsel %vm158, %v1724, 0
    %1745 = vmatpush.msra.mxu0 0.0
    %1746 = vmatpush.msra.mxu0 0.0
    %1747 = vmatpush.msra.mxu0 0.0
    %1748 = vmatpush.msra.mxu0 0.0
    %1749 = vmatpush.msra.mxu0 0.0
    %1750 = vmatpush.msra.mxu0 0.0
    %1751 = vmatpush.msra.mxu0 0.0
    %1752 = vmatpush.msra.mxu0 0.0
    %1753 = vmatpush.msra.mxu0 0.0
    %1754 = vmatpush.msra.mxu0 0.0
    %1755 = vmatpush.msra.mxu0 0.0
    %1756 = vmatpush.msra.mxu0 0.0
    %1757 = vmatpush.msra.mxu0 %v1728
    %1758 = vmatpush.msra.mxu0 %v1727
    %1759 = vmatpush.msra.mxu0 %v1726
    %1760 = vmatpush.msra.mxu0 %v1725
    %1761 = vmatmul.f32.gmra.mxu0 %v1734
    %v1762 = vpop.f32.mrf.mxu0
    %v1763 = vadd.f32 %v1731, %v1762
    %1764 = vmatmul.f32.gmra.mxu0 %v1737
    %v1765 = vpop.f32.mrf.mxu0
    %v1766 = vadd.f32 %v1731, %v1765
    %1767 = vmatmul.f32.gmra.mxu0 %v1740
    %v1768 = vpop.f32.mrf.mxu0
    %v1769 = vadd.f32 %v1731, %v1768
    %1770 = vmatmul.f32.gmra.mxu0 %v1743
    %v1771 = vpop.f32.mrf.mxu0
    %v1772 = vadd.f32 %v1731, %v1771
    %1773 = vdwg.mxu0
    %v1774 = vadd.f32 %v1763, %v1721
    %v1775 = vadd.f32 %v1766, %v1722
    %v1776 = vadd.f32 %v1769, %v1723
    %v1777 = vadd.f32 %v1772, %v1724
    %v1778 = vld [vmem:[%s12] sm:$0x1]
    %v1779 = vld [vmem:[%s13] sm:$0x1]
    %v1780 = vsel %vm158, %v1774, 0.0
    %1781 = vadd.xlane.f32.xlu0 %v1780
    %v1782 = vpop.xlane.xlu0 %1781
    %v1783 = vsel %vm158, %v1775, 0.0
    %1784 = vadd.xlane.f32.xlu0 %v1783
    %v1785 = vpop.xlane.xlu0 %1784
    %v1786 = vsel %vm158, %v1776, 0.0
    %1787 = vadd.xlane.f32.xlu0 %v1786
    %v1788 = vpop.xlane.xlu0 %1787
    %v1789 = vsel %vm158, %v1777, 0.0
    %1790 = vadd.xlane.f32.xlu0 %v1789
    %v1791 = vpop.xlane.xlu0 %1790
    %v1792 = vmul.f32 %v1782, %v1634
    %v1793 = vmul.f32 %v1785, %v1634
    %v1794 = vmul.f32 %v1788, %v1634
    %v1795 = vmul.f32 %v1791, %v1634
    %v1796 = vsub.f32 %v1774, %v1792
    %v1797 = vsub.f32 %v1775, %v1793
    %v1798 = vsub.f32 %v1776, %v1794
    %v1799 = vsub.f32 %v1777, %v1795
    %v1800 = vmul.f32 %v1796, %v1796
    %v1801 = vmul.f32 %v1797, %v1797
    %v1802 = vmul.f32 %v1798, %v1798
    %v1803 = vmul.f32 %v1799, %v1799
    %v1804 = vsel %vm158, %v1800, 0.0
    %1805 = vadd.xlane.f32.xlu0 %v1804
    %v1806 = vpop.xlane.xlu0 %1805
    %v1807 = vsel %vm158, %v1801, 0.0
    %1808 = vadd.xlane.f32.xlu0 %v1807
    %v1809 = vpop.xlane.xlu0 %1808
    %v1810 = vsel %vm158, %v1802, 0.0
    %1811 = vadd.xlane.f32.xlu0 %v1810
    %v1812 = vpop.xlane.xlu0 %1811
    %v1813 = vsel %vm158, %v1803, 0.0
    %1814 = vadd.xlane.f32.xlu0 %v1813
    %v1815 = vpop.xlane.xlu0 %1814
    %v1816 = vmul.f32 %v1806, %v1634
    %v1817 = vmul.f32 %v1809, %v1634
    %v1818 = vmul.f32 %v1812, %v1634
    %v1819 = vmul.f32 %v1815, %v1634
    %v1820 = vadd.f32 %v1816, 1e-05
    %v1821 = vadd.f32 %v1817, 1e-05
    %v1822 = vadd.f32 %v1818, 1e-05
    %v1823 = vadd.f32 %v1819, 1e-05
    %v1824 = vrsqrt.pop %v1820
    %v1825 = vmul.f32 %v1824, %v1820
    %v1826 = vmul.f32 %v1825, %v1824
    %v1827 = vmul.f32 0.5, %v1826
    %v1828 = vsub.f32 1.5, %v1827
    %v1829 = vmul.f32 %v1824, %v1828
    %vm1830 = vweird.f32 %v1820
    %vm1831 = vweird.f32 %v1824
    %vm1832 = vmor %vm1830, %vm1831
    %v1833 = vsel %vm1832, %v1824, %v1829
    %v1834 = vrsqrt.pop %v1821
    %v1835 = vmul.f32 %v1834, %v1821
    %v1836 = vmul.f32 %v1835, %v1834
    %v1837 = vmul.f32 0.5, %v1836
    %v1838 = vsub.f32 1.5, %v1837
    %v1839 = vmul.f32 %v1834, %v1838
    %vm1840 = vweird.f32 %v1821
    %vm1841 = vweird.f32 %v1834
    %vm1842 = vmor %vm1840, %vm1841
    %v1843 = vsel %vm1842, %v1834, %v1839
    %v1844 = vrsqrt.pop %v1822
    %v1845 = vmul.f32 %v1844, %v1822
    %v1846 = vmul.f32 %v1845, %v1844
    %v1847 = vmul.f32 0.5, %v1846
    %v1848 = vsub.f32 1.5, %v1847
    %v1849 = vmul.f32 %v1844, %v1848
    %vm1850 = vweird.f32 %v1822
    %vm1851 = vweird.f32 %v1844
    %vm1852 = vmor %vm1850, %vm1851
    %v1853 = vsel %vm1852, %v1844, %v1849
    %v1854 = vrsqrt.pop %v1823
    %v1855 = vmul.f32 %v1854, %v1823
    %v1856 = vmul.f32 %v1855, %v1854
    %v1857 = vmul.f32 0.5, %v1856
    %v1858 = vsub.f32 1.5, %v1857
    %v1859 = vmul.f32 %v1854, %v1858
    %vm1860 = vweird.f32 %v1823
    %vm1861 = vweird.f32 %v1854
    %vm1862 = vmor %vm1860, %vm1861
    %v1863 = vsel %vm1862, %v1854, %v1859
    %v1864 = vmul.f32 %v1796, %v1833
    %v1865 = vmul.f32 %v1797, %v1843
    %v1866 = vmul.f32 %v1798, %v1853
    %v1867 = vmul.f32 %v1799, %v1863
    %v1869 = vperm.slane %v1778, 0
    %v1871 = vmul.f32 %v1864, %v1869
    %v1872 = vmul.f32 %v1865, %v1869
    %v1873 = vmul.f32 %v1866, %v1869
    %v1874 = vmul.f32 %v1867, %v1869
    %v1876 = vperm.slane %v1779, 0
    %v1878 = vadd.f32 %v1871, %v1876
    %v1879 = vadd.f32 %v1872, %v1876
    %v1880 = vadd.f32 %v1873, %v1876
    %v1881 = vadd.f32 %v1874, %v1876
    %1882 = vst.msk [vmem:[#allocation14] sm:$0xff] %vm158, %v1878
    %1883 = vst.msk [vmem:[#allocation14 + $0x8] sm:$0xff] %vm158, %v1879
    %1884 = vst.msk [vmem:[#allocation14 + $0x10] sm:$0xff] %vm158, %v1880
    %1885 = vst.msk [vmem:[#allocation14 + $0x18] sm:$0xff] %vm158, %v1881
    // Predicated region
    $region82: #{tpu_custom_call.1} parent=1 // pred_check
      _
    $region83: #{tpu_custom_call.1} parent=1 // pred_check_branch
      %1887 = sbr.rel (0) target = $region85
    $region84: #{tpu_custom_call.1} parent=1 // pred_region
      %1889 = vsyncadd [#allocation5], 0
      %s1890 = sshll.u32 [#allocation14], 4
      %s1891 = int_to_ptr.vmem [resolvable:$true] %s1890
      %s1892 = sshll.u32 %s14, 4
      %s1893 = int_to_ptr.hbm [resolvable:$true] %s1892
      %1898 = dma.vmem_to_hbm [thread:$0]  %s1891, 512, %s1893, [#allocation5], 128, 128, 8
    $region85: #{tpu_custom_call.1} parent=1 // pred_fallthru
      _
    // Predicated region
    $region86: #{tpu_custom_call.1} parent=1 // pred_check
      _
    $region87: #{tpu_custom_call.1} parent=1 // pred_check_branch
      %1900 = sbr.rel (0) target = $region89
    $region88: #{tpu_custom_call.1} parent=1 // pred_region
      %1902 = dma.done [#allocation5], 512
    $region89: #{tpu_custom_call.1} parent=1 // pred_fallthru
      _
    %1903 = vsyncpa [#allocation4], 1
    %1904 = vsyncpa [#allocation7], 1
    %1905 = vsyncpa [#allocation10], 1
    %1906 = vsyncpa [#allocation13], 1
    %1907 = vsyncpa [#allocation5], 1

// kernel: tpu_custom_call.1
$region0: #{tpu_custom_call.1}
  #allocation0 [shape = 'u32[]', space=smem, size = 0x4, offset = 0x4, fixed_abs, tag = 'smem constant byte address 0x4 - core index']
  #allocation1 [shape = 'u32[72,128]{1,0:T(1,128)}', space=vmem, size = 0x9000, scoped, tag = 'internal scratch']
  #allocation2 [shape = 'f32[32,32]{1,0:T(8,128)}', space=vmem, size = 0x4000, scoped, tag = 'scratch operand']
  %s0 = inlined_call_operand.hbm [shape: f32[4,8,32], index: 0, kind: input, shape index: {}]
  %s1 = inlined_call_operand.hbm [shape: f32[4,8,32], index: 1, kind: input, shape index: {}]
  %s2 = inlined_call_operand.hbm [shape: f32[32,32], index: 2, kind: input, shape index: {}]
  %s3 = inlined_call_operand.vmem [shape: f32[1,32], index: 3, kind: input, shape index: {}]
  %s4 = inlined_call_operand.hbm [shape: f32[32,64], index: 4, kind: input, shape index: {}]
  %s5 = inlined_call_operand.vmem [shape: f32[1,64], index: 5, kind: input, shape index: {}]
  %s6 = inlined_call_operand.hbm [shape: f32[32,32], index: 6, kind: input, shape index: {}]
  %s7 = inlined_call_operand.vmem [shape: f32[1,32], index: 7, kind: input, shape index: {}]
  %s8 = inlined_call_operand.hbm [shape: f32[32,32], index: 8, kind: input, shape index: {}]
  %s9 = inlined_call_operand.vmem [shape: f32[1,32], index: 9, kind: input, shape index: {}]
  %s10 = inlined_call_operand.vmem [shape: f32[1,32], index: 10, kind: input, shape index: {}]
  %s11 = inlined_call_operand.vmem [shape: f32[1,32], index: 11, kind: input, shape index: {}]
  %s12 = inlined_call_operand.vmem [shape: f32[1,32], index: 12, kind: input, shape index: {}]
  %s13 = inlined_call_operand.vmem [shape: f32[1,32], index: 13, kind: input, shape index: {}]
  %s14 = inlined_call_operand.hbm [shape: f32[4,8,32], index: 14, kind: output, shape index: {}]
  %s15 = sld [smem:[#allocation0]]
  $region90: #{tpu_custom_call.1} parent=0
    _
  %s17 = ssub.s32 1, %s15
  %s18 = scalar_select 0, %s17, %s15
  $region1: #{tpu_custom_call.1} parent=0
    #allocation3 [shape = 'u8[16384]{0}', space=vmem, size = 0x4000, scoped, tag = 'input window, operand 0, single buffered']
    #allocation4 [shape = 's32[1]{0}', space=sflag, size = 0x4, scoped, tag = 'scoped memory for tpu_custom_call.1']
    #allocation5 [shape = 's32[1]{0}', space=sflag, size = 0x4, scoped, tag = 'scoped memory for tpu_custom_call.1']
    #allocation6 [shape = 'u8[16384]{0}', space=vmem, size = 0x4000, scoped, tag = 'input window, operand 1, single buffered']
    #allocation7 [shape = 's32[1]{0}', space=sflag, size = 0x4, scoped, tag = 'scoped memory for tpu_custom_call.1']
    #allocation8 [shape = 'u8[16384]{0}', space=vmem, size = 0x4000, scoped, tag = 'input window, operand 2, single buffered']
    #allocation9 [shape = 'u8[16384]{0}', space=vmem, size = 0x4000, scoped, tag = 'input window, operand 4, single buffered']
    #allocation10 [shape = 's32[1]{0}', space=sflag, size = 0x4, scoped, tag = 'scoped memory for tpu_custom_call.1']
    #allocation11 [shape = 'u8[16384]{0}', space=vmem, size = 0x4000, scoped, tag = 'input window, operand 6, single buffered']
    #allocation12 [shape = 'u8[16384]{0}', space=vmem, size = 0x4000, scoped, tag = 'input window, operand 8, single buffered']
    #allocation13 [shape = 's32[1]{0}', space=sflag, size = 0x4, scoped, tag = 'scoped memory for tpu_custom_call.1']
    #allocation14 [shape = 'u8[16384]{0}', space=vmem, size = 0x4000, scoped, tag = 'output window, operand 0, single buffered']
    %19 = vsyncpa [#allocation4], 0
    %20 = vsyncpa [#allocation7], 0
    %21 = vsyncpa [#allocation10], 0
    %22 = vsyncpa [#allocation13], 0
    %23 = vsyncpa [#allocation5], 0
    // Predicated region
    $region2: #{tpu_custom_call.1} parent=1 // pred_check
      _
    $region3: #{tpu_custom_call.1} parent=1 // pred_check_branch
      %25 = sbr.rel (0) target = $region5
    $region4: #{tpu_custom_call.1} parent=1 // pred_region
      %27 = vsyncadd [#allocation4], 0
      %s28 = sshll.u32 %s0, 4
      %s29 = int_to_ptr.hbm [resolvable:$true] %s28
      %s30 = sshll.u32 [#allocation3], 4
      %s31 = int_to_ptr.vmem [resolvable:$true] %s30
      %36 = dma.hbm_to_vmem [thread:$0]  %s29, 512, %s31, [#allocation4], 128, 128, 8
    $region5: #{tpu_custom_call.1} parent=1 // pred_fallthru
      _
    // Predicated region
    $region6: #{tpu_custom_call.1} parent=1 // pred_check
      _
    $region7: #{tpu_custom_call.1} parent=1 // pred_check_branch
      %38 = sbr.rel (0) target = $region9
    $region8: #{tpu_custom_call.1} parent=1 // pred_region
      %40 = vsyncadd [#allocation7], 0
      %s41 = sshll.u32 %s1, 4
      %s42 = int_to_ptr.hbm [resolvable:$true] %s41
      %s43 = sshll.u32 [#allocation6], 4
      %s44 = int_to_ptr.vmem [resolvable:$true] %s43
      %49 = dma.hbm_to_vmem [thread:$0]  %s42, 512, %s44, [#allocation7], 128, 128, 8
    $region9: #{tpu_custom_call.1} parent=1 // pred_fallthru
      _
    // Predicated region
    $region10: #{tpu_custom_call.1} parent=1 // pred_check
      _
    $region11: #{tpu_custom_call.1} parent=1 // pred_check_branch
      %51 = sbr.rel (0) target = $region13
    $region12: #{tpu_custom_call.1} parent=1 // pred_region
      %53 = vsyncadd [#allocation7], 0
      %s54 = sshll.u32 %s2, 4
      %s55 = int_to_ptr.hbm [resolvable:$true] %s54
      %s56 = sshll.u32 [#allocation8], 4
      %s57 = int_to_ptr.vmem [resolvable:$true] %s56
      %62 = dma.hbm_to_vmem [thread:$0]  %s55, 512, %s57, [#allocation7], 128, 128, 8
    $region13: #{tpu_custom_call.1} parent=1 // pred_fallthru
      _
    // Predicated region
    $region14: #{tpu_custom_call.1} parent=1 // pred_check
      _
    $region15: #{tpu_custom_call.1} parent=1 // pred_check_branch
      %64 = sbr.rel (0) target = $region17
    $region16: #{tpu_custom_call.1} parent=1 // pred_region
      _
    $region17: #{tpu_custom_call.1} parent=1 // pred_fallthru
      _
    // Predicated region
    $region18: #{tpu_custom_call.1} parent=1 // pred_check
      _
    $region19: #{tpu_custom_call.1} parent=1 // pred_check_branch
      %66 = sbr.rel (0) target = $region21
    $region20: #{tpu_custom_call.1} parent=1 // pred_region
      %68 = vsyncadd [#allocation10], 0
      %s69 = sshll.u32 %s4, 4
      %s70 = int_to_ptr.hbm [resolvable:$true] %s69
      %s71 = sshll.u32 [#allocation9], 4
      %s72 = int_to_ptr.vmem [resolvable:$true] %s71
      %77 = dma.hbm_to_vmem [thread:$0]  %s70, 512, %s72, [#allocation10], 128, 128, 8
    $region21: #{tpu_custom_call.1} parent=1 // pred_fallthru
      _
    // Predicated region
    $region22: #{tpu_custom_call.1} parent=1 // pred_check
      _
    $region23: #{tpu_custom_call.1} parent=1 // pred_check_branch
      %79 = sbr.rel (0) target = $region25
    $region24: #{tpu_custom_call.1} parent=1 // pred_region
      _
    $region25: #{tpu_custom_call.1} parent=1 // pred_fallthru
      _
    // Predicated region
    $region26: #{tpu_custom_call.1} parent=1 // pred_check
      _
    $region27: #{tpu_custom_call.1} parent=1 // pred_check_branch
      %81 = sbr.rel (0) target = $region29
    $region28: #{tpu_custom_call.1} parent=1 // pred_region
      %83 = vsyncadd [#allocation10], 0
      %s84 = sshll.u32 %s6, 4
      %s85 = int_to_ptr.hbm [resolvable:$true] %s84
      %s86 = sshll.u32 [#allocation11], 4
      %s87 = int_to_ptr.vmem [resolvable:$true] %s86
      %92 = dma.hbm_to_vmem [thread:$0]  %s85, 512, %s87, [#allocation10], 128, 128, 8
    $region29: #{tpu_custom_call.1} parent=1 // pred_fallthru
      _
    // Predicated region
    $region30: #{tpu_custom_call.1} parent=1 // pred_check
      _
    $region31: #{tpu_custom_call.1} parent=1 // pred_check_branch
      %94 = sbr.rel (0) target = $region33
    $region32: #{tpu_custom_call.1} parent=1 // pred_region
      _
    $region33: #{tpu_custom_call.1} parent=1 // pred_fallthru
      _
    // Predicated region
    $region34: #{tpu_custom_call.1} parent=1 // pred_check
      _
    $region35: #{tpu_custom_call.1} parent=1 // pred_check_branch
      %96 = sbr.rel (0) target = $region37
    $region36: #{tpu_custom_call.1} parent=1 // pred_region
      %98 = vsyncadd [#allocation13], 0
      %s99 = sshll.u32 %s8, 4
      %s100 = int_to_ptr.hbm [resolvable:$true] %s99
      %s101 = sshll.u32 [#allocation12], 4
      %s102 = int_to_ptr.vmem [resolvable:$true] %s101
      %107 = dma.hbm_to_vmem [thread:$0]  %s100, 512, %s102, [#allocation13], 128, 128, 8
    $region37: #{tpu_custom_call.1} parent=1 // pred_fallthru
      _
    // Predicated region
    $region38: #{tpu_custom_call.1} parent=1 // pred_check
      _
    $region39: #{tpu_custom_call.1} parent=1 // pred_check_branch
      %109 = sbr.rel (0) target = $region41
    $region40: #{tpu_custom_call.1} parent=1 // pred_region
      _
    $region41: #{tpu_custom_call.1} parent=1 // pred_fallthru
      _
    // Predicated region
    $region42: #{tpu_custom_call.1} parent=1 // pred_check
      _
    $region43: #{tpu_custom_call.1} parent=1 // pred_check_branch
      %111 = sbr.rel (0) target = $region45
    $region44: #{tpu_custom_call.1} parent=1 // pred_region
      _
    $region45: #{tpu_custom_call.1} parent=1 // pred_fallthru
      _
    // Predicated region
    $region46: #{tpu_custom_call.1} parent=1 // pred_check
      _
    $region47: #{tpu_custom_call.1} parent=1 // pred_check_branch
      %113 = sbr.rel (0) target = $region49
    $region48: #{tpu_custom_call.1} parent=1 // pred_region
      _
    $region49: #{tpu_custom_call.1} parent=1 // pred_fallthru
      _
    // Predicated region
    $region50: #{tpu_custom_call.1} parent=1 // pred_check
      _
    $region51: #{tpu_custom_call.1} parent=1 // pred_check_branch
      %115 = sbr.rel (0) target = $region53
    $region52: #{tpu_custom_call.1} parent=1 // pred_region
      _
    $region53: #{tpu_custom_call.1} parent=1 // pred_fallthru
      _
    // Predicated region
    $region54: #{tpu_custom_call.1} parent=1 // pred_check
      _
    $region55: #{tpu_custom_call.1} parent=1 // pred_check_branch
      %117 = sbr.rel (0) target = $region57
    $region56: #{tpu_custom_call.1} parent=1 // pred_region
      _
    $region57: #{tpu_custom_call.1} parent=1 // pred_fallthru
      _
    // Predicated region
    $region58: #{tpu_custom_call.1} parent=1 // pred_check
      _
    $region59: #{tpu_custom_call.1} parent=1 // pred_check_branch
      %119 = sbr.rel (0) target = $region61
    $region60: #{tpu_custom_call.1} parent=1 // pred_region
      %121 = dma.done [#allocation4], 512
    $region61: #{tpu_custom_call.1} parent=1 // pred_fallthru
      _
    // Predicated region
    $region62: #{tpu_custom_call.1} parent=1 // pred_check
      _
    $region63: #{tpu_custom_call.1} parent=1 // pred_check_branch
      %123 = sbr.rel (0) target = $region65
    $region64: #{tpu_custom_call.1} parent=1 // pred_region
      %125 = dma.done [#allocation7], 512
    $region65: #{tpu_custom_call.1} parent=1 // pred_fallthru
      _
    // Predicated region
    $region66: #{tpu_custom_call.1} parent=1 // pred_check
      _
    $region67: #{tpu_custom_call.1} parent=1 // pred_check_branch
      %127 = sbr.rel (0) target = $region69
    $region68: #{tpu_custom_call.1} parent=1 // pred_region
      %129 = dma.done [#allocation7], 512
    $region69: #{tpu_custom_call.1} parent=1 // pred_fallthru
      _
    // Predicated region
    $region70: #{tpu_custom_call.1} parent=1 // pred_check
      _
    $region71: #{tpu_custom_call.1} parent=1 // pred_check_branch
      %131 = sbr.rel (0) target = $region73
    $region72: #{tpu_custom_call.1} parent=1 // pred_region
      %133 = dma.done [#allocation10], 512
    $region73: #{tpu_custom_call.1} parent=1 // pred_fallthru
      _
    // Predicated region
    $region74: #{tpu_custom_call.1} parent=1 // pred_check
      _
    $region75: #{tpu_custom_call.1} parent=1 // pred_check_branch
      %135 = sbr.rel (0) target = $region77
    $region76: #{tpu_custom_call.1} parent=1 // pred_region
      %137 = dma.done [#allocation10], 512
    $region77: #{tpu_custom_call.1} parent=1 // pred_fallthru
      _
    // Predicated region
    $region78: #{tpu_custom_call.1} parent=1 // pred_check
      _
    $region79: #{tpu_custom_call.1} parent=1 // pred_check_branch
      %139 = sbr.rel (0) target = $region81
    $region80: #{tpu_custom_call.1} parent=1 // pred_region
      %141 = dma.done [#allocation13], 512
    $region81: #{tpu_custom_call.1} parent=1 // pred_fallthru
      _
    %v142 = vld [vmem:[#allocation3] sm:$0xff]
    %v143 = vld [vmem:[#allocation3 + $0x8] sm:$0xff]
    %v144 = vld [vmem:[#allocation3 + $0x10] sm:$0xff]
    %v145 = vld [vmem:[#allocation3 + $0x18] sm:$0xff]
    %v146 = vld [vmem:[#allocation6] sm:$0xff]
    %v147 = vld [vmem:[#allocation6 + $0x8] sm:$0xff]
    %v148 = vld [vmem:[#allocation6 + $0x10] sm:$0xff]
    %v149 = vld [vmem:[#allocation6 + $0x18] sm:$0xff]
    %v150 = vld [vmem:[#allocation8] sm:$0xff]
    %v151 = vld [vmem:[#allocation8 + $0x8] sm:$0xff]
    %v152 = vld [vmem:[#allocation8 + $0x10] sm:$0xff]
    %v153 = vld [vmem:[#allocation8 + $0x18] sm:$0xff]
    %v154 = vld [vmem:[%s3] sm:$0x1]
    %v156 = vperm.slane %v154, 0
    %vm158 = vcmask 261120
    %v160 = vsel %vm158, %v142, 0
    %v163 = vsel %vm158, %v143, 0
    %v166 = vsel %vm158, %v144, 0
    %v169 = vsel %vm158, %v145, 0
    %171 = vmatpush.msra.mxu0 0.0
    %172 = vmatpush.msra.mxu0 0.0
    %173 = vmatpush.msra.mxu0 0.0
    %174 = vmatpush.msra.mxu0 0.0
    %175 = vmatpush.msra.mxu0 0.0
    %176 = vmatpush.msra.mxu0 0.0
    %177 = vmatpush.msra.mxu0 0.0
    %178 = vmatpush.msra.mxu0 0.0
    %179 = vmatpush.msra.mxu0 0.0
    %180 = vmatpush.msra.mxu0 0.0
    %181 = vmatpush.msra.mxu0 0.0
    %182 = vmatpush.msra.mxu0 0.0
    %183 = vmatpush.msra.mxu0 %v153
    %184 = vmatpush.msra.mxu0 %v152
    %185 = vmatpush.msra.mxu0 %v151
    %186 = vmatpush.msra.mxu0 %v150
    %187 = vmatmul.f32.gmra.mxu0 %v160
    %v188 = vpop.f32.mrf.mxu0
    %v189 = vadd.f32 %v156, %v188
    %190 = vmatmul.f32.gmra.mxu0 %v163
    %v191 = vpop.f32.mrf.mxu0
    %v192 = vadd.f32 %v156, %v191
    %193 = vmatmul.f32.gmra.mxu0 %v166
    %v194 = vpop.f32.mrf.mxu0
    %v195 = vadd.f32 %v156, %v194
    %196 = vmatmul.f32.gmra.mxu0 %v169
    %v197 = vpop.f32.mrf.mxu0
    %v198 = vadd.f32 %v156, %v197
    %199 = vdwg.mxu0
    %v200 = vld [vmem:[#allocation9] sm:$0xff]
    %v201 = vld [vmem:[#allocation9 + $0x8] sm:$0xff]
    %v202 = vld [vmem:[#allocation9 + $0x10] sm:$0xff]
    %v203 = vld [vmem:[#allocation9 + $0x18] sm:$0xff]
    %v204 = vld [vmem:[%s5] sm:$0x1]
    %v206 = vperm.slane %v204, 0
    %v209 = vsel %vm158, %v146, 0
    %v212 = vsel %vm158, %v147, 0
    %v215 = vsel %vm158, %v148, 0
    %v218 = vsel %vm158, %v149, 0
    %220 = vmatpush.msra.mxu0 0.0
    %221 = vmatpush.msra.mxu0 0.0
    %222 = vmatpush.msra.mxu0 0.0
    %223 = vmatpush.msra.mxu0 0.0
    %224 = vmatpush.msra.mxu0 0.0
    %225 = vmatpush.msra.mxu0 0.0
    %226 = vmatpush.msra.mxu0 0.0
    %227 = vmatpush.msra.mxu0 0.0
    %228 = vmatpush.msra.mxu0 0.0
    %229 = vmatpush.msra.mxu0 0.0
    %230 = vmatpush.msra.mxu0 0.0
    %231 = vmatpush.msra.mxu0 0.0
    %232 = vmatpush.msra.mxu0 %v203
    %233 = vmatpush.msra.mxu0 %v202
    %234 = vmatpush.msra.mxu0 %v201
    %235 = vmatpush.msra.mxu0 %v200
    %236 = vmatmul.f32.gmra.mxu0 %v209
    %v237 = vpop.f32.mrf.mxu0
    %v238 = vadd.f32 %v206, %v237
    %239 = vmatmul.f32.gmra.mxu0 %v212
    %v240 = vpop.f32.mrf.mxu0
    %v241 = vadd.f32 %v206, %v240
    %242 = vmatmul.f32.gmra.mxu0 %v215
    %v243 = vpop.f32.mrf.mxu0
    %v244 = vadd.f32 %v206, %v243
    %245 = vmatmul.f32.gmra.mxu0 %v218
    %v246 = vpop.f32.mrf.mxu0
    %v247 = vadd.f32 %v206, %v246
    %248 = vdwg.mxu0
    %vm249 = vcmask 64512
    %v251 = vsel %vm249, %v189, 0
    %v254 = vsel %vm249, %v238, 0
    %256 = vmatpush.xpose.msra.mxu0 0.0
    %257 = vmatpush.xpose.msra.mxu0 0.0
    %258 = vmatpush.xpose.msra.mxu0 0.0
    %259 = vmatpush.xpose.msra.mxu0 0.0
    %260 = vmatpush.xpose.msra.mxu0 0.0
    %261 = vmatpush.xpose.msra.mxu0 0.0
    %262 = vmatpush.xpose.msra.mxu0 0.0
    %263 = vmatpush.xpose.msra.mxu0 0.0
    %264 = vmatpush.xpose.msra.mxu0 0.0
    %265 = vmatpush.xpose.msra.mxu0 0.0
    %266 = vmatpush.xpose.msra.mxu0 0.0
    %267 = vmatpush.xpose.msra.mxu0 0.0
    %268 = vmatpush.xpose.msra.mxu0 0.0
    %269 = vmatpush.xpose.msra.mxu0 0.0
    %270 = vmatpush.xpose.msra.mxu0 0.0
    %271 = vmatpush.xpose.msra.mxu0 %v254
    %272 = vmatmul.f32.gmra.mxu0 %v251
    %v273 = vpop.f32.mrf.mxu0
    %v274 = vadd.f32 0.0, %v273
    %275 = vdwg.mxu0
    %v277 = vsel %vm249, %v192, 0
    %v280 = vsel %vm249, %v241, 0
    %282 = vmatpush.xpose.msra.mxu0 0.0
    %283 = vmatpush.xpose.msra.mxu0 0.0
    %284 = vmatpush.xpose.msra.mxu0 0.0
    %285 = vmatpush.xpose.msra.mxu0 0.0
    %286 = vmatpush.xpose.msra.mxu0 0.0
    %287 = vmatpush.xpose.msra.mxu0 0.0
    %288 = vmatpush.xpose.msra.mxu0 0.0
    %289 = vmatpush.xpose.msra.mxu0 0.0
    %290 = vmatpush.xpose.msra.mxu0 0.0
    %291 = vmatpush.xpose.msra.mxu0 0.0
    %292 = vmatpush.xpose.msra.mxu0 0.0
    %293 = vmatpush.xpose.msra.mxu0 0.0
    %294 = vmatpush.xpose.msra.mxu0 0.0
    %295 = vmatpush.xpose.msra.mxu0 0.0
    %296 = vmatpush.xpose.msra.mxu0 0.0
    %297 = vmatpush.xpose.msra.mxu0 %v280
    %298 = vmatmul.f32.gmra.mxu0 %v277
    %v299 = vpop.f32.mrf.mxu0
    %v300 = vadd.f32 0.0, %v299
    %301 = vdwg.mxu0
    %v303 = vsel %vm249, %v195, 0
    %v306 = vsel %vm249, %v244, 0
    %308 = vmatpush.xpose.msra.mxu0 0.0
    %309 = vmatpush.xpose.msra.mxu0 0.0
    %310 = vmatpush.xpose.msra.mxu0 0.0
    %311 = vmatpush.xpose.msra.mxu0 0.0
    %312 = vmatpush.xpose.msra.mxu0 0.0
    %313 = vmatpush.xpose.msra.mxu0 0.0
    %314 = vmatpush.xpose.msra.mxu0 0.0
    %315 = vmatpush.xpose.msra.mxu0 0.0
    %316 = vmatpush.xpose.msra.mxu0 0.0
    %317 = vmatpush.xpose.msra.mxu0 0.0
    %318 = vmatpush.xpose.msra.mxu0 0.0
    %319 = vmatpush.xpose.msra.mxu0 0.0
    %320 = vmatpush.xpose.msra.mxu0 0.0
    %321 = vmatpush.xpose.msra.mxu0 0.0
    %322 = vmatpush.xpose.msra.mxu0 0.0
    %323 = vmatpush.xpose.msra.mxu0 %v306
    %324 = vmatmul.f32.gmra.mxu0 %v303
    %v325 = vpop.f32.mrf.mxu0
    %v326 = vadd.f32 0.0, %v325
    %327 = vdwg.mxu0
    %v329 = vsel %vm249, %v198, 0
    %v332 = vsel %vm249, %v247, 0
    %334 = vmatpush.xpose.msra.mxu0 0.0
    %335 = vmatpush.xpose.msra.mxu0 0.0
    %336 = vmatpush.xpose.msra.mxu0 0.0
    %337 = vmatpush.xpose.msra.mxu0 0.0
    %338 = vmatpush.xpose.msra.mxu0 0.0
    %339 = vmatpush.xpose.msra.mxu0 0.0
    %340 = vmatpush.xpose.msra.mxu0 0.0
    %341 = vmatpush.xpose.msra.mxu0 0.0
    %342 = vmatpush.xpose.msra.mxu0 0.0
    %343 = vmatpush.xpose.msra.mxu0 0.0
    %344 = vmatpush.xpose.msra.mxu0 0.0
    %345 = vmatpush.xpose.msra.mxu0 0.0
    %346 = vmatpush.xpose.msra.mxu0 0.0
    %347 = vmatpush.xpose.msra.mxu0 0.0
    %348 = vmatpush.xpose.msra.mxu0 0.0
    %349 = vmatpush.xpose.msra.mxu0 %v332
    %350 = vmatmul.f32.gmra.mxu0 %v329
    %v351 = vpop.f32.mrf.mxu0
    %v352 = vadd.f32 0.0, %v351
    %353 = vdwg.mxu0
    %v354 = vsel %vm249, %v274, -inf
    %355 = vmax.xlane.f32.xlu0 %v354
    %v356 = vpop.xlane.xlu0 %355
    %v357 = vsel %vm249, %v300, -inf
    %358 = vmax.xlane.f32.xlu0 %v357
    %v359 = vpop.xlane.xlu0 %358
    %v360 = vsel %vm249, %v326, -inf
    %361 = vmax.xlane.f32.xlu0 %v360
    %v362 = vpop.xlane.xlu0 %361
    %v363 = vsel %vm249, %v352, -inf
    %364 = vmax.xlane.f32.xlu0 %v363
    %v365 = vpop.xlane.xlu0 %364
    %v366 = vsub.f32 %v274, %v356
    %v367 = vsub.f32 %v300, %v359
    %v368 = vsub.f32 %v326, %v362
    %v369 = vsub.f32 %v352, %v365
    %v370 = vmul.f32 %v366, 1.442695
    %v371 = vpow.pop %v370
    %v372 = vmul.f32 %v367, 1.442695
    %v373 = vpow.pop %v372
    %v374 = vmul.f32 %v368, 1.442695
    %v375 = vpow.pop %v374
    %v376 = vmul.f32 %v369, 1.442695
    %v377 = vpow.pop %v376
    %v378 = vsel %vm249, %v371, 0.0
    %379 = vadd.xlane.f32.xlu0 %v378
    %v380 = vpop.xlane.xlu0 %379
    %v381 = vsel %vm249, %v373, 0.0
    %382 = vadd.xlane.f32.xlu0 %v381
    %v383 = vpop.xlane.xlu0 %382
    %v384 = vsel %vm249, %v375, 0.0
    %385 = vadd.xlane.f32.xlu0 %v384
    %v386 = vpop.xlane.xlu0 %385
    %v387 = vsel %vm249, %v377, 0.0
    %388 = vadd.xlane.f32.xlu0 %v387
    %v389 = vpop.xlane.xlu0 %388
    %v390 = vrcp.pop %v380
    %v391 = vmul.f32 %v380, %v390
    %v392 = vsub.f32 1.0, %v391
    %v393 = vmul.f32 %v390, %v392
    %v394 = vadd.f32 %v390, %v393
    %vm395 = vweird.f32 %v380
    %vm396 = vweird.f32 %v390
    %vm397 = vmor %vm395, %vm396
    %v398 = vsel %vm397, %v390, %v394
    %v399 = vand.u32 2147483647, %v380
    %vm400 = vcmp.eq.f32.partialorder %v399, 8.507059e+37
    %v401 = vand.u32 %v380, 2147483648
    %v402 = vor.u32 1.1754944e-38, %v401
    %v403 = vsel %vm400, %v402, %v398
    %v404 = vrcp.pop %v383
    %v405 = vmul.f32 %v383, %v404
    %v406 = vsub.f32 1.0, %v405
    %v407 = vmul.f32 %v404, %v406
    %v408 = vadd.f32 %v404, %v407
    %vm409 = vweird.f32 %v383
    %vm410 = vweird.f32 %v404
    %vm411 = vmor %vm409, %vm410
    %v412 = vsel %vm411, %v404, %v408
    %v413 = vand.u32 2147483647, %v383
    %vm414 = vcmp.eq.f32.partialorder %v413, 8.507059e+37
    %v415 = vand.u32 %v383, 2147483648
    %v416 = vor.u32 1.1754944e-38, %v415
    %v417 = vsel %vm414, %v416, %v412
    %v418 = vrcp.pop %v386
    %v419 = vmul.f32 %v386, %v418
    %v420 = vsub.f32 1.0, %v419
    %v421 = vmul.f32 %v418, %v420
    %v422 = vadd.f32 %v418, %v421
    %vm423 = vweird.f32 %v386
    %vm424 = vweird.f32 %v418
    %vm425 = vmor %vm423, %vm424
    %v426 = vsel %vm425, %v418, %v422
    %v427 = vand.u32 2147483647, %v386
    %vm428 = vcmp.eq.f32.partialorder %v427, 8.507059e+37
    %v429 = vand.u32 %v386, 2147483648
    %v430 = vor.u32 1.1754944e-38, %v429
    %v431 = vsel %vm428, %v430, %v426
    %v432 = vrcp.pop %v389
    %v433 = vmul.f32 %v389, %v432
    %v434 = vsub.f32 1.0, %v433
    %v435 = vmul.f32 %v432, %v434
    %v436 = vadd.f32 %v432, %v435
    %vm437 = vweird.f32 %v389
    %vm438 = vweird.f32 %v432
    %vm439 = vmor %vm437, %vm438
    %v440 = vsel %vm439, %v432, %v436
    %v441 = vand.u32 2147483647, %v389
    %vm442 = vcmp.eq.f32.partialorder %v441, 8.507059e+37
    %v443 = vand.u32 %v389, 2147483648
    %v444 = vor.u32 1.1754944e-38, %v443
    %v445 = vsel %vm442, %v444, %v440
    %v446 = vmul.f32 %v371, %v403
    %v447 = vmul.f32 %v373, %v417
    %v448 = vmul.f32 %v375, %v431
    %v449 = vmul.f32 %v377, %v445
    %450 = vrot.lane.b32.xlu0 %v238, 96
    %v451 = vpop.permute.xlu0 %450
    %v454 = vsel %vm249, %v446, 0
    %456 = vmatpush.msra.mxu0 0.0
    %457 = vmatpush.msra.mxu0 0.0
    %458 = vmatpush.msra.mxu0 0.0
    %459 = vmatpush.msra.mxu0 0.0
    %460 = vmatpush.msra.mxu0 0.0
    %461 = vmatpush.msra.mxu0 0.0
    %462 = vmatpush.msra.mxu0 0.0
    %463 = vmatpush.msra.mxu0 0.0
    %464 = vmatpush.msra.mxu0 0.0
    %465 = vmatpush.msra.mxu0 0.0
    %466 = vmatpush.msra.mxu0 0.0
    %467 = vmatpush.msra.mxu0 0.0
    %468 = vmatpush.msra.mxu0 0.0
    %469 = vmatpush.msra.mxu0 0.0
    %470 = vmatpush.msra.mxu0 0.0
    %471 = vmatpush.msra.mxu0 %v451
    %472 = vmatmul.f32.gmra.mxu0 %v454
    %v473 = vpop.f32.mrf.mxu0
    %v474 = vadd.f32 0.0, %v473
    %475 = vdwg.mxu0
    %476 = vrot.lane.b32.xlu0 %v241, 96
    %v477 = vpop.permute.xlu0 %476
    %v480 = vsel %vm249, %v447, 0
    %482 = vmatpush.msra.mxu0 0.0
    %483 = vmatpush.msra.mxu0 0.0
    %484 = vmatpush.msra.mxu0 0.0
    %485 = vmatpush.msra.mxu0 0.0
    %486 = vmatpush.msra.mxu0 0.0
    %487 = vmatpush.msra.mxu0 0.0
    %488 = vmatpush.msra.mxu0 0.0
    %489 = vmatpush.msra.mxu0 0.0
    %490 = vmatpush.msra.mxu0 0.0
    %491 = vmatpush.msra.mxu0 0.0
    %492 = vmatpush.msra.mxu0 0.0
    %493 = vmatpush.msra.mxu0 0.0
    %494 = vmatpush.msra.mxu0 0.0
    %495 = vmatpush.msra.mxu0 0.0
    %496 = vmatpush.msra.mxu0 0.0
    %497 = vmatpush.msra.mxu0 %v477
    %498 = vmatmul.f32.gmra.mxu0 %v480
    %v499 = vpop.f32.mrf.mxu0
    %v500 = vadd.f32 0.0, %v499
    %501 = vdwg.mxu0
    %502 = vrot.lane.b32.xlu0 %v244, 96
    %v503 = vpop.permute.xlu0 %502
    %v506 = vsel %vm249, %v448, 0
    %508 = vmatpush.msra.mxu0 0.0
    %509 = vmatpush.msra.mxu0 0.0
    %510 = vmatpush.msra.mxu0 0.0
    %511 = vmatpush.msra.mxu0 0.0
    %512 = vmatpush.msra.mxu0 0.0
    %513 = vmatpush.msra.mxu0 0.0
    %514 = vmatpush.msra.mxu0 0.0
    %515 = vmatpush.msra.mxu0 0.0
    %516 = vmatpush.msra.mxu0 0.0
    %517 = vmatpush.msra.mxu0 0.0
    %518 = vmatpush.msra.mxu0 0.0
    %519 = vmatpush.msra.mxu0 0.0
    %520 = vmatpush.msra.mxu0 0.0
    %521 = vmatpush.msra.mxu0 0.0
    %522 = vmatpush.msra.mxu0 0.0
    %523 = vmatpush.msra.mxu0 %v503
    %524 = vmatmul.f32.gmra.mxu0 %v506
    %v525 = vpop.f32.mrf.mxu0
    %v526 = vadd.f32 0.0, %v525
    %527 = vdwg.mxu0
    %528 = vrot.lane.b32.xlu0 %v247, 96
    %v529 = vpop.permute.xlu0 %528
    %v532 = vsel %vm249, %v449, 0
    %534 = vmatpush.msra.mxu0 0.0
    %535 = vmatpush.msra.mxu0 0.0
    %536 = vmatpush.msra.mxu0 0.0
    %537 = vmatpush.msra.mxu0 0.0
    %538 = vmatpush.msra.mxu0 0.0
    %539 = vmatpush.msra.mxu0 0.0
    %540 = vmatpush.msra.mxu0 0.0
    %541 = vmatpush.msra.mxu0 0.0
    %542 = vmatpush.msra.mxu0 0.0
    %543 = vmatpush.msra.mxu0 0.0
    %544 = vmatpush.msra.mxu0 0.0
    %545 = vmatpush.msra.mxu0 0.0
    %546 = vmatpush.msra.mxu0 0.0
    %547 = vmatpush.msra.mxu0 0.0
    %548 = vmatpush.msra.mxu0 0.0
    %549 = vmatpush.msra.mxu0 %v529
    %550 = vmatmul.f32.gmra.mxu0 %v532
    %v551 = vpop.f32.mrf.mxu0
    %v552 = vadd.f32 0.0, %v551
    %553 = vdwg.mxu0
    %554 = vst.msk [vmem:[#allocation2] sm:$0xff] %vm249, %v474
    %555 = vst.msk [vmem:[#allocation2 + $0x8] sm:$0xff] %vm249, %v500
    %556 = vst.msk [vmem:[#allocation2 + $0x10] sm:$0xff] %vm249, %v526
    %557 = vst.msk [vmem:[#allocation2 + $0x18] sm:$0xff] %vm249, %v552
    %558 = vrot.lane.b32.xlu0 %v189, 120
    %v559 = vpop.permute.xlu0 %558
    %560 = vrot.lane.b32.xlu0 %v238, 120
    %v561 = vpop.permute.xlu0 %560
    %v562 = vsel %vm249, %v559, 0
    %v564 = vsel %vm249, %v561, 0
    %566 = vmatpush.xpose.msra.mxu0 0.0
    %567 = vmatpush.xpose.msra.mxu0 0.0
    %568 = vmatpush.xpose.msra.mxu0 0.0
    %569 = vmatpush.xpose.msra.mxu0 0.0
    %570 = vmatpush.xpose.msra.mxu0 0.0
    %571 = vmatpush.xpose.msra.mxu0 0.0
    %572 = vmatpush.xpose.msra.mxu0 0.0
    %573 = vmatpush.xpose.msra.mxu0 0.0
    %574 = vmatpush.xpose.msra.mxu0 0.0
    %575 = vmatpush.xpose.msra.mxu0 0.0
    %576 = vmatpush.xpose.msra.mxu0 0.0
    %577 = vmatpush.xpose.msra.mxu0 0.0
    %578 = vmatpush.xpose.msra.mxu0 0.0
    %579 = vmatpush.xpose.msra.mxu0 0.0
    %580 = vmatpush.xpose.msra.mxu0 0.0
    %581 = vmatpush.xpose.msra.mxu0 %v564
    %582 = vmatmul.f32.gmra.mxu0 %v562
    %v583 = vpop.f32.mrf.mxu0
    %v584 = vadd.f32 0.0, %v583
    %585 = vdwg.mxu0
    %586 = vrot.lane.b32.xlu0 %v192, 120
    %v587 = vpop.permute.xlu0 %586
    %588 = vrot.lane.b32.xlu0 %v241, 120
    %v589 = vpop.permute.xlu0 %588
    %v590 = vsel %vm249, %v587, 0
    %v592 = vsel %vm249, %v589, 0
    %594 = vmatpush.xpose.msra.mxu0 0.0
    %595 = vmatpush.xpose.msra.mxu0 0.0
    %596 = vmatpush.xpose.msra.mxu0 0.0
    %597 = vmatpush.xpose.msra.mxu0 0.0
    %598 = vmatpush.xpose.msra.mxu0 0.0
    %599 = vmatpush.xpose.msra.mxu0 0.0
    %600 = vmatpush.xpose.msra.mxu0 0.0
    %601 = vmatpush.xpose.msra.mxu0 0.0
    %602 = vmatpush.xpose.msra.mxu0 0.0
    %603 = vmatpush.xpose.msra.mxu0 0.0
    %604 = vmatpush.xpose.msra.mxu0 0.0
    %605 = vmatpush.xpose.msra.mxu0 0.0
    %606 = vmatpush.xpose.msra.mxu0 0.0
    %607 = vmatpush.xpose.msra.mxu0 0.0
    %608 = vmatpush.xpose.msra.mxu0 0.0
    %609 = vmatpush.xpose.msra.mxu0 %v592
    %610 = vmatmul.f32.gmra.mxu0 %v590
    %v611 = vpop.f32.mrf.mxu0
    %v612 = vadd.f32 0.0, %v611
    %613 = vdwg.mxu0
    %614 = vrot.lane.b32.xlu0 %v195, 120
    %v615 = vpop.permute.xlu0 %614
    %616 = vrot.lane.b32.xlu0 %v244, 120
    %v617 = vpop.permute.xlu0 %616
    %v618 = vsel %vm249, %v615, 0
    %v620 = vsel %vm249, %v617, 0
    %622 = vmatpush.xpose.msra.mxu0 0.0
    %623 = vmatpush.xpose.msra.mxu0 0.0
    %624 = vmatpush.xpose.msra.mxu0 0.0
    %625 = vmatpush.xpose.msra.mxu0 0.0
    %626 = vmatpush.xpose.msra.mxu0 0.0
    %627 = vmatpush.xpose.msra.mxu0 0.0
    %628 = vmatpush.xpose.msra.mxu0 0.0
    %629 = vmatpush.xpose.msra.mxu0 0.0
    %630 = vmatpush.xpose.msra.mxu0 0.0
    %631 = vmatpush.xpose.msra.mxu0 0.0
    %632 = vmatpush.xpose.msra.mxu0 0.0
    %633 = vmatpush.xpose.msra.mxu0 0.0
    %634 = vmatpush.xpose.msra.mxu0 0.0
    %635 = vmatpush.xpose.msra.mxu0 0.0
    %636 = vmatpush.xpose.msra.mxu0 0.0
    %637 = vmatpush.xpose.msra.mxu0 %v620
    %638 = vmatmul.f32.gmra.mxu0 %v618
    %v639 = vpop.f32.mrf.mxu0
    %v640 = vadd.f32 0.0, %v639
    %641 = vdwg.mxu0
    %642 = vrot.lane.b32.xlu0 %v198, 120
    %v643 = vpop.permute.xlu0 %642
    %644 = vrot.lane.b32.xlu0 %v247, 120
    %v645 = vpop.permute.xlu0 %644
    %v646 = vsel %vm249, %v643, 0
    %v648 = vsel %vm249, %v645, 0
    %650 = vmatpush.xpose.msra.mxu0 0.0
    %651 = vmatpush.xpose.msra.mxu0 0.0
    %652 = vmatpush.xpose.msra.mxu0 0.0
    %653 = vmatpush.xpose.msra.mxu0 0.0
    %654 = vmatpush.xpose.msra.mxu0 0.0
    %655 = vmatpush.xpose.msra.mxu0 0.0
    %656 = vmatpush.xpose.msra.mxu0 0.0
    %657 = vmatpush.xpose.msra.mxu0 0.0
    %658 = vmatpush.xpose.msra.mxu0 0.0
    %659 = vmatpush.xpose.msra.mxu0 0.0
    %660 = vmatpush.xpose.msra.mxu0 0.0
    %661 = vmatpush.xpose.msra.mxu0 0.0
    %662 = vmatpush.xpose.msra.mxu0 0.0
    %663 = vmatpush.xpose.msra.mxu0 0.0
    %664 = vmatpush.xpose.msra.mxu0 0.0
    %665 = vmatpush.xpose.msra.mxu0 %v648
    %666 = vmatmul.f32.gmra.mxu0 %v646
    %v667 = vpop.f32.mrf.mxu0
    %v668 = vadd.f32 0.0, %v667
    %669 = vdwg.mxu0
    %v670 = vsel %vm249, %v584, -inf
    %671 = vmax.xlane.f32.xlu0 %v670
    %v672 = vpop.xlane.xlu0 %671
    %v673 = vsel %vm249, %v612, -inf
    %674 = vmax.xlane.f32.xlu0 %v673
    %v675 = vpop.xlane.xlu0 %674
    %v676 = vsel %vm249, %v640, -inf
    %677 = vmax.xlane.f32.xlu0 %v676
    %v678 = vpop.xlane.xlu0 %677
    %v679 = vsel %vm249, %v668, -inf
    %680 = vmax.xlane.f32.xlu0 %v679
    %v681 = vpop.xlane.xlu0 %680
    %v682 = vsub.f32 %v584, %v672
    %v683 = vsub.f32 %v612, %v675
    %v684 = vsub.f32 %v640, %v678
    %v685 = vsub.f32 %v668, %v681
    %v686 = vmul.f32 %v682, 1.442695
    %v687 = vpow.pop %v686
    %v688 = vmul.f32 %v683, 1.442695
    %v689 = vpow.pop %v688
    %v690 = vmul.f32 %v684, 1.442695
    %v691 = vpow.pop %v690
    %v692 = vmul.f32 %v685, 1.442695
    %v693 = vpow.pop %v692
    %v694 = vsel %vm249, %v687, 0.0
    %695 = vadd.xlane.f32.xlu0 %v694
    %v696 = vpop.xlane.xlu0 %695
    %v697 = vsel %vm249, %v689, 0.0
    %698 = vadd.xlane.f32.xlu0 %v697
    %v699 = vpop.xlane.xlu0 %698
    %v700 = vsel %vm249, %v691, 0.0
    %701 = vadd.xlane.f32.xlu0 %v700
    %v702 = vpop.xlane.xlu0 %701
    %v703 = vsel %vm249, %v693, 0.0
    %704 = vadd.xlane.f32.xlu0 %v703
    %v705 = vpop.xlane.xlu0 %704
    %v706 = vrcp.pop %v696
    %v707 = vmul.f32 %v696, %v706
    %v708 = vsub.f32 1.0, %v707
    %v709 = vmul.f32 %v706, %v708
    %v710 = vadd.f32 %v706, %v709
    %vm711 = vweird.f32 %v696
    %vm712 = vweird.f32 %v706
    %vm713 = vmor %vm711, %vm712
    %v714 = vsel %vm713, %v706, %v710
    %v715 = vand.u32 2147483647, %v696
    %vm716 = vcmp.eq.f32.partialorder %v715, 8.507059e+37
    %v717 = vand.u32 %v696, 2147483648
    %v718 = vor.u32 1.1754944e-38, %v717
    %v719 = vsel %vm716, %v718, %v714
    %v720 = vrcp.pop %v699
    %v721 = vmul.f32 %v699, %v720
    %v722 = vsub.f32 1.0, %v721
    %v723 = vmul.f32 %v720, %v722
    %v724 = vadd.f32 %v720, %v723
    %vm725 = vweird.f32 %v699
    %vm726 = vweird.f32 %v720
    %vm727 = vmor %vm725, %vm726
    %v728 = vsel %vm727, %v720, %v724
    %v729 = vand.u32 2147483647, %v699
    %vm730 = vcmp.eq.f32.partialorder %v729, 8.507059e+37
    %v731 = vand.u32 %v699, 2147483648
    %v732 = vor.u32 1.1754944e-38, %v731
    %v733 = vsel %vm730, %v732, %v728
    %v734 = vrcp.pop %v702
    %v735 = vmul.f32 %v702, %v734
    %v736 = vsub.f32 1.0, %v735
    %v737 = vmul.f32 %v734, %v736
    %v738 = vadd.f32 %v734, %v737
    %vm739 = vweird.f32 %v702
    %vm740 = vweird.f32 %v734
    %vm741 = vmor %vm739, %vm740
    %v742 = vsel %vm741, %v734, %v738
    %v743 = vand.u32 2147483647, %v702
    %vm744 = vcmp.eq.f32.partialorder %v743, 8.507059e+37
    %v745 = vand.u32 %v702, 2147483648
    %v746 = vor.u32 1.1754944e-38, %v745
    %v747 = vsel %vm744, %v746, %v742
    %v748 = vrcp.pop %v705
    %v749 = vmul.f32 %v705, %v748
    %v750 = vsub.f32 1.0, %v749
    %v751 = vmul.f32 %v748, %v750
    %v752 = vadd.f32 %v748, %v751
    %vm753 = vweird.f32 %v705
    %vm754 = vweird.f32 %v748
    %vm755 = vmor %vm753, %vm754
    %v756 = vsel %vm755, %v748, %v752
    %v757 = vand.u32 2147483647, %v705
    %vm758 = vcmp.eq.f32.partialorder %v757, 8.507059e+37
    %v759 = vand.u32 %v705, 2147483648
    %v760 = vor.u32 1.1754944e-38, %v759
    %v761 = vsel %vm758, %v760, %v756
    %v762 = vmul.f32 %v687, %v719
    %v763 = vmul.f32 %v689, %v733
    %v764 = vmul.f32 %v691, %v747
    %v765 = vmul.f32 %v693, %v761
    %766 = vrot.lane.b32.xlu0 %v238, 88
    %v767 = vpop.permute.xlu0 %766
    %v770 = vsel %vm249, %v762, 0
    %772 = vmatpush.msra.mxu0 0.0
    %773 = vmatpush.msra.mxu0 0.0
    %774 = vmatpush.msra.mxu0 0.0
    %775 = vmatpush.msra.mxu0 0.0
    %776 = vmatpush.msra.mxu0 0.0
    %777 = vmatpush.msra.mxu0 0.0
    %778 = vmatpush.msra.mxu0 0.0
    %779 = vmatpush.msra.mxu0 0.0
    %780 = vmatpush.msra.mxu0 0.0
    %781 = vmatpush.msra.mxu0 0.0
    %782 = vmatpush.msra.mxu0 0.0
    %783 = vmatpush.msra.mxu0 0.0
    %784 = vmatpush.msra.mxu0 0.0
    %785 = vmatpush.msra.mxu0 0.0
    %786 = vmatpush.msra.mxu0 0.0
    %787 = vmatpush.msra.mxu0 %v767
    %788 = vmatmul.f32.gmra.mxu0 %v770
    %v789 = vpop.f32.mrf.mxu0
    %v790 = vadd.f32 0.0, %v789
    %791 = vdwg.mxu0
    %792 = vrot.lane.b32.xlu0 %v241, 88
    %v793 = vpop.permute.xlu0 %792
    %v796 = vsel %vm249, %v763, 0
    %798 = vmatpush.msra.mxu0 0.0
    %799 = vmatpush.msra.mxu0 0.0
    %800 = vmatpush.msra.mxu0 0.0
    %801 = vmatpush.msra.mxu0 0.0
    %802 = vmatpush.msra.mxu0 0.0
    %803 = vmatpush.msra.mxu0 0.0
    %804 = vmatpush.msra.mxu0 0.0
    %805 = vmatpush.msra.mxu0 0.0
    %806 = vmatpush.msra.mxu0 0.0
    %807 = vmatpush.msra.mxu0 0.0
    %808 = vmatpush.msra.mxu0 0.0
    %809 = vmatpush.msra.mxu0 0.0
    %810 = vmatpush.msra.mxu0 0.0
    %811 = vmatpush.msra.mxu0 0.0
    %812 = vmatpush.msra.mxu0 0.0
    %813 = vmatpush.msra.mxu0 %v793
    %814 = vmatmul.f32.gmra.mxu0 %v796
    %v815 = vpop.f32.mrf.mxu0
    %v816 = vadd.f32 0.0, %v815
    %817 = vdwg.mxu0
    %818 = vrot.lane.b32.xlu0 %v244, 88
    %v819 = vpop.permute.xlu0 %818
    %v822 = vsel %vm249, %v764, 0
    %824 = vmatpush.msra.mxu0 0.0
    %825 = vmatpush.msra.mxu0 0.0
    %826 = vmatpush.msra.mxu0 0.0
    %827 = vmatpush.msra.mxu0 0.0
    %828 = vmatpush.msra.mxu0 0.0
    %829 = vmatpush.msra.mxu0 0.0
    %830 = vmatpush.msra.mxu0 0.0
    %831 = vmatpush.msra.mxu0 0.0
    %832 = vmatpush.msra.mxu0 0.0
    %833 = vmatpush.msra.mxu0 0.0
    %834 = vmatpush.msra.mxu0 0.0
    %835 = vmatpush.msra.mxu0 0.0
    %836 = vmatpush.msra.mxu0 0.0
    %837 = vmatpush.msra.mxu0 0.0
    %838 = vmatpush.msra.mxu0 0.0
    %839 = vmatpush.msra.mxu0 %v819
    %840 = vmatmul.f32.gmra.mxu0 %v822
    %v841 = vpop.f32.mrf.mxu0
    %v842 = vadd.f32 0.0, %v841
    %843 = vdwg.mxu0
    %844 = vrot.lane.b32.xlu0 %v247, 88
    %v845 = vpop.permute.xlu0 %844
    %v848 = vsel %vm249, %v765, 0
    %850 = vmatpush.msra.mxu0 0.0
    %851 = vmatpush.msra.mxu0 0.0
    %852 = vmatpush.msra.mxu0 0.0
    %853 = vmatpush.msra.mxu0 0.0
    %854 = vmatpush.msra.mxu0 0.0
    %855 = vmatpush.msra.mxu0 0.0
    %856 = vmatpush.msra.mxu0 0.0
    %857 = vmatpush.msra.mxu0 0.0
    %858 = vmatpush.msra.mxu0 0.0
    %859 = vmatpush.msra.mxu0 0.0
    %860 = vmatpush.msra.mxu0 0.0
    %861 = vmatpush.msra.mxu0 0.0
    %862 = vmatpush.msra.mxu0 0.0
    %863 = vmatpush.msra.mxu0 0.0
    %864 = vmatpush.msra.mxu0 0.0
    %865 = vmatpush.msra.mxu0 %v845
    %866 = vmatmul.f32.gmra.mxu0 %v848
    %v867 = vpop.f32.mrf.mxu0
    %v868 = vadd.f32 0.0, %v867
    %869 = vdwg.mxu0
    %874 = vrot.lane.b32.xlu0 %v790, 8
    %v875 = vpop.permute.xlu0 %874
    %876 = vrot.lane.b32.xlu0 %v816, 8
    %v877 = vpop.permute.xlu0 %876
    %878 = vrot.lane.b32.xlu0 %v842, 8
    %v879 = vpop.permute.xlu0 %878
    %880 = vrot.lane.b32.xlu0 %v868, 8
    %v881 = vpop.permute.xlu0 %880
    %vm886 = vcmask 130112
    %887 = vst.msk [vmem:[#allocation2] sm:$0xff] %vm886, %v875
    %888 = vst.msk [vmem:[#allocation2 + $0x8] sm:$0xff] %vm886, %v877
    %889 = vst.msk [vmem:[#allocation2 + $0x10] sm:$0xff] %vm886, %v879
    %890 = vst.msk [vmem:[#allocation2 + $0x18] sm:$0xff] %vm886, %v881
    %891 = vrot.lane.b32.xlu0 %v189, 112
    %v892 = vpop.permute.xlu0 %891
    %893 = vrot.lane.b32.xlu0 %v238, 112
    %v894 = vpop.permute.xlu0 %893
    %v895 = vsel %vm249, %v892, 0
    %v897 = vsel %vm249, %v894, 0
    %899 = vmatpush.xpose.msra.mxu0 0.0
    %900 = vmatpush.xpose.msra.mxu0 0.0
    %901 = vmatpush.xpose.msra.mxu0 0.0
    %902 = vmatpush.xpose.msra.mxu0 0.0
    %903 = vmatpush.xpose.msra.mxu0 0.0
    %904 = vmatpush.xpose.msra.mxu0 0.0
    %905 = vmatpush.xpose.msra.mxu0 0.0
    %906 = vmatpush.xpose.msra.mxu0 0.0
    %907 = vmatpush.xpose.msra.mxu0 0.0
    %908 = vmatpush.xpose.msra.mxu0 0.0
    %909 = vmatpush.xpose.msra.mxu0 0.0
    %910 = vmatpush.xpose.msra.mxu0 0.0
    %911 = vmatpush.xpose.msra.mxu0 0.0
    %912 = vmatpush.xpose.msra.mxu0 0.0
    %913 = vmatpush.xpose.msra.mxu0 0.0
    %914 = vmatpush.xpose.msra.mxu0 %v897
    %915 = vmatmul.f32.gmra.mxu0 %v895
    %v916 = vpop.f32.mrf.mxu0
    %v917 = vadd.f32 0.0, %v916
    %918 = vdwg.mxu0
    %919 = vrot.lane.b32.xlu0 %v192, 112
    %v920 = vpop.permute.xlu0 %919
    %921 = vrot.lane.b32.xlu0 %v241, 112
    %v922 = vpop.permute.xlu0 %921
    %v923 = vsel %vm249, %v920, 0
    %v925 = vsel %vm249, %v922, 0
    %927 = vmatpush.xpose.msra.mxu0 0.0
    %928 = vmatpush.xpose.msra.mxu0 0.0
    %929 = vmatpush.xpose.msra.mxu0 0.0
    %930 = vmatpush.xpose.msra.mxu0 0.0
    %931 = vmatpush.xpose.msra.mxu0 0.0
    %932 = vmatpush.xpose.msra.mxu0 0.0
    %933 = vmatpush.xpose.msra.mxu0 0.0
    %934 = vmatpush.xpose.msra.mxu0 0.0
    %935 = vmatpush.xpose.msra.mxu0 0.0
    %936 = vmatpush.xpose.msra.mxu0 0.0
    %937 = vmatpush.xpose.msra.mxu0 0.0
    %938 = vmatpush.xpose.msra.mxu0 0.0
    %939 = vmatpush.xpose.msra.mxu0 0.0
    %940 = vmatpush.xpose.msra.mxu0 0.0
    %941 = vmatpush.xpose.msra.mxu0 0.0
    %942 = vmatpush.xpose.msra.mxu0 %v925
    %943 = vmatmul.f32.gmra.mxu0 %v923
    %v944 = vpop.f32.mrf.mxu0
    %v945 = vadd.f32 0.0, %v944
    %946 = vdwg.mxu0
    %947 = vrot.lane.b32.xlu0 %v195, 112
    %v948 = vpop.permute.xlu0 %947
    %949 = vrot.lane.b32.xlu0 %v244, 112
    %v950 = vpop.permute.xlu0 %949
    %v951 = vsel %vm249, %v948, 0
    %v953 = vsel %vm249, %v950, 0
    %955 = vmatpush.xpose.msra.mxu0 0.0
    %956 = vmatpush.xpose.msra.mxu0 0.0
    %957 = vmatpush.xpose.msra.mxu0 0.0
    %958 = vmatpush.xpose.msra.mxu0 0.0
    %959 = vmatpush.xpose.msra.mxu0 0.0
    %960 = vmatpush.xpose.msra.mxu0 0.0
    %961 = vmatpush.xpose.msra.mxu0 0.0
    %962 = vmatpush.xpose.msra.mxu0 0.0
    %963 = vmatpush.xpose.msra.mxu0 0.0
    %964 = vmatpush.xpose.msra.mxu0 0.0
    %965 = vmatpush.xpose.msra.mxu0 0.0
    %966 = vmatpush.xpose.msra.mxu0 0.0
    %967 = vmatpush.xpose.msra.mxu0 0.0
    %968 = vmatpush.xpose.msra.mxu0 0.0
    %969 = vmatpush.xpose.msra.mxu0 0.0
    %970 = vmatpush.xpose.msra.mxu0 %v953
    %971 = vmatmul.f32.gmra.mxu0 %v951
    %v972 = vpop.f32.mrf.mxu0
    %v973 = vadd.f32 0.0, %v972
    %974 = vdwg.mxu0
    %975 = vrot.lane.b32.xlu0 %v198, 112
    %v976 = vpop.permute.xlu0 %975
    %977 = vrot.lane.b32.xlu0 %v247, 112
    %v978 = vpop.permute.xlu0 %977
    %v979 = vsel %vm249, %v976, 0
    %v981 = vsel %vm249, %v978, 0
    %983 = vmatpush.xpose.msra.mxu0 0.0
    %984 = vmatpush.xpose.msra.mxu0 0.0
    %985 = vmatpush.xpose.msra.mxu0 0.0
    %986 = vmatpush.xpose.msra.mxu0 0.0
    %987 = vmatpush.xpose.msra.mxu0 0.0
    %988 = vmatpush.xpose.msra.mxu0 0.0
    %989 = vmatpush.xpose.msra.mxu0 0.0
    %990 = vmatpush.xpose.msra.mxu0 0.0
    %991 = vmatpush.xpose.msra.mxu0 0.0
    %992 = vmatpush.xpose.msra.mxu0 0.0
    %993 = vmatpush.xpose.msra.mxu0 0.0
    %994 = vmatpush.xpose.msra.mxu0 0.0
    %995 = vmatpush.xpose.msra.mxu0 0.0
    %996 = vmatpush.xpose.msra.mxu0 0.0
    %997 = vmatpush.xpose.msra.mxu0 0.0
    %998 = vmatpush.xpose.msra.mxu0 %v981
    %999 = vmatmul.f32.gmra.mxu0 %v979
    %v1000 = vpop.f32.mrf.mxu0
    %v1001 = vadd.f32 0.0, %v1000
    %1002 = vdwg.mxu0
    %v1003 = vsel %vm249, %v917, -inf
    %1004 = vmax.xlane.f32.xlu0 %v1003
    %v1005 = vpop.xlane.xlu0 %1004
    %v1006 = vsel %vm249, %v945, -inf
    %1007 = vmax.xlane.f32.xlu0 %v1006
    %v1008 = vpop.xlane.xlu0 %1007
    %v1009 = vsel %vm249, %v973, -inf
    %1010 = vmax.xlane.f32.xlu0 %v1009
    %v1011 = vpop.xlane.xlu0 %1010
    %v1012 = vsel %vm249, %v1001, -inf
    %1013 = vmax.xlane.f32.xlu0 %v1012
    %v1014 = vpop.xlane.xlu0 %1013
    %v1015 = vsub.f32 %v917, %v1005
    %v1016 = vsub.f32 %v945, %v1008
    %v1017 = vsub.f32 %v973, %v1011
    %v1018 = vsub.f32 %v1001, %v1014
    %v1019 = vmul.f32 %v1015, 1.442695
    %v1020 = vpow.pop %v1019
    %v1021 = vmul.f32 %v1016, 1.442695
    %v1022 = vpow.pop %v1021
    %v1023 = vmul.f32 %v1017, 1.442695
    %v1024 = vpow.pop %v1023
    %v1025 = vmul.f32 %v1018, 1.442695
    %v1026 = vpow.pop %v1025
    %v1027 = vsel %vm249, %v1020, 0.0
    %1028 = vadd.xlane.f32.xlu0 %v1027
    %v1029 = vpop.xlane.xlu0 %1028
    %v1030 = vsel %vm249, %v1022, 0.0
    %1031 = vadd.xlane.f32.xlu0 %v1030
    %v1032 = vpop.xlane.xlu0 %1031
    %v1033 = vsel %vm249, %v1024, 0.0
    %1034 = vadd.xlane.f32.xlu0 %v1033
    %v1035 = vpop.xlane.xlu0 %1034
    %v1036 = vsel %vm249, %v1026, 0.0
    %1037 = vadd.xlane.f32.xlu0 %v1036
    %v1038 = vpop.xlane.xlu0 %1037
    %v1039 = vrcp.pop %v1029
    %v1040 = vmul.f32 %v1029, %v1039
    %v1041 = vsub.f32 1.0, %v1040
    %v1042 = vmul.f32 %v1039, %v1041
    %v1043 = vadd.f32 %v1039, %v1042
    %vm1044 = vweird.f32 %v1029
    %vm1045 = vweird.f32 %v1039
    %vm1046 = vmor %vm1044, %vm1045
    %v1047 = vsel %vm1046, %v1039, %v1043
    %v1048 = vand.u32 2147483647, %v1029
    %vm1049 = vcmp.eq.f32.partialorder %v1048, 8.507059e+37
    %v1050 = vand.u32 %v1029, 2147483648
    %v1051 = vor.u32 1.1754944e-38, %v1050
    %v1052 = vsel %vm1049, %v1051, %v1047
    %v1053 = vrcp.pop %v1032
    %v1054 = vmul.f32 %v1032, %v1053
    %v1055 = vsub.f32 1.0, %v1054
    %v1056 = vmul.f32 %v1053, %v1055
    %v1057 = vadd.f32 %v1053, %v1056
    %vm1058 = vweird.f32 %v1032
    %vm1059 = vweird.f32 %v1053
    %vm1060 = vmor %vm1058, %vm1059
    %v1061 = vsel %vm1060, %v1053, %v1057
    %v1062 = vand.u32 2147483647, %v1032
    %vm1063 = vcmp.eq.f32.partialorder %v1062, 8.507059e+37
    %v1064 = vand.u32 %v1032, 2147483648
    %v1065 = vor.u32 1.1754944e-38, %v1064
    %v1066 = vsel %vm1063, %v1065, %v1061
    %v1067 = vrcp.pop %v1035
    %v1068 = vmul.f32 %v1035, %v1067
    %v1069 = vsub.f32 1.0, %v1068
    %v1070 = vmul.f32 %v1067, %v1069
    %v1071 = vadd.f32 %v1067, %v1070
    %vm1072 = vweird.f32 %v1035
    %vm1073 = vweird.f32 %v1067
    %vm1074 = vmor %vm1072, %vm1073
    %v1075 = vsel %vm1074, %v1067, %v1071
    %v1076 = vand.u32 2147483647, %v1035
    %vm1077 = vcmp.eq.f32.partialorder %v1076, 8.507059e+37
    %v1078 = vand.u32 %v1035, 2147483648
    %v1079 = vor.u32 1.1754944e-38, %v1078
    %v1080 = vsel %vm1077, %v1079, %v1075
    %v1081 = vrcp.pop %v1038
    %v1082 = vmul.f32 %v1038, %v1081
    %v1083 = vsub.f32 1.0, %v1082
    %v1084 = vmul.f32 %v1081, %v1083
    %v1085 = vadd.f32 %v1081, %v1084
    %vm1086 = vweird.f32 %v1038
    %vm1087 = vweird.f32 %v1081
    %vm1088 = vmor %vm1086, %vm1087
    %v1089 = vsel %vm1088, %v1081, %v1085
    %v1090 = vand.u32 2147483647, %v1038
    %vm1091 = vcmp.eq.f32.partialorder %v1090, 8.507059e+37
    %v1092 = vand.u32 %v1038, 2147483648
    %v1093 = vor.u32 1.1754944e-38, %v1092
    %v1094 = vsel %vm1091, %v1093, %v1089
    %v1095 = vmul.f32 %v1020, %v1052
    %v1096 = vmul.f32 %v1022, %v1066
    %v1097 = vmul.f32 %v1024, %v1080
    %v1098 = vmul.f32 %v1026, %v1094
    %1099 = vrot.lane.b32.xlu0 %v238, 80
    %v1100 = vpop.permute.xlu0 %1099
    %v1103 = vsel %vm249, %v1095, 0
    %1105 = vmatpush.msra.mxu0 0.0
    %1106 = vmatpush.msra.mxu0 0.0
    %1107 = vmatpush.msra.mxu0 0.0
    %1108 = vmatpush.msra.mxu0 0.0
    %1109 = vmatpush.msra.mxu0 0.0
    %1110 = vmatpush.msra.mxu0 0.0
    %1111 = vmatpush.msra.mxu0 0.0
    %1112 = vmatpush.msra.mxu0 0.0
    %1113 = vmatpush.msra.mxu0 0.0
    %1114 = vmatpush.msra.mxu0 0.0
    %1115 = vmatpush.msra.mxu0 0.0
    %1116 = vmatpush.msra.mxu0 0.0
    %1117 = vmatpush.msra.mxu0 0.0
    %1118 = vmatpush.msra.mxu0 0.0
    %1119 = vmatpush.msra.mxu0 0.0
    %1120 = vmatpush.msra.mxu0 %v1100
    %1121 = vmatmul.f32.gmra.mxu0 %v1103
    %v1122 = vpop.f32.mrf.mxu0
    %v1123 = vadd.f32 0.0, %v1122
    %1124 = vdwg.mxu0
    %1125 = vrot.lane.b32.xlu0 %v241, 80
    %v1126 = vpop.permute.xlu0 %1125
    %v1129 = vsel %vm249, %v1096, 0
    %1131 = vmatpush.msra.mxu0 0.0
    %1132 = vmatpush.msra.mxu0 0.0
    %1133 = vmatpush.msra.mxu0 0.0
    %1134 = vmatpush.msra.mxu0 0.0
    %1135 = vmatpush.msra.mxu0 0.0
    %1136 = vmatpush.msra.mxu0 0.0
    %1137 = vmatpush.msra.mxu0 0.0
    %1138 = vmatpush.msra.mxu0 0.0
    %1139 = vmatpush.msra.mxu0 0.0
    %1140 = vmatpush.msra.mxu0 0.0
    %1141 = vmatpush.msra.mxu0 0.0
    %1142 = vmatpush.msra.mxu0 0.0
    %1143 = vmatpush.msra.mxu0 0.0
    %1144 = vmatpush.msra.mxu0 0.0
    %1145 = vmatpush.msra.mxu0 0.0
    %1146 = vmatpush.msra.mxu0 %v1126
    %1147 = vmatmul.f32.gmra.mxu0 %v1129
    %v1148 = vpop.f32.mrf.mxu0
    %v1149 = vadd.f32 0.0, %v1148
    %1150 = vdwg.mxu0
    %1151 = vrot.lane.b32.xlu0 %v244, 80
    %v1152 = vpop.permute.xlu0 %1151
    %v1155 = vsel %vm249, %v1097, 0
    %1157 = vmatpush.msra.mxu0 0.0
    %1158 = vmatpush.msra.mxu0 0.0
    %1159 = vmatpush.msra.mxu0 0.0
    %1160 = vmatpush.msra.mxu0 0.0
    %1161 = vmatpush.msra.mxu0 0.0
    %1162 = vmatpush.msra.mxu0 0.0
    %1163 = vmatpush.msra.mxu0 0.0
    %1164 = vmatpush.msra.mxu0 0.0
    %1165 = vmatpush.msra.mxu0 0.0
    %1166 = vmatpush.msra.mxu0 0.0
    %1167 = vmatpush.msra.mxu0 0.0
    %1168 = vmatpush.msra.mxu0 0.0
    %1169 = vmatpush.msra.mxu0 0.0
    %1170 = vmatpush.msra.mxu0 0.0
    %1171 = vmatpush.msra.mxu0 0.0
    %1172 = vmatpush.msra.mxu0 %v1152
    %1173 = vmatmul.f32.gmra.mxu0 %v1155
    %v1174 = vpop.f32.mrf.mxu0
    %v1175 = vadd.f32 0.0, %v1174
    %1176 = vdwg.mxu0
    %1177 = vrot.lane.b32.xlu0 %v247, 80
    %v1178 = vpop.permute.xlu0 %1177
    %v1181 = vsel %vm249, %v1098, 0
    %1183 = vmatpush.msra.mxu0 0.0
    %1184 = vmatpush.msra.mxu0 0.0
    %1185 = vmatpush.msra.mxu0 0.0
    %1186 = vmatpush.msra.mxu0 0.0
    %1187 = vmatpush.msra.mxu0 0.0
    %1188 = vmatpush.msra.mxu0 0.0
    %1189 = vmatpush.msra.mxu0 0.0
    %1190 = vmatpush.msra.mxu0 0.0
    %1191 = vmatpush.msra.mxu0 0.0
    %1192 = vmatpush.msra.mxu0 0.0
    %1193 = vmatpush.msra.mxu0 0.0
    %1194 = vmatpush.msra.mxu0 0.0
    %1195 = vmatpush.msra.mxu0 0.0
    %1196 = vmatpush.msra.mxu0 0.0
    %1197 = vmatpush.msra.mxu0 0.0
    %1198 = vmatpush.msra.mxu0 %v1178
    %1199 = vmatmul.f32.gmra.mxu0 %v1181
    %v1200 = vpop.f32.mrf.mxu0
    %v1201 = vadd.f32 0.0, %v1200
    %1202 = vdwg.mxu0
    %1207 = vrot.lane.b32.xlu0 %v1123, 16
    %v1208 = vpop.permute.xlu0 %1207
    %1209 = vrot.lane.b32.xlu0 %v1149, 16
    %v1210 = vpop.permute.xlu0 %1209
    %1211 = vrot.lane.b32.xlu0 %v1175, 16
    %v1212 = vpop.permute.xlu0 %1211
    %1213 = vrot.lane.b32.xlu0 %v1201, 16
    %v1214 = vpop.permute.xlu0 %1213
    %vm1219 = vcmask 195712
    %1220 = vst.msk [vmem:[#allocation2] sm:$0xff] %vm1219, %v1208
    %1221 = vst.msk [vmem:[#allocation2 + $0x8] sm:$0xff] %vm1219, %v1210
    %1222 = vst.msk [vmem:[#allocation2 + $0x10] sm:$0xff] %vm1219, %v1212
    %1223 = vst.msk [vmem:[#allocation2 + $0x18] sm:$0xff] %vm1219, %v1214
    %1224 = vrot.lane.b32.xlu0 %v189, 104
    %v1225 = vpop.permute.xlu0 %1224
    %1226 = vrot.lane.b32.xlu0 %v238, 104
    %v1227 = vpop.permute.xlu0 %1226
    %v1228 = vsel %vm249, %v1225, 0
    %v1230 = vsel %vm249, %v1227, 0
    %1232 = vmatpush.xpose.msra.mxu0 0.0
    %1233 = vmatpush.xpose.msra.mxu0 0.0
    %1234 = vmatpush.xpose.msra.mxu0 0.0
    %1235 = vmatpush.xpose.msra.mxu0 0.0
    %1236 = vmatpush.xpose.msra.mxu0 0.0
    %1237 = vmatpush.xpose.msra.mxu0 0.0
    %1238 = vmatpush.xpose.msra.mxu0 0.0
    %1239 = vmatpush.xpose.msra.mxu0 0.0
    %1240 = vmatpush.xpose.msra.mxu0 0.0
    %1241 = vmatpush.xpose.msra.mxu0 0.0
    %1242 = vmatpush.xpose.msra.mxu0 0.0
    %1243 = vmatpush.xpose.msra.mxu0 0.0
    %1244 = vmatpush.xpose.msra.mxu0 0.0
    %1245 = vmatpush.xpose.msra.mxu0 0.0
    %1246 = vmatpush.xpose.msra.mxu0 0.0
    %1247 = vmatpush.xpose.msra.mxu0 %v1230
    %1248 = vmatmul.f32.gmra.mxu0 %v1228
    %v1249 = vpop.f32.mrf.mxu0
    %v1250 = vadd.f32 0.0, %v1249
    %1251 = vdwg.mxu0
    %1252 = vrot.lane.b32.xlu0 %v192, 104
    %v1253 = vpop.permute.xlu0 %1252
    %1254 = vrot.lane.b32.xlu0 %v241, 104
    %v1255 = vpop.permute.xlu0 %1254
    %v1256 = vsel %vm249, %v1253, 0
    %v1258 = vsel %vm249, %v1255, 0
    %1260 = vmatpush.xpose.msra.mxu0 0.0
    %1261 = vmatpush.xpose.msra.mxu0 0.0
    %1262 = vmatpush.xpose.msra.mxu0 0.0
    %1263 = vmatpush.xpose.msra.mxu0 0.0
    %1264 = vmatpush.xpose.msra.mxu0 0.0
    %1265 = vmatpush.xpose.msra.mxu0 0.0
    %1266 = vmatpush.xpose.msra.mxu0 0.0
    %1267 = vmatpush.xpose.msra.mxu0 0.0
    %1268 = vmatpush.xpose.msra.mxu0 0.0
    %1269 = vmatpush.xpose.msra.mxu0 0.0
    %1270 = vmatpush.xpose.msra.mxu0 0.0
    %1271 = vmatpush.xpose.msra.mxu0 0.0
    %1272 = vmatpush.xpose.msra.mxu0 0.0
    %1273 = vmatpush.xpose.msra.mxu0 0.0
    %1274 = vmatpush.xpose.msra.mxu0 0.0
    %1275 = vmatpush.xpose.msra.mxu0 %v1258
    %1276 = vmatmul.f32.gmra.mxu0 %v1256
    %v1277 = vpop.f32.mrf.mxu0
    %v1278 = vadd.f32 0.0, %v1277
    %1279 = vdwg.mxu0
    %1280 = vrot.lane.b32.xlu0 %v195, 104
    %v1281 = vpop.permute.xlu0 %1280
    %1282 = vrot.lane.b32.xlu0 %v244, 104
    %v1283 = vpop.permute.xlu0 %1282
    %v1284 = vsel %vm249, %v1281, 0
    %v1286 = vsel %vm249, %v1283, 0
    %1288 = vmatpush.xpose.msra.mxu0 0.0
    %1289 = vmatpush.xpose.msra.mxu0 0.0
    %1290 = vmatpush.xpose.msra.mxu0 0.0
    %1291 = vmatpush.xpose.msra.mxu0 0.0
    %1292 = vmatpush.xpose.msra.mxu0 0.0
    %1293 = vmatpush.xpose.msra.mxu0 0.0
    %1294 = vmatpush.xpose.msra.mxu0 0.0
    %1295 = vmatpush.xpose.msra.mxu0 0.0
    %1296 = vmatpush.xpose.msra.mxu0 0.0
    %1297 = vmatpush.xpose.msra.mxu0 0.0
    %1298 = vmatpush.xpose.msra.mxu0 0.0
    %1299 = vmatpush.xpose.msra.mxu0 0.0
    %1300 = vmatpush.xpose.msra.mxu0 0.0
    %1301 = vmatpush.xpose.msra.mxu0 0.0
    %1302 = vmatpush.xpose.msra.mxu0 0.0
    %1303 = vmatpush.xpose.msra.mxu0 %v1286
    %1304 = vmatmul.f32.gmra.mxu0 %v1284
    %v1305 = vpop.f32.mrf.mxu0
    %v1306 = vadd.f32 0.0, %v1305
    %1307 = vdwg.mxu0
    %1308 = vrot.lane.b32.xlu0 %v198, 104
    %v1309 = vpop.permute.xlu0 %1308
    %1310 = vrot.lane.b32.xlu0 %v247, 104
    %v1311 = vpop.permute.xlu0 %1310
    %v1312 = vsel %vm249, %v1309, 0
    %v1314 = vsel %vm249, %v1311, 0
    %1316 = vmatpush.xpose.msra.mxu0 0.0
    %1317 = vmatpush.xpose.msra.mxu0 0.0
    %1318 = vmatpush.xpose.msra.mxu0 0.0
    %1319 = vmatpush.xpose.msra.mxu0 0.0
    %1320 = vmatpush.xpose.msra.mxu0 0.0
    %1321 = vmatpush.xpose.msra.mxu0 0.0
    %1322 = vmatpush.xpose.msra.mxu0 0.0
    %1323 = vmatpush.xpose.msra.mxu0 0.0
    %1324 = vmatpush.xpose.msra.mxu0 0.0
    %1325 = vmatpush.xpose.msra.mxu0 0.0
    %1326 = vmatpush.xpose.msra.mxu0 0.0
    %1327 = vmatpush.xpose.msra.mxu0 0.0
    %1328 = vmatpush.xpose.msra.mxu0 0.0
    %1329 = vmatpush.xpose.msra.mxu0 0.0
    %1330 = vmatpush.xpose.msra.mxu0 0.0
    %1331 = vmatpush.xpose.msra.mxu0 %v1314
    %1332 = vmatmul.f32.gmra.mxu0 %v1312
    %v1333 = vpop.f32.mrf.mxu0
    %v1334 = vadd.f32 0.0, %v1333
    %1335 = vdwg.mxu0
    %v1336 = vsel %vm249, %v1250, -inf
    %1337 = vmax.xlane.f32.xlu0 %v1336
    %v1338 = vpop.xlane.xlu0 %1337
    %v1339 = vsel %vm249, %v1278, -inf
    %1340 = vmax.xlane.f32.xlu0 %v1339
    %v1341 = vpop.xlane.xlu0 %1340
    %v1342 = vsel %vm249, %v1306, -inf
    %1343 = vmax.xlane.f32.xlu0 %v1342
    %v1344 = vpop.xlane.xlu0 %1343
    %v1345 = vsel %vm249, %v1334, -inf
    %1346 = vmax.xlane.f32.xlu0 %v1345
    %v1347 = vpop.xlane.xlu0 %1346
    %v1348 = vsub.f32 %v1250, %v1338
    %v1349 = vsub.f32 %v1278, %v1341
    %v1350 = vsub.f32 %v1306, %v1344
    %v1351 = vsub.f32 %v1334, %v1347
    %v1352 = vmul.f32 %v1348, 1.442695
    %v1353 = vpow.pop %v1352
    %v1354 = vmul.f32 %v1349, 1.442695
    %v1355 = vpow.pop %v1354
    %v1356 = vmul.f32 %v1350, 1.442695
    %v1357 = vpow.pop %v1356
    %v1358 = vmul.f32 %v1351, 1.442695
    %v1359 = vpow.pop %v1358
    %v1360 = vsel %vm249, %v1353, 0.0
    %1361 = vadd.xlane.f32.xlu0 %v1360
    %v1362 = vpop.xlane.xlu0 %1361
    %v1363 = vsel %vm249, %v1355, 0.0
    %1364 = vadd.xlane.f32.xlu0 %v1363
    %v1365 = vpop.xlane.xlu0 %1364
    %v1366 = vsel %vm249, %v1357, 0.0
    %1367 = vadd.xlane.f32.xlu0 %v1366
    %v1368 = vpop.xlane.xlu0 %1367
    %v1369 = vsel %vm249, %v1359, 0.0
    %1370 = vadd.xlane.f32.xlu0 %v1369
    %v1371 = vpop.xlane.xlu0 %1370
    %v1372 = vrcp.pop %v1362
    %v1373 = vmul.f32 %v1362, %v1372
    %v1374 = vsub.f32 1.0, %v1373
    %v1375 = vmul.f32 %v1372, %v1374
    %v1376 = vadd.f32 %v1372, %v1375
    %vm1377 = vweird.f32 %v1362
    %vm1378 = vweird.f32 %v1372
    %vm1379 = vmor %vm1377, %vm1378
    %v1380 = vsel %vm1379, %v1372, %v1376
    %v1381 = vand.u32 2147483647, %v1362
    %vm1382 = vcmp.eq.f32.partialorder %v1381, 8.507059e+37
    %v1383 = vand.u32 %v1362, 2147483648
    %v1384 = vor.u32 1.1754944e-38, %v1383
    %v1385 = vsel %vm1382, %v1384, %v1380
    %v1386 = vrcp.pop %v1365
    %v1387 = vmul.f32 %v1365, %v1386
    %v1388 = vsub.f32 1.0, %v1387
    %v1389 = vmul.f32 %v1386, %v1388
    %v1390 = vadd.f32 %v1386, %v1389
    %vm1391 = vweird.f32 %v1365
    %vm1392 = vweird.f32 %v1386
    %vm1393 = vmor %vm1391, %vm1392
    %v1394 = vsel %vm1393, %v1386, %v1390
    %v1395 = vand.u32 2147483647, %v1365
    %vm1396 = vcmp.eq.f32.partialorder %v1395, 8.507059e+37
    %v1397 = vand.u32 %v1365, 2147483648
    %v1398 = vor.u32 1.1754944e-38, %v1397
    %v1399 = vsel %vm1396, %v1398, %v1394
    %v1400 = vrcp.pop %v1368
    %v1401 = vmul.f32 %v1368, %v1400
    %v1402 = vsub.f32 1.0, %v1401
    %v1403 = vmul.f32 %v1400, %v1402
    %v1404 = vadd.f32 %v1400, %v1403
    %vm1405 = vweird.f32 %v1368
    %vm1406 = vweird.f32 %v1400
    %vm1407 = vmor %vm1405, %vm1406
    %v1408 = vsel %vm1407, %v1400, %v1404
    %v1409 = vand.u32 2147483647, %v1368
    %vm1410 = vcmp.eq.f32.partialorder %v1409, 8.507059e+37
    %v1411 = vand.u32 %v1368, 2147483648
    %v1412 = vor.u32 1.1754944e-38, %v1411
    %v1413 = vsel %vm1410, %v1412, %v1408
    %v1414 = vrcp.pop %v1371
    %v1415 = vmul.f32 %v1371, %v1414
    %v1416 = vsub.f32 1.0, %v1415
    %v1417 = vmul.f32 %v1414, %v1416
    %v1418 = vadd.f32 %v1414, %v1417
    %vm1419 = vweird.f32 %v1371
    %vm1420 = vweird.f32 %v1414
    %vm1421 = vmor %vm1419, %vm1420
    %v1422 = vsel %vm1421, %v1414, %v1418
    %v1423 = vand.u32 2147483647, %v1371
    %vm1424 = vcmp.eq.f32.partialorder %v1423, 8.507059e+37
    %v1425 = vand.u32 %v1371, 2147483648
    %v1426 = vor.u32 1.1754944e-38, %v1425
    %v1427 = vsel %vm1424, %v1426, %v1422
    %v1428 = vmul.f32 %v1353, %v1385
    %v1429 = vmul.f32 %v1355, %v1399
    %v1430 = vmul.f32 %v1357, %v1413
    %v1431 = vmul.f32 %v1359, %v1427
    %1432 = vrot.lane.b32.xlu0 %v238, 72
    %v1433 = vpop.permute.xlu0 %1432
    %v1436 = vsel %vm249, %v1428, 0
    %1438 = vmatpush.msra.mxu0 0.0
    %1439 = vmatpush.msra.mxu0 0.0
    %1440 = vmatpush.msra.mxu0 0.0
    %1441 = vmatpush.msra.mxu0 0.0
    %1442 = vmatpush.msra.mxu0 0.0
    %1443 = vmatpush.msra.mxu0 0.0
    %1444 = vmatpush.msra.mxu0 0.0
    %1445 = vmatpush.msra.mxu0 0.0
    %1446 = vmatpush.msra.mxu0 0.0
    %1447 = vmatpush.msra.mxu0 0.0
    %1448 = vmatpush.msra.mxu0 0.0
    %1449 = vmatpush.msra.mxu0 0.0
    %1450 = vmatpush.msra.mxu0 0.0
    %1451 = vmatpush.msra.mxu0 0.0
    %1452 = vmatpush.msra.mxu0 0.0
    %1453 = vmatpush.msra.mxu0 %v1433
    %1454 = vmatmul.f32.gmra.mxu0 %v1436
    %v1455 = vpop.f32.mrf.mxu0
    %v1456 = vadd.f32 0.0, %v1455
    %1457 = vdwg.mxu0
    %1458 = vrot.lane.b32.xlu0 %v241, 72
    %v1459 = vpop.permute.xlu0 %1458
    %v1462 = vsel %vm249, %v1429, 0
    %1464 = vmatpush.msra.mxu0 0.0
    %1465 = vmatpush.msra.mxu0 0.0
    %1466 = vmatpush.msra.mxu0 0.0
    %1467 = vmatpush.msra.mxu0 0.0
    %1468 = vmatpush.msra.mxu0 0.0
    %1469 = vmatpush.msra.mxu0 0.0
    %1470 = vmatpush.msra.mxu0 0.0
    %1471 = vmatpush.msra.mxu0 0.0
    %1472 = vmatpush.msra.mxu0 0.0
    %1473 = vmatpush.msra.mxu0 0.0
    %1474 = vmatpush.msra.mxu0 0.0
    %1475 = vmatpush.msra.mxu0 0.0
    %1476 = vmatpush.msra.mxu0 0.0
    %1477 = vmatpush.msra.mxu0 0.0
    %1478 = vmatpush.msra.mxu0 0.0
    %1479 = vmatpush.msra.mxu0 %v1459
    %1480 = vmatmul.f32.gmra.mxu0 %v1462
    %v1481 = vpop.f32.mrf.mxu0
    %v1482 = vadd.f32 0.0, %v1481
    %1483 = vdwg.mxu0
    %1484 = vrot.lane.b32.xlu0 %v244, 72
    %v1485 = vpop.permute.xlu0 %1484
    %v1488 = vsel %vm249, %v1430, 0
    %1490 = vmatpush.msra.mxu0 0.0
    %1491 = vmatpush.msra.mxu0 0.0
    %1492 = vmatpush.msra.mxu0 0.0
    %1493 = vmatpush.msra.mxu0 0.0
    %1494 = vmatpush.msra.mxu0 0.0
    %1495 = vmatpush.msra.mxu0 0.0
    %1496 = vmatpush.msra.mxu0 0.0
    %1497 = vmatpush.msra.mxu0 0.0
    %1498 = vmatpush.msra.mxu0 0.0
    %1499 = vmatpush.msra.mxu0 0.0
    %1500 = vmatpush.msra.mxu0 0.0
    %1501 = vmatpush.msra.mxu0 0.0
    %1502 = vmatpush.msra.mxu0 0.0
    %1503 = vmatpush.msra.mxu0 0.0
    %1504 = vmatpush.msra.mxu0 0.0
    %1505 = vmatpush.msra.mxu0 %v1485
    %1506 = vmatmul.f32.gmra.mxu0 %v1488
    %v1507 = vpop.f32.mrf.mxu0
    %v1508 = vadd.f32 0.0, %v1507
    %1509 = vdwg.mxu0
    %1510 = vrot.lane.b32.xlu0 %v247, 72
    %v1511 = vpop.permute.xlu0 %1510
    %v1514 = vsel %vm249, %v1431, 0
    %1516 = vmatpush.msra.mxu0 0.0
    %1517 = vmatpush.msra.mxu0 0.0
    %1518 = vmatpush.msra.mxu0 0.0
    %1519 = vmatpush.msra.mxu0 0.0
    %1520 = vmatpush.msra.mxu0 0.0
    %1521 = vmatpush.msra.mxu0 0.0
    %1522 = vmatpush.msra.mxu0 0.0
    %1523 = vmatpush.msra.mxu0 0.0
    %1524 = vmatpush.msra.mxu0 0.0
    %1525 = vmatpush.msra.mxu0 0.0
    %1526 = vmatpush.msra.mxu0 0.0
    %1527 = vmatpush.msra.mxu0 0.0
    %1528 = vmatpush.msra.mxu0 0.0
    %1529 = vmatpush.msra.mxu0 0.0
    %1530 = vmatpush.msra.mxu0 0.0
    %1531 = vmatpush.msra.mxu0 %v1511
    %1532 = vmatmul.f32.gmra.mxu0 %v1514
    %v1533 = vpop.f32.mrf.mxu0
    %v1534 = vadd.f32 0.0, %v1533
    %1535 = vdwg.mxu0
    %1540 = vrot.lane.b32.xlu0 %v1456, 24
    %v1541 = vpop.permute.xlu0 %1540
    %1542 = vrot.lane.b32.xlu0 %v1482, 24
    %v1543 = vpop.permute.xlu0 %1542
    %1544 = vrot.lane.b32.xlu0 %v1508, 24
    %v1545 = vpop.permute.xlu0 %1544
    %1546 = vrot.lane.b32.xlu0 %v1534, 24
    %v1547 = vpop.permute.xlu0 %1546
    %vm1552 = vcmask 261312
    %1553 = vst.msk [vmem:[#allocation2] sm:$0xff] %vm1552, %v1541
    %1554 = vst.msk [vmem:[#allocation2 + $0x8] sm:$0xff] %vm1552, %v1543
    %1555 = vst.msk [vmem:[#allocation2 + $0x10] sm:$0xff] %vm1552, %v1545
    %1556 = vst.msk [vmem:[#allocation2 + $0x18] sm:$0xff] %vm1552, %v1547
    %v1557 = vld [vmem:[#allocation2] sm:$0xff]
    %v1558 = vld [vmem:[#allocation2 + $0x8] sm:$0xff]
    %v1559 = vld [vmem:[#allocation2 + $0x10] sm:$0xff]
    %v1560 = vld [vmem:[#allocation2 + $0x18] sm:$0xff]
    %v1561 = vld [vmem:[#allocation11] sm:$0xff]
    %v1562 = vld [vmem:[#allocation11 + $0x8] sm:$0xff]
    %v1563 = vld [vmem:[#allocation11 + $0x10] sm:$0xff]
    %v1564 = vld [vmem:[#allocation11 + $0x18] sm:$0xff]
    %v1565 = vld [vmem:[%s7] sm:$0x1]
    %v1567 = vperm.slane %v1565, 0
    %v1570 = vsel %vm158, %v1557, 0
    %v1573 = vsel %vm158, %v1558, 0
    %v1576 = vsel %vm158, %v1559, 0
    %v1579 = vsel %vm158, %v1560, 0
    %1581 = vmatpush.msra.mxu0 0.0
    %1582 = vmatpush.msra.mxu0 0.0
    %1583 = vmatpush.msra.mxu0 0.0
    %1584 = vmatpush.msra.mxu0 0.0
    %1585 = vmatpush.msra.mxu0 0.0
    %1586 = vmatpush.msra.mxu0 0.0
    %1587 = vmatpush.msra.mxu0 0.0
    %1588 = vmatpush.msra.mxu0 0.0
    %1589 = vmatpush.msra.mxu0 0.0
    %1590 = vmatpush.msra.mxu0 0.0
    %1591 = vmatpush.msra.mxu0 0.0
    %1592 = vmatpush.msra.mxu0 0.0
    %1593 = vmatpush.msra.mxu0 %v1564
    %1594 = vmatpush.msra.mxu0 %v1563
    %1595 = vmatpush.msra.mxu0 %v1562
    %1596 = vmatpush.msra.mxu0 %v1561
    %1597 = vmatmul.f32.gmra.mxu0 %v1570
    %v1598 = vpop.f32.mrf.mxu0
    %v1599 = vadd.f32 %v1567, %v1598
    %1600 = vmatmul.f32.gmra.mxu0 %v1573
    %v1601 = vpop.f32.mrf.mxu0
    %v1602 = vadd.f32 %v1567, %v1601
    %1603 = vmatmul.f32.gmra.mxu0 %v1576
    %v1604 = vpop.f32.mrf.mxu0
    %v1605 = vadd.f32 %v1567, %v1604
    %1606 = vmatmul.f32.gmra.mxu0 %v1579
    %v1607 = vpop.f32.mrf.mxu0
    %v1608 = vadd.f32 %v1567, %v1607
    %1609 = vdwg.mxu0
    %v1610 = vadd.f32 %v1599, %v142
    %v1611 = vadd.f32 %v1602, %v143
    %v1612 = vadd.f32 %v1605, %v144
    %v1613 = vadd.f32 %v1608, %v145
    %v1614 = vld [vmem:[%s10] sm:$0x1]
    %v1615 = vld [vmem:[%s11] sm:$0x1]
    %v1616 = vsel %vm158, %v1610, 0.0
    %1617 = vadd.xlane.f32.xlu0 %v1616
    %v1618 = vpop.xlane.xlu0 %1617
    %v1619 = vsel %vm158, %v1611, 0.0
    %1620 = vadd.xlane.f32.xlu0 %v1619
    %v1621 = vpop.xlane.xlu0 %1620
    %v1622 = vsel %vm158, %v1612, 0.0
    %1623 = vadd.xlane.f32.xlu0 %v1622
    %v1624 = vpop.xlane.xlu0 %1623
    %v1625 = vsel %vm158, %v1613, 0.0
    %1626 = vadd.xlane.f32.xlu0 %v1625
    %v1627 = vpop.xlane.xlu0 %1626
    %v1628 = vrcp.pop 32.0
    %v1629 = vmul.f32 32.0, %v1628
    %v1630 = vsub.f32 1.0, %v1629
    %v1631 = vmul.f32 %v1628, %v1630
    %v1632 = vadd.f32 %v1628, %v1631
    %vm1633 = vweird.f32 %v1628
    %v1634 = vsel %vm1633, %v1628, %v1632
    %v1635 = vmul.f32 %v1618, %v1634
    %v1636 = vmul.f32 %v1621, %v1634
    %v1637 = vmul.f32 %v1624, %v1634
    %v1638 = vmul.f32 %v1627, %v1634
    %v1639 = vsub.f32 %v1610, %v1635
    %v1640 = vsub.f32 %v1611, %v1636
    %v1641 = vsub.f32 %v1612, %v1637
    %v1642 = vsub.f32 %v1613, %v1638
    %v1643 = vmul.f32 %v1639, %v1639
    %v1644 = vmul.f32 %v1640, %v1640
    %v1645 = vmul.f32 %v1641, %v1641
    %v1646 = vmul.f32 %v1642, %v1642
    %v1647 = vsel %vm158, %v1643, 0.0
    %1648 = vadd.xlane.f32.xlu0 %v1647
    %v1649 = vpop.xlane.xlu0 %1648
    %v1650 = vsel %vm158, %v1644, 0.0
    %1651 = vadd.xlane.f32.xlu0 %v1650
    %v1652 = vpop.xlane.xlu0 %1651
    %v1653 = vsel %vm158, %v1645, 0.0
    %1654 = vadd.xlane.f32.xlu0 %v1653
    %v1655 = vpop.xlane.xlu0 %1654
    %v1656 = vsel %vm158, %v1646, 0.0
    %1657 = vadd.xlane.f32.xlu0 %v1656
    %v1658 = vpop.xlane.xlu0 %1657
    %v1659 = vmul.f32 %v1649, %v1634
    %v1660 = vmul.f32 %v1652, %v1634
    %v1661 = vmul.f32 %v1655, %v1634
    %v1662 = vmul.f32 %v1658, %v1634
    %v1663 = vadd.f32 %v1659, 1e-05
    %v1664 = vadd.f32 %v1660, 1e-05
    %v1665 = vadd.f32 %v1661, 1e-05
    %v1666 = vadd.f32 %v1662, 1e-05
    %v1667 = vrsqrt.pop %v1663
    %v1668 = vmul.f32 %v1667, %v1663
    %v1669 = vmul.f32 %v1668, %v1667
    %v1670 = vmul.f32 0.5, %v1669
    %v1671 = vsub.f32 1.5, %v1670
    %v1672 = vmul.f32 %v1667, %v1671
    %vm1673 = vweird.f32 %v1663
    %vm1674 = vweird.f32 %v1667
    %vm1675 = vmor %vm1673, %vm1674
    %v1676 = vsel %vm1675, %v1667, %v1672
    %v1677 = vrsqrt.pop %v1664
    %v1678 = vmul.f32 %v1677, %v1664
    %v1679 = vmul.f32 %v1678, %v1677
    %v1680 = vmul.f32 0.5, %v1679
    %v1681 = vsub.f32 1.5, %v1680
    %v1682 = vmul.f32 %v1677, %v1681
    %vm1683 = vweird.f32 %v1664
    %vm1684 = vweird.f32 %v1677
    %vm1685 = vmor %vm1683, %vm1684
    %v1686 = vsel %vm1685, %v1677, %v1682
    %v1687 = vrsqrt.pop %v1665
    %v1688 = vmul.f32 %v1687, %v1665
    %v1689 = vmul.f32 %v1688, %v1687
    %v1690 = vmul.f32 0.5, %v1689
    %v1691 = vsub.f32 1.5, %v1690
    %v1692 = vmul.f32 %v1687, %v1691
    %vm1693 = vweird.f32 %v1665
    %vm1694 = vweird.f32 %v1687
    %vm1695 = vmor %vm1693, %vm1694
    %v1696 = vsel %vm1695, %v1687, %v1692
    %v1697 = vrsqrt.pop %v1666
    %v1698 = vmul.f32 %v1697, %v1666
    %v1699 = vmul.f32 %v1698, %v1697
    %v1700 = vmul.f32 0.5, %v1699
    %v1701 = vsub.f32 1.5, %v1700
    %v1702 = vmul.f32 %v1697, %v1701
    %vm1703 = vweird.f32 %v1666
    %vm1704 = vweird.f32 %v1697
    %vm1705 = vmor %vm1703, %vm1704
    %v1706 = vsel %vm1705, %v1697, %v1702
    %v1707 = vmul.f32 %v1639, %v1676
    %v1708 = vmul.f32 %v1640, %v1686
    %v1709 = vmul.f32 %v1641, %v1696
    %v1710 = vmul.f32 %v1642, %v1706
    %v1712 = vperm.slane %v1614, 0
    %v1714 = vmul.f32 %v1707, %v1712
    %v1715 = vmul.f32 %v1708, %v1712
    %v1716 = vmul.f32 %v1709, %v1712
    %v1717 = vmul.f32 %v1710, %v1712
    %v1719 = vperm.slane %v1615, 0
    %v1721 = vadd.f32 %v1714, %v1719
    %v1722 = vadd.f32 %v1715, %v1719
    %v1723 = vadd.f32 %v1716, %v1719
    %v1724 = vadd.f32 %v1717, %v1719
    %v1725 = vld [vmem:[#allocation12] sm:$0xff]
    %v1726 = vld [vmem:[#allocation12 + $0x8] sm:$0xff]
    %v1727 = vld [vmem:[#allocation12 + $0x10] sm:$0xff]
    %v1728 = vld [vmem:[#allocation12 + $0x18] sm:$0xff]
    %v1729 = vld [vmem:[%s9] sm:$0x1]
    %v1731 = vperm.slane %v1729, 0
    %v1734 = vsel %vm158, %v1721, 0
    %v1737 = vsel %vm158, %v1722, 0
    %v1740 = vsel %vm158, %v1723, 0
    %v1743 = vsel %vm158, %v1724, 0
    %1745 = vmatpush.msra.mxu0 0.0
    %1746 = vmatpush.msra.mxu0 0.0
    %1747 = vmatpush.msra.mxu0 0.0
    %1748 = vmatpush.msra.mxu0 0.0
    %1749 = vmatpush.msra.mxu0 0.0
    %1750 = vmatpush.msra.mxu0 0.0
    %1751 = vmatpush.msra.mxu0 0.0
    %1752 = vmatpush.msra.mxu0 0.0
    %1753 = vmatpush.msra.mxu0 0.0
    %1754 = vmatpush.msra.mxu0 0.0
    %1755 = vmatpush.msra.mxu0 0.0
    %1756 = vmatpush.msra.mxu0 0.0
    %1757 = vmatpush.msra.mxu0 %v1728
    %1758 = vmatpush.msra.mxu0 %v1727
    %1759 = vmatpush.msra.mxu0 %v1726
    %1760 = vmatpush.msra.mxu0 %v1725
    %1761 = vmatmul.f32.gmra.mxu0 %v1734
    %v1762 = vpop.f32.mrf.mxu0
    %v1763 = vadd.f32 %v1731, %v1762
    %1764 = vmatmul.f32.gmra.mxu0 %v1737
    %v1765 = vpop.f32.mrf.mxu0
    %v1766 = vadd.f32 %v1731, %v1765
    %1767 = vmatmul.f32.gmra.mxu0 %v1740
    %v1768 = vpop.f32.mrf.mxu0
    %v1769 = vadd.f32 %v1731, %v1768
    %1770 = vmatmul.f32.gmra.mxu0 %v1743
    %v1771 = vpop.f32.mrf.mxu0
    %v1772 = vadd.f32 %v1731, %v1771
    %1773 = vdwg.mxu0
    %v1774 = vadd.f32 %v1763, %v1721
    %v1775 = vadd.f32 %v1766, %v1722
    %v1776 = vadd.f32 %v1769, %v1723
    %v1777 = vadd.f32 %v1772, %v1724
    %v1778 = vld [vmem:[%s12] sm:$0x1]
    %v1779 = vld [vmem:[%s13] sm:$0x1]
    %v1780 = vsel %vm158, %v1774, 0.0
    %1781 = vadd.xlane.f32.xlu0 %v1780
    %v1782 = vpop.xlane.xlu0 %1781
    %v1783 = vsel %vm158, %v1775, 0.0
    %1784 = vadd.xlane.f32.xlu0 %v1783
    %v1785 = vpop.xlane.xlu0 %1784
    %v1786 = vsel %vm158, %v1776, 0.0
    %1787 = vadd.xlane.f32.xlu0 %v1786
    %v1788 = vpop.xlane.xlu0 %1787
    %v1789 = vsel %vm158, %v1777, 0.0
    %1790 = vadd.xlane.f32.xlu0 %v1789
    %v1791 = vpop.xlane.xlu0 %1790
    %v1792 = vmul.f32 %v1782, %v1634
    %v1793 = vmul.f32 %v1785, %v1634
    %v1794 = vmul.f32 %v1788, %v1634
    %v1795 = vmul.f32 %v1791, %v1634
    %v1796 = vsub.f32 %v1774, %v1792
    %v1797 = vsub.f32 %v1775, %v1793
    %v1798 = vsub.f32 %v1776, %v1794
    %v1799 = vsub.f32 %v1777, %v1795
    %v1800 = vmul.f32 %v1796, %v1796
    %v1801 = vmul.f32 %v1797, %v1797
    %v1802 = vmul.f32 %v1798, %v1798
    %v1803 = vmul.f32 %v1799, %v1799
    %v1804 = vsel %vm158, %v1800, 0.0
    %1805 = vadd.xlane.f32.xlu0 %v1804
    %v1806 = vpop.xlane.xlu0 %1805
    %v1807 = vsel %vm158, %v1801, 0.0
    %1808 = vadd.xlane.f32.xlu0 %v1807
    %v1809 = vpop.xlane.xlu0 %1808
    %v1810 = vsel %vm158, %v1802, 0.0
    %1811 = vadd.xlane.f32.xlu0 %v1810
    %v1812 = vpop.xlane.xlu0 %1811
    %v1813 = vsel %vm158, %v1803, 0.0
    %1814 = vadd.xlane.f32.xlu0 %v1813
    %v1815 = vpop.xlane.xlu0 %1814
    %v1816 = vmul.f32 %v1806, %v1634
    %v1817 = vmul.f32 %v1809, %v1634
    %v1818 = vmul.f32 %v1812, %v1634
    %v1819 = vmul.f32 %v1815, %v1634
    %v1820 = vadd.f32 %v1816, 1e-05
    %v1821 = vadd.f32 %v1817, 1e-05
    %v1822 = vadd.f32 %v1818, 1e-05
    %v1823 = vadd.f32 %v1819, 1e-05
    %v1824 = vrsqrt.pop %v1820
    %v1825 = vmul.f32 %v1824, %v1820
    %v1826 = vmul.f32 %v1825, %v1824
    %v1827 = vmul.f32 0.5, %v1826
    %v1828 = vsub.f32 1.5, %v1827
    %v1829 = vmul.f32 %v1824, %v1828
    %vm1830 = vweird.f32 %v1820
    %vm1831 = vweird.f32 %v1824
    %vm1832 = vmor %vm1830, %vm1831
    %v1833 = vsel %vm1832, %v1824, %v1829
    %v1834 = vrsqrt.pop %v1821
    %v1835 = vmul.f32 %v1834, %v1821
    %v1836 = vmul.f32 %v1835, %v1834
    %v1837 = vmul.f32 0.5, %v1836
    %v1838 = vsub.f32 1.5, %v1837
    %v1839 = vmul.f32 %v1834, %v1838
    %vm1840 = vweird.f32 %v1821
    %vm1841 = vweird.f32 %v1834
    %vm1842 = vmor %vm1840, %vm1841
    %v1843 = vsel %vm1842, %v1834, %v1839
    %v1844 = vrsqrt.pop %v1822
    %v1845 = vmul.f32 %v1844, %v1822
    %v1846 = vmul.f32 %v1845, %v1844
    %v1847 = vmul.f32 0.5, %v1846
    %v1848 = vsub.f32 1.5, %v1847
    %v1849 = vmul.f32 %v1844, %v1848
    %vm1850 = vweird.f32 %v1822
    %vm1851 = vweird.f32 %v1844
    %vm1852 = vmor %vm1850, %vm1851
    %v1853 = vsel %vm1852, %v1844, %v1849
    %v1854 = vrsqrt.pop %v1823
    %v1855 = vmul.f32 %v1854, %v1823
    %v1856 = vmul.f32 %v1855, %v1854
    %v1857 = vmul.f32 0.5, %v1856
    %v1858 = vsub.f32 1.5, %v1857
    %v1859 = vmul.f32 %v1854, %v1858
    %vm1860 = vweird.f32 %v1823
    %vm1861 = vweird.f32 %v1854
    %vm1862 = vmor %vm1860, %vm1861
    %v1863 = vsel %vm1862, %v1854, %v1859
    %v1864 = vmul.f32 %v1796, %v1833
    %v1865 = vmul.f32 %v1797, %v1843
    %v1866 = vmul.f32 %v1798, %v1853
    %v1867 = vmul.f32 %v1799, %v1863
    %v1869 = vperm.slane %v1778, 0
    %v1871 = vmul.f32 %v1864, %v1869
    %v1872 = vmul.f32 %v1865, %v1869
    %v1873 = vmul.f32 %v1866, %v1869
    %v1874 = vmul.f32 %v1867, %v1869
    %v1876 = vperm.slane %v1779, 0
    %v1878 = vadd.f32 %v1871, %v1876
    %v1879 = vadd.f32 %v1872, %v1876
    %v1880 = vadd.f32 %v1873, %v1876
    %v1881 = vadd.f32 %v1874, %v1876
    %1882 = vst.msk [vmem:[#allocation14] sm:$0xff] %vm158, %v1878
    %1883 = vst.msk [vmem:[#allocation14 + $0x8] sm:$0xff] %vm158, %v1879
    %1884 = vst.msk [vmem:[#allocation14 + $0x10] sm:$0xff] %vm158, %v1880
    %1885 = vst.msk [vmem:[#allocation14 + $0x18] sm:$0xff] %vm158, %v1881
    // Predicated region
    $region82: #{tpu_custom_call.1} parent=1 // pred_check
      _
    $region83: #{tpu_custom_call.1} parent=1 // pred_check_branch
      %1887 = sbr.rel (0) target = $region85
    $region84: #{tpu_custom_call.1} parent=1 // pred_region
      %1889 = vsyncadd [#allocation5], 0
      %s1890 = sshll.u32 [#allocation14], 4
      %s1891 = int_to_ptr.vmem [resolvable:$true] %s1890
      %s1892 = sshll.u32 %s14, 4
      %s1893 = int_to_ptr.hbm [resolvable:$true] %s1892
      %1898 = dma.vmem_to_hbm [thread:$0]  %s1891, 512, %s1893, [#allocation5], 128, 128, 8
    $region85: #{tpu_custom_call.1} parent=1 // pred_fallthru
      _
    // Predicated region
    $region86: #{tpu_custom_call.1} parent=1 // pred_check
      _
    $region87: #{tpu_custom_call.1} parent=1 // pred_check_branch
      %1900 = sbr.rel (0) target = $region89
    $region88: #{tpu_custom_call.1} parent=1 // pred_region
      %1902 = dma.done [#allocation5], 512
    $region89: #{tpu_custom_call.1} parent=1 // pred_fallthru
      _
    %1903 = vsyncpa [#allocation4], 1
    %1904 = vsyncpa [#allocation7], 1
    %1905 = vsyncpa [#allocation10], 1
    %1906 = vsyncpa [#allocation13], 1
    %1907 = vsyncpa [#allocation5], 1

</llo_original>
